<compile_context>
chip_gen: v7x
topology: tpu7x:2x2x1
jax: 0.10.0
libtpu: 0.0.40
codegen_flags: <defaults>
</compile_context>

<pallas_src>
import functools

import jax
import jax.numpy as jnp
from jax import lax
from jax.experimental import pallas as pl
from jax.experimental.pallas import tpu as pltpu

BN_EPS = 1e-5
_BRANCH_COUT = 256
_BRANCHES = (("conv1", 1, 1), ("conv2", 3, 2), ("conv3", 3, 4), ("conv4", 3, 8))


# ----------------------------------------------------------------------------
# Small helpers
# ----------------------------------------------------------------------------
def _round_up(x, m):
    return (x + m - 1) // m * m


def _device_tuning():
    """(scoped-VMEM limit, default row tile) per TPU generation."""
    vmem_bytes = 64 * 1024 * 1024                 # conservative (v7x) fallback
    try:
        vmem_bytes = int(pltpu.get_tpu_info().vmem_capacity_bytes)
    except Exception:
        pass
    if vmem_bytes >= 96 * 1024 * 1024:            # v5e / v6e: 128 MiB VMEM
        return 96 * 1024 * 1024, 2048
    return 48 * 1024 * 1024, 1024                 # v7x: 64 MiB per TensorCore


# ----------------------------------------------------------------------------
# Pallas kernels
# ----------------------------------------------------------------------------
def _branch_matmul_kernel(br_ref, kc_ref, first_ref, last_ref,
                          x_ref, w_ref, y_ref, sum_ref, sumsq_ref, acc_ref):
    """Per (m-tile, k-block) branch matmul with resident f32 accumulator."""
    del br_ref, kc_ref                      # used only by the index_maps
    j = pl.program_id(1)

    @pl.when(first_ref[j] == 1)             # first k-block of this branch
    def _():
        acc_ref[...] = jnp.zeros_like(acc_ref)

    acc_ref[...] += jnp.dot(x_ref[...], w_ref[...],
                            preferred_element_type=jnp.float32)

    @pl.when(last_ref[j] == 1)              # last k-block of this branch
    def _():
        acc = acc_ref[...]
        sum_ref[...] = jnp.sum(acc, axis=0, keepdims=True)[None]
        sumsq_ref[...] = jnp.sum(acc * acc, axis=0, keepdims=True)[None]
        y_ref[...] = acc.astype(y_ref.dtype)


def _make_bn_relu_matmul_kernel(m_true, block_m, need_mask):
    """Fused: normalize+ReLU the branch outputs (bf16 in, f32 math), then the
    full-K conv5 matmul; emit per-tile BN stats of the f32 result."""
    def kernel(y1_ref, scale_ref, shift_ref, w_ref, y_ref, sum_ref, sumsq_ref):
        a = jnp.maximum(
            y1_ref[...].astype(jnp.float32) * scale_ref[...] + shift_ref[...],
            0.0)
        if need_mask:
            # Zero out rows that only exist because M was padded up to a
            # multiple of the row tile, so they do not pollute conv5's stats.
            row0 = pl.program_id(0) * block_m
            rows = row0 + lax.broadcasted_iota(jnp.int32, (block_m, 1), 0)
            a = jnp.where(rows < m_true, a, 0.0)
        y = jnp.dot(a.astype(jnp.bfloat16), w_ref[...],
                    preferred_element_type=jnp.float32)
        sum_ref[...] = jnp.sum(y, axis=0, keepdims=True)[None]
        sumsq_ref[...] = jnp.sum(y * y, axis=0, keepdims=True)[None]
        y_ref[...] = y.astype(y_ref.dtype)
    return kernel


def _bn_relu_kernel(y_ref, scale_ref, shift_ref, o_ref):
    o_ref[...] = jnp.maximum(
        y_ref[...].astype(jnp.float32) * scale_ref[...] + shift_ref[...], 0.0)


# ----------------------------------------------------------------------------
# pallas_call wrappers
# ----------------------------------------------------------------------------
def branch_matmul(cols, wb, br, kc, first, last, *, block_m, block_k,
                  vmem_limit):
    """Four branch convs as a tiled matmul into the (M, 1024) concat buffer."""
    m_pad, _ = cols.shape
    n_out = len(_BRANCHES) * _BRANCH_COUT
    n_mtiles = m_pad // block_m
    grid = (n_mtiles, int(br.shape[0]))

    grid_spec = pltpu.PrefetchScalarGridSpec(
        num_scalar_prefetch=4,
        grid=grid,
        in_specs=[
            pl.BlockSpec((block_m, block_k),
                         lambda m, j, b, k, f, l: (m, k[j])),
            pl.BlockSpec((block_k, _BRANCH_COUT),
                         lambda m, j, b, k, f, l: (k[j], 0)),
        ],
        out_specs=[
            pl.BlockSpec((block_m, _BRANCH_COUT),
                         lambda m, j, b, k, f, l: (m, b[j])),
            pl.BlockSpec((1, 1, _BRANCH_COUT),
                         lambda m, j, b, k, f, l: (m, 0, b[j])),
            pl.BlockSpec((1, 1, _BRANCH_COUT),
                         lambda m, j, b, k, f, l: (m, 0, b[j])),
        ],
        scratch_shapes=[pltpu.VMEM((block_m, _BRANCH_COUT), jnp.float32)],
    )
    return pl.pallas_call(
        _branch_matmul_kernel,
        out_shape=(
            jax.ShapeDtypeStruct((m_pad, n_out), jnp.bfloat16),
            jax.ShapeDtypeStruct((n_mtiles, 1, n_out), jnp.float32),
            jax.ShapeDtypeStruct((n_mtiles, 1, n_out), jnp.float32),
        ),
        grid_spec=grid_spec,
        compiler_params=pltpu.CompilerParams(
            dimension_semantics=("parallel", "arbitrary"),
            vmem_limit_bytes=vmem_limit),
    )(br, kc, first, last, cols, wb)


def bn_relu_matmul(y1, scale, shift, w5, *, m_true, block_m, vmem_limit):
    """relu(y1*scale+shift) @ w5 with full-K blocks, plus per-tile BN stats."""
    m_pad, K = y1.shape
    c_cols = w5.shape[1]
    grid = (m_pad // block_m,)
    kernel = _make_bn_relu_matmul_kernel(m_true, block_m, m_pad != m_true)
    return pl.pallas_call(
        kernel,
        out_shape=(
            jax.ShapeDtypeStruct((m_pad, c_cols), jnp.bfloat16),
            jax.ShapeDtypeStruct((grid[0], 1, c_cols), jnp.float32),
            jax.ShapeDtypeStruct((grid[0], 1, c_cols), jnp.float32),
        ),
        grid=grid,
        in_specs=[
            pl.BlockSpec((block_m, K), lambda m: (m, 0)),
            pl.BlockSpec((1, K), lambda m: (0, 0)),
            pl.BlockSpec((1, K), lambda m: (0, 0)),
            pl.BlockSpec((K, c_cols), lambda m: (0, 0)),
        ],
        out_specs=(
            pl.BlockSpec((block_m, c_cols), lambda m: (m, 0)),
            pl.BlockSpec((1, 1, c_cols), lambda m: (m, 0, 0)),
            pl.BlockSpec((1, 1, c_cols), lambda m: (m, 0, 0)),
        ),
        compiler_params=pltpu.CompilerParams(
            dimension_semantics=("parallel",),
            vmem_limit_bytes=vmem_limit),
    )(y1, scale, shift, w5)


def bn_relu(y5, scale, shift, *, block_m, vmem_limit):
    """Final normalize + ReLU over the lane-dense (M_pad, Ccols) slab."""
    m_pad, c_cols = y5.shape
    grid = (m_pad // block_m,)
    return pl.pallas_call(
        _bn_relu_kernel,
        out_shape=jax.ShapeDtypeStruct((m_pad, c_cols), jnp.float32),
        grid=grid,
        in_specs=[
            pl.BlockSpec((block_m, c_cols), lambda m: (m, 0)),
            pl.BlockSpec((1, c_cols), lambda m: (0, 0)),
            pl.BlockSpec((1, c_cols), lambda m: (0, 0)),
        ],
        out_specs=pl.BlockSpec((block_m, c_cols), lambda m: (m, 0)),
        compiler_params=pltpu.CompilerParams(
            dimension_semantics=("parallel",),
            vmem_limit_bytes=vmem_limit),
    )(y5, scale, shift)


# ----------------------------------------------------------------------------
# JAX glue
# ----------------------------------------------------------------------------
def im2col_dilated(x_nhwc, ksize, dilation):
    """im2col for stride-1 conv with padding == dilation -> (M, k*k*C)."""
    N, H, W, C = x_nhwc.shape
    if ksize == 1:
        return x_nhwc.reshape(N * H * W, C)
    d = dilation
    xp = jnp.pad(x_nhwc, ((0, 0), (d, d), (d, d), (0, 0)))
    taps = []
    for kh in range(ksize):
        for kw in range(ksize):
            taps.append(xp[:, kh * d:kh * d + H, kw * d:kw * d + W, :])
    patches = jnp.stack(taps, axis=3)            # (N, H, W, k*k, C)
    return patches.reshape(N * H * W, ksize * ksize * C)


def torch_weight_to_2d(w_oihw):
    """(Cout, Cin, KH, KW) torch layout -> (KH*KW*Cin, Cout), matching im2col."""
    cout, cin, kh, kw = w_oihw.shape
    return jnp.transpose(w_oihw, (2, 3, 1, 0)).reshape(kh * kw * cin, cout)


def _build_branch_operands(params, cin, bk):
    """Per-branch weights stacked along K plus per-k-block metadata."""
    w_segs, gammas, betas, meta = [], [], [], []
    kblock_off = 0
    for bi, (name, k, _) in enumerate(_BRANCHES):
        p = params[name]
        kb = k * k * cin
        kbp = _round_up(kb, bk)
        w2d = torch_weight_to_2d(p["w"])                    # (kb, 256)
        w_segs.append(jnp.pad(w2d, ((0, kbp - kb), (0, 0))))
        nblk = kbp // bk
        for t in range(nblk):
            meta.append((bi, kblock_off + t, int(t == 0), int(t == nblk - 1)))
        kblock_off += nblk
        gammas.append(p["gamma"])
        betas.append(p["beta"])
    wb = jnp.concatenate(w_segs, axis=0).astype(jnp.bfloat16)
    br = jnp.asarray([m[0] for m in meta], jnp.int32)
    kc = jnp.asarray([m[1] for m in meta], jnp.int32)
    first = jnp.asarray([m[2] for m in meta], jnp.int32)
    last = jnp.asarray([m[3] for m in meta], jnp.int32)
    return wb, br, kc, first, last, jnp.concatenate(gammas), jnp.concatenate(betas)


def _build_cols(x_nhwc, cin, bk, m_pad):
    """Concatenated per-branch im2col columns, per-branch K padded to bk."""
    pieces = []
    for _, k, d in _BRANCHES:
        c = im2col_dilated(x_nhwc, k, d)
        kbp = _round_up(k * k * cin, bk)
        pieces.append(jnp.pad(c, ((0, 0), (0, kbp - k * k * cin))))
    cols = jnp.concatenate(pieces, axis=1)
    return jnp.pad(cols, ((0, m_pad - cols.shape[0]), (0, 0)))


def _bn_scale_shift(sum_tiles, sumsq_tiles, m_total, gamma, beta):
    """Fold per-tile (sum, sumsq) into per-channel BN scale/shift (training)."""
    s = jnp.sum(sum_tiles, axis=(0, 1))
    ss = jnp.sum(sumsq_tiles, axis=(0, 1))
    mean = s / m_total
    var = jnp.maximum(ss / m_total - mean * mean, 0.0)   # biased variance
    inv = lax.rsqrt(var + BN_EPS)
    scale = gamma * inv
    shift = beta - mean * scale
    return (scale.reshape(1, -1).astype(jnp.float32),
            shift.reshape(1, -1).astype(jnp.float32))


# ----------------------------------------------------------------------------
# Parameter construction (deterministic, shapes from aspp.__init__)
# ----------------------------------------------------------------------------
def init_params(key, channel):
    def conv_bn(key, cout, cin, k):
        kw_, kb_, kg_, kbeta_ = jax.random.split(key, 4)
        return {
            "w": 0.1 * jax.random.normal(kw_, (cout, cin, k, k), jnp.float32),
            # Conv bias (torch default bias=True) is kept in the params but
            # dropped by the kernels: it cancels exactly under train-mode BN.
            "b": 0.1 * jax.random.normal(kb_, (cout,), jnp.float32),
            "gamma": 1.0 + 0.1 * jax.random.normal(kg_, (cout,), jnp.float32),
            "beta": 0.1 * jax.random.normal(kbeta_, (cout,), jnp.float32),
        }

    k1, k2, k3, k4, k5 = jax.random.split(key, 5)
    return {
        "conv1": conv_bn(k1, 256, channel, 1),
        "conv2": conv_bn(k2, 256, channel, 3),
        "conv3": conv_bn(k3, 256, channel, 3),
        "conv4": conv_bn(k4, 256, channel, 3),
        "conv5": conv_bn(k5, channel, 256 * 4, 1),
    }


# ----------------------------------------------------------------------------
# Full ASPP forward (Pallas)
# ----------------------------------------------------------------------------
def aspp_forward(x_nchw, params, *, block_m=None, block_k=512):
    N, C, H, W = x_nchw.shape
    M = N * H * W
    x = jnp.transpose(x_nchw, (0, 2, 3, 1)).astype(jnp.bfloat16)   # NHWC bf16

    vmem_limit, bm_default = _device_tuning()
    bm_req = bm_default if block_m is None else block_m
    m_pad = _round_up(M, 256)
    bm = 256
    for cand in range(256, min(bm_req, m_pad) + 1, 256):
        if m_pad % cand == 0:
            bm = cand

    bk1 = max(128, (min(block_k, _round_up(C, 128)) // 128) * 128)

    # --- pass 1: four branch convs, one k-block stream per branch -----------
    wb, br, kc, first, last, g14, b14 = _build_branch_operands(params, C, bk1)
    # TODO(synk): replace this materialized im2col with per-tap streaming of
    # the padded NHWC input to cut pass-1 HBM traffic further.
    cols = _build_cols(x, C, bk1, m_pad)                    # (m_pad, K) bf16
    y1, s1, ss1 = branch_matmul(cols, wb, br, kc, first, last,
                                block_m=bm, block_k=bk1, vmem_limit=vmem_limit)
    scale1, shift1 = _bn_scale_shift(s1, ss1, M, g14, b14)

    # --- pass 2: branch BN+ReLU fused into conv5's full-K matmul ------------
    p5 = params["conv5"]
    c_cols = C if C % 128 == 0 else _round_up(C, 128)       # lane-dense output
    w5 = jnp.pad(torch_weight_to_2d(p5["w"]),
                 ((0, 0), (0, c_cols - C))).astype(jnp.bfloat16)
    g5 = jnp.pad(p5["gamma"], (0, c_cols - C))
    b5 = jnp.pad(p5["beta"], (0, c_cols - C))
    y5, s5, ss5 = bn_relu_matmul(y1, scale1, shift1, w5, m_true=M,
                                 block_m=bm, vmem_limit=vmem_limit)
    scale5, shift5 = _bn_scale_shift(s5, ss5, M, g5, b5)

    # --- pass 3: conv5 BN + ReLU ---------------------------------------------
    out = bn_relu(y5, scale5, shift5, block_m=bm, vmem_limit=vmem_limit)
    out = out[:M, :C].reshape(N, H, W, C)
    # TODO(synk): write NCHW directly from the pass-3 kernel to drop this
    # extra transpose round trip over the full output.
    return jnp.transpose(out, (0, 3, 1, 2))                 # back to NCHW


# ----------------------------------------------------------------------------
# Pure-JAX references
#   mirror_bf16=True  : mirrors the kernels' numerics (bf16 storage of the
#                       pre-BN tensors, bias dropped -- it cancels exactly
#                       under train-mode BN), so agreement is tight.
#   mirror_bf16=False : fully faithful f32 train-mode module (bias included);
#                       bf16 intermediate storage bounds the agreement.
# ----------------------------------------------------------------------------
def aspp_reference(x_nchw, params, *, mirror_bf16):
    def bf16_round(v):
        return v.astype(jnp.bfloat16).astype(jnp.float32)

    def conv(x, w, dilation, pad):
        return lax.conv_general_dilated(
            bf16_round(x), bf16_round(w), window_strides=(1, 1),
            padding=[(pad, pad), (pad, pad)],
            rhs_dilation=(dilation, dilation),
            dimension_numbers=("NCHW", "OIHW", "NCHW"),
            precision=lax.Precision.HIGHEST)

    def conv_bn_relu(x, p, dilation, pad):
        y = conv(x, p["w"], dilation, pad)
        if not mirror_bf16:
            y = y + p["b"].reshape(1, -1, 1, 1)
        mean = jnp.mean(y, axis=(0, 2, 3), keepdims=True)
        var = jnp.mean((y - mean) ** 2, axis=(0, 2, 3), keepdims=True)
        scale = p["gamma"].reshape(1, -1, 1, 1) * lax.rsqrt(var + BN_EPS)
        shift = p["beta"].reshape(1, -1, 1, 1) - mean * scale
        if mirror_bf16:
            y = bf16_round(y)        # kernels store the pre-BN tensor as bf16
        return jnp.maximum(y * scale + shift, 0.0)

    x1 = conv_bn_relu(x_nchw, params["conv1"], 1, 0)
    x2 = conv_bn_relu(x_nchw, params["conv2"], 2, 2)
    x3 = conv_bn_relu(x_nchw, params["conv3"], 4, 4)
    x4 = conv_bn_relu(x_nchw, params["conv4"], 8, 8)
    cat = jnp.concatenate([x1, x2, x3, x4], axis=1)
    return conv_bn_relu(cat, params["conv5"], 1, 0)


if __name__ == "__main__":
    # N*H*W = 288 (pads to 512 -> exercises M padding + stats masking and two
    # m-tiles at block_m=256); C=16 gives 2 k-blocks per 3x3 branch at
    # block_k=128, exercising the per-branch k accumulation with first/last
    # flags.
    N, C, H, W = 2, 16, 12, 12
    key = jax.random.PRNGKey(0)
    kx, kp = jax.random.split(key)
    x = jax.random.normal(kx, (N, C, H, W), jnp.float32)
    params = init_params(kp, C)

    fwd = jax.jit(functools.partial(aspp_forward, block_m=256, block_k=128))
    out = jax.block_until_ready(fwd(x, params))
    assert out.shape == (N, C, H, W)

    ref_mirror = aspp_reference(x, params, mirror_bf16=True)
    ref_exact = aspp_reference(x, params, mirror_bf16=False)
    err_mirror = float(jnp.max(jnp.abs(out - ref_mirror)))
    err_exact = float(jnp.max(jnp.abs(out - ref_exact)))
    # Tight check against the numerics-mirroring reference; looser sanity
    # check against the fully faithful f32 reference (bf16 intermediate
    # storage is a deliberate bandwidth optimization).
    assert jnp.allclose(out, ref_mirror, rtol=5e-3, atol=5e-3), err_mirror
    assert jnp.allclose(out, ref_exact, rtol=5e-2, atol=5e-2), err_exact

    print("KERNEL_OK")
</pallas_src>

<mosaic_0001>
module attributes {stable_mosaic.version = 11 : i64} {
  func.func @_branch_matmul_kernel(%arg0: i32, %arg1: i32, %arg2: memref<7xi32, #tpu.memory_space<smem>>, %arg3: memref<7xi32, #tpu.memory_space<smem>>, %arg4: memref<7xi32, #tpu.memory_space<smem>>, %arg5: memref<7xi32, #tpu.memory_space<smem>>, %arg6: memref<256x128xbf16, #tpu.memory_space<vmem>>, %arg7: memref<128x256xbf16, #tpu.memory_space<vmem>>, %arg8: memref<256x256xbf16, #tpu.memory_space<vmem>>, %arg9: memref<1x1x256xf32, #tpu.memory_space<vmem>>, %arg10: memref<1x1x256xf32, #tpu.memory_space<vmem>>, %arg11: memref<256x256xf32, #tpu.memory_space<vmem>>) attributes {dimension_semantics = [#tpu.dimension_semantics<parallel>, #tpu.dimension_semantics<arbitrary>], iteration_bounds = array<i64: 2, 7>, scalar_prefetch = 4 : i64, scratch_operands = 1 : i64, tpu.core_type = #tpu.core_type<tc>, window_params = [{transform_indices = @transform_0, window_bounds = array<i64: 256, 128>}, {transform_indices = @transform_1, window_bounds = array<i64: 128, 256>}, {transform_indices = @transform_2, window_bounds = array<i64: 256, 256>}, {transform_indices = @transform_3, window_bounds = array<i64: 1, 1, 256>}, {transform_indices = @transform_4, window_bounds = array<i64: 1, 1, 256>}]} {
    %0 = arith.index_cast %arg1 : i32 to index
    %1 = memref.load %arg4[%0] : memref<7xi32, #tpu.memory_space<smem>>
    %c1_i32 = arith.constant 1 : i32
    %2 = arith.cmpi eq, %1, %c1_i32 : i32
    %3 = arith.extui %2 : i1 to i32
    %c0_i32 = arith.constant 0 : i32
    %4 = arith.cmpi ne, %3, %c0_i32 : i32
    scf.if %4 {
      %cst_9 = arith.constant 0.000000e+00 : f32
      %16 = vector.broadcast %cst_9 : f32 to vector<256x256xf32>
      %c0_10 = arith.constant 0 : index
      %c0_11 = arith.constant 0 : index
      %17 = vector.load %arg11[%c0_10, %c0_11] : memref<256x256xf32, #tpu.memory_space<vmem>>, vector<256x256xf32>
      tpu.vector_store %arg11[%c0_10, %c0_11], %16 {strides = array<i32>} : memref<256x256xf32, #tpu.memory_space<vmem>>, vector<256x256xf32>,
    } else {
    }
    %c0 = arith.constant 0 : index
    %c0_0 = arith.constant 0 : index
    %5 = vector.load %arg11[%c0, %c0_0] : memref<256x256xf32, #tpu.memory_space<vmem>>, vector<256x256xf32>
    %c0_1 = arith.constant 0 : index
    %c0_2 = arith.constant 0 : index
    %6 = vector.load %arg6[%c0_1, %c0_2] : memref<256x128xbf16, #tpu.memory_space<vmem>>, vector<256x128xbf16>
    %c0_3 = arith.constant 0 : index
    %c0_4 = arith.constant 0 : index
    %7 = vector.load %arg7[%c0_3, %c0_4] : memref<128x256xbf16, #tpu.memory_space<vmem>>, vector<128x256xbf16>
    %cst = arith.constant dense<0.000000e+00> : vector<256x256xf32>
    %8 = tpu.matmul %6, %7, %cst {dimension_numbers = #tpu.dot_dimension_numbers<[1], [0], [0], [1], [0, 0, 1, 1], [], []>} : vector<256x128xbf16>, vector<128x256xbf16>, vector<256x256xf32> -> vector<256x256xf32>
    %9 = arith.addf %5, %8 : vector<256x256xf32>
    %c0_5 = arith.constant 0 : index
    %c0_6 = arith.constant 0 : index
    %10 = vector.load %arg11[%c0_5, %c0_6] : memref<256x256xf32, #tpu.memory_space<vmem>>, vector<256x256xf32>
    tpu.vector_store %arg11[%c0_5, %c0_6], %9 {strides = array<i32>} : memref<256x256xf32, #tpu.memory_space<vmem>>, vector<256x256xf32>,
    %11 = arith.index_cast %arg1 : i32 to index
    %12 = memref.load %arg5[%11] : memref<7xi32, #tpu.memory_space<smem>>
    %c1_i32_7 = arith.constant 1 : i32
    %13 = arith.cmpi eq, %12, %c1_i32_7 : i32
    %14 = arith.extui %13 : i1 to i32
    %c0_i32_8 = arith.constant 0 : i32
    %15 = arith.cmpi ne, %14, %c0_i32_8 : i32
    scf.if %15 {
      %c0_9 = arith.constant 0 : index
      %c0_10 = arith.constant 0 : index
      %16 = vector.load %arg11[%c0_9, %c0_10] : memref<256x256xf32, #tpu.memory_space<vmem>>, vector<256x256xf32>
      %cst_11 = arith.constant dense<0.000000e+00> : vector<256xf32>
      %17 = vector.multi_reduction <add>, %16, %cst_11 [0] : vector<256x256xf32> to vector<256xf32>
      %18 = vector.shape_cast %17 : vector<256xf32> to vector<1x256xf32>
      %19 = vector.shape_cast %18 : vector<1x256xf32> to vector<1x1x256xf32>
      %c0_12 = arith.constant 0 : index
      %c0_13 = arith.constant 0 : index
      %c0_14 = arith.constant 0 : index
      %20 = vector.load %arg9[%c0_12, %c0_13, %c0_14] : memref<1x1x256xf32, #tpu.memory_space<vmem>>, vector<1x1x256xf32>
      tpu.vector_store %arg9[%c0_12, %c0_13, %c0_14], %19 {strides = array<i32>} : memref<1x1x256xf32, #tpu.memory_space<vmem>>, vector<1x1x256xf32>,
      %21 = arith.mulf %16, %16 : vector<256x256xf32>
      %cst_15 = arith.constant dense<0.000000e+00> : vector<256xf32>
      %22 = vector.multi_reduction <add>, %21, %cst_15 [0] : vector<256x256xf32> to vector<256xf32>
      %23 = vector.shape_cast %22 : vector<256xf32> to vector<1x256xf32>
      %24 = vector.shape_cast %23 : vector<1x256xf32> to vector<1x1x256xf32>
      %c0_16 = arith.constant 0 : index
      %c0_17 = arith.constant 0 : index
      %c0_18 = arith.constant 0 : index
      %25 = vector.load %arg10[%c0_16, %c0_17, %c0_18] : memref<1x1x256xf32, #tpu.memory_space<vmem>>, vector<1x1x256xf32>
      tpu.vector_store %arg10[%c0_16, %c0_17, %c0_18], %24 {strides = array<i32>} : memref<1x1x256xf32, #tpu.memory_space<vmem>>, vector<1x1x256xf32>,
      %26 = arith.truncf %16 : vector<256x256xf32> to vector<256x256xbf16>
      %c0_19 = arith.constant 0 : index
      %c0_20 = arith.constant 0 : index
      %27 = vector.load %arg8[%c0_19, %c0_20] : memref<256x256xbf16, #tpu.memory_space<vmem>>, vector<256x256xbf16>
      tpu.vector_store %arg8[%c0_19, %c0_20], %26 {strides = array<i32>} : memref<256x256xbf16, #tpu.memory_space<vmem>>, vector<256x256xbf16>,
    } else {
    }
    return
  }
  func.func @transform_0(%arg0: i32, %arg1: i32, %arg2: memref<7xi32, #tpu.memory_space<smem>>, %arg3: memref<7xi32, #tpu.memory_space<smem>>, %arg4: memref<7xi32, #tpu.memory_space<smem>>, %arg5: memref<7xi32, #tpu.memory_space<smem>>) -> (i32, i32) {
    %0 = arith.index_cast %arg1 : i32 to index
    %1 = memref.load %arg3[%0] : memref<7xi32, #tpu.memory_space<smem>>
    %c0_i32 = arith.constant 0 : i32
    return %arg0, %1 : i32, i32
  }
  func.func @transform_1(%arg0: i32, %arg1: i32, %arg2: memref<7xi32, #tpu.memory_space<smem>>, %arg3: memref<7xi32, #tpu.memory_space<smem>>, %arg4: memref<7xi32, #tpu.memory_space<smem>>, %arg5: memref<7xi32, #tpu.memory_space<smem>>) -> (i32, i32) {
    %0 = arith.index_cast %arg1 : i32 to index
    %1 = memref.load %arg3[%0] : memref<7xi32, #tpu.memory_space<smem>>
    %c0_i32 = arith.constant 0 : i32
    %c0_i32_0 = arith.constant 0 : i32
    return %1, %c0_i32 : i32, i32
  }
  func.func @transform_2(%arg0: i32, %arg1: i32, %arg2: memref<7xi32, #tpu.memory_space<smem>>, %arg3: memref<7xi32, #tpu.memory_space<smem>>, %arg4: memref<7xi32, #tpu.memory_space<smem>>, %arg5: memref<7xi32, #tpu.memory_space<smem>>) -> (i32, i32) {
    %0 = arith.index_cast %arg1 : i32 to index
    %1 = memref.load %arg2[%0] : memref<7xi32, #tpu.memory_space<smem>>
    %c0_i32 = arith.constant 0 : i32
    return %arg0, %1 : i32, i32
  }
  func.func @transform_3(%arg0: i32, %arg1: i32, %arg2: memref<7xi32, #tpu.memory_space<smem>>, %arg3: memref<7xi32, #tpu.memory_space<smem>>, %arg4: memref<7xi32, #tpu.memory_space<smem>>, %arg5: memref<7xi32, #tpu.memory_space<smem>>) -> (i32, i32, i32) {
    %0 = arith.index_cast %arg1 : i32 to index
    %1 = memref.load %arg2[%0] : memref<7xi32, #tpu.memory_space<smem>>
    %c0_i32 = arith.constant 0 : i32
    %c0_i32_0 = arith.constant 0 : i32
    return %arg0, %c0_i32, %1 : i32, i32, i32
  }
  func.func @transform_4(%arg0: i32, %arg1: i32, %arg2: memref<7xi32, #tpu.memory_space<smem>>, %arg3: memref<7xi32, #tpu.memory_space<smem>>, %arg4: memref<7xi32, #tpu.memory_space<smem>>, %arg5: memref<7xi32, #tpu.memory_space<smem>>) -> (i32, i32, i32) {
    %0 = arith.index_cast %arg1 : i32 to index
    %1 = memref.load %arg2[%0] : memref<7xi32, #tpu.memory_space<smem>>
    %c0_i32 = arith.constant 0 : i32
    %c0_i32_0 = arith.constant 0 : i32
    return %arg0, %c0_i32, %1 : i32, i32, i32
  }
}

module attributes {stable_mosaic.version = 11 : i64} {
  func.func @kernel(%arg0: i32, %arg1: memref<256x1024xbf16, #tpu.memory_space<vmem>>, %arg2: memref<1x1024xf32, #tpu.memory_space<vmem>>, %arg3: memref<1x1024xf32, #tpu.memory_space<vmem>>, %arg4: memref<1024x128xbf16, #tpu.memory_space<vmem>>, %arg5: memref<256x128xbf16, #tpu.memory_space<vmem>>, %arg6: memref<1x1x128xf32, #tpu.memory_space<vmem>>, %arg7: memref<1x1x128xf32, #tpu.memory_space<vmem>>) attributes {dimension_semantics = [#tpu.dimension_semantics<parallel>], iteration_bounds = array<i64: 2>, scalar_prefetch = 0 : i64, scratch_operands = 0 : i64, tpu.core_type = #tpu.core_type<tc>, window_params = [{transform_indices = @transform_0, window_bounds = array<i64: 256, 1024>}, {pipeline_mode = #tpu.pipeline_mode<synchronous>, transform_indices = @transform_1, window_bounds = array<i64: 1, 1024>}, {pipeline_mode = #tpu.pipeline_mode<synchronous>, transform_indices = @transform_2, window_bounds = array<i64: 1, 1024>}, {pipeline_mode = #tpu.pipeline_mode<synchronous>, transform_indices = @transform_3, window_bounds = array<i64: 1024, 128>}, {transform_indices = @transform_4, window_bounds = array<i64: 256, 128>}, {transform_indices = @transform_5, window_bounds = array<i64: 1, 1, 128>}, {transform_indices = @transform_6, window_bounds = array<i64: 1, 1, 128>}]} {
    %c0 = arith.constant 0 : index
    %c0_0 = arith.constant 0 : index
    %0 = vector.load %arg1[%c0, %c0_0] : memref<256x1024xbf16, #tpu.memory_space<vmem>>, vector<256x1024xbf16>
    %1 = arith.extf %0 : vector<256x1024xbf16> to vector<256x1024xf32>
    %c0_1 = arith.constant 0 : index
    %c0_2 = arith.constant 0 : index
    %2 = vector.load %arg2[%c0_1, %c0_2] : memref<1x1024xf32, #tpu.memory_space<vmem>>, vector<1x1024xf32>
    %3 = vector.broadcast %2 : vector<1x1024xf32> to vector<256x1024xf32>
    %4 = arith.mulf %1, %3 : vector<256x1024xf32>
    %c0_3 = arith.constant 0 : index
    %c0_4 = arith.constant 0 : index
    %5 = vector.load %arg3[%c0_3, %c0_4] : memref<1x1024xf32, #tpu.memory_space<vmem>>, vector<1x1024xf32>
    %6 = vector.broadcast %5 : vector<1x1024xf32> to vector<256x1024xf32>
    %7 = arith.addf %4, %6 : vector<256x1024xf32>
    %cst = arith.constant 0.000000e+00 : f32
    %8 = vector.broadcast %cst : f32 to vector<256x1024xf32>
    %9 = arith.maximumf %7, %8 : vector<256x1024xf32>
    %c256_i32 = arith.constant 256 : i32
    %10 = arith.muli %arg0, %c256_i32 : i32
    %11 = tpu.iota {dimensions = array<i32: 0>} : vector<256x1xi32>
    %12 = vector.broadcast %10 : i32 to vector<256x1xi32>
    %13 = arith.addi %12, %11 : vector<256x1xi32>
    %c288_i32 = arith.constant 288 : i32
    %14 = vector.broadcast %c288_i32 : i32 to vector<256x1xi32>
    %15 = arith.cmpi slt, %13, %14 : vector<256x1xi32>
    %cst_5 = arith.constant 0.000000e+00 : f32
    %16 = vector.shape_cast %15 : vector<256x1xi1> to vector<256x1xi1>
    %17 = vector.broadcast %16 : vector<256x1xi1> to vector<256x1024xi1>
    %18 = vector.broadcast %cst_5 : f32 to vector<256x1024xf32>
    %19 = arith.select %17, %9, %18 : vector<256x1024xi1>, vector<256x1024xf32>
    %20 = arith.truncf %19 : vector<256x1024xf32> to vector<256x1024xbf16>
    %c0_6 = arith.constant 0 : index
    %c0_7 = arith.constant 0 : index
    %21 = vector.load %arg4[%c0_6, %c0_7] : memref<1024x128xbf16, #tpu.memory_space<vmem>>, vector<1024x128xbf16>
    %cst_8 = arith.constant dense<0.000000e+00> : vector<256x128xf32>
    %22 = tpu.matmul %20, %21, %cst_8 {dimension_numbers = #tpu.dot_dimension_numbers<[1], [0], [0], [1], [0, 0, 1, 1], [], []>} : vector<256x1024xbf16>, vector<1024x128xbf16>, vector<256x128xf32> -> vector<256x128xf32>
    %cst_9 = arith.constant dense<0.000000e+00> : vector<128xf32>
    %23 = vector.multi_reduction <add>, %22, %cst_9 [0] : vector<256x128xf32> to vector<128xf32>
    %24 = vector.shape_cast %23 : vector<128xf32> to vector<1x128xf32>
    %25 = vector.shape_cast %24 : vector<1x128xf32> to vector<1x1x128xf32>
    %c0_10 = arith.constant 0 : index
    %c0_11 = arith.constant 0 : index
    %c0_12 = arith.constant 0 : index
    %26 = vector.load %arg6[%c0_10, %c0_11, %c0_12] : memref<1x1x128xf32, #tpu.memory_space<vmem>>, vector<1x1x128xf32>
    tpu.vector_store %arg6[%c0_10, %c0_11, %c0_12], %25 {strides = array<i32>} : memref<1x1x128xf32, #tpu.memory_space<vmem>>, vector<1x1x128xf32>,
    %27 = arith.mulf %22, %22 : vector<256x128xf32>
    %cst_13 = arith.constant dense<0.000000e+00> : vector<128xf32>
    %28 = vector.multi_reduction <add>, %27, %cst_13 [0] : vector<256x128xf32> to vector<128xf32>
    %29 = vector.shape_cast %28 : vector<128xf32> to vector<1x128xf32>
    %30 = vector.shape_cast %29 : vector<1x128xf32> to vector<1x1x128xf32>
    %c0_14 = arith.constant 0 : index
    %c0_15 = arith.constant 0 : index
    %c0_16 = arith.constant 0 : index
    %31 = vector.load %arg7[%c0_14, %c0_15, %c0_16] : memref<1x1x128xf32, #tpu.memory_space<vmem>>, vector<1x1x128xf32>
    tpu.vector_store %arg7[%c0_14, %c0_15, %c0_16], %30 {strides = array<i32>} : memref<1x1x128xf32, #tpu.memory_space<vmem>>, vector<1x1x128xf32>,
    %32 = arith.truncf %22 : vector<256x128xf32> to vector<256x128xbf16>
    %c0_17 = arith.constant 0 : index
    %c0_18 = arith.constant 0 : index
    %33 = vector.load %arg5[%c0_17, %c0_18] : memref<256x128xbf16, #tpu.memory_space<vmem>>, vector<256x128xbf16>
    tpu.vector_store %arg5[%c0_17, %c0_18], %32 {strides = array<i32>} : memref<256x128xbf16, #tpu.memory_space<vmem>>, vector<256x128xbf16>,
    return
  }
  func.func @transform_0(%arg0: i32) -> (i32, i32) {
    %c0_i32 = arith.constant 0 : i32
    %c0_i32_0 = arith.constant 0 : i32
    return %arg0, %c0_i32 : i32, i32
  }
  func.func @transform_1(%arg0: i32) -> (i32, i32) {
    %c0_i32 = arith.constant 0 : i32
    %c0_i32_0 = arith.constant 0 : i32
    %c0_i32_1 = arith.constant 0 : i32
    return %c0_i32, %c0_i32_0 : i32, i32
  }
  func.func @transform_2(%arg0: i32) -> (i32, i32) {
    %c0_i32 = arith.constant 0 : i32
    %c0_i32_0 = arith.constant 0 : i32
    %c0_i32_1 = arith.constant 0 : i32
    return %c0_i32, %c0_i32_0 : i32, i32
  }
  func.func @transform_3(%arg0: i32) -> (i32, i32) {
    %c0_i32 = arith.constant 0 : i32
    %c0_i32_0 = arith.constant 0 : i32
    %c0_i32_1 = arith.constant 0 : i32
    return %c0_i32, %c0_i32_0 : i32, i32
  }
  func.func @transform_4(%arg0: i32) -> (i32, i32) {
    %c0_i32 = arith.constant 0 : i32
    %c0_i32_0 = arith.constant 0 : i32
    return %arg0, %c0_i32 : i32, i32
  }
  func.func @transform_5(%arg0: i32) -> (i32, i32, i32) {
    %c0_i32 = arith.constant 0 : i32
    %c0_i32_0 = arith.constant 0 : i32
    %c0_i32_1 = arith.constant 0 : i32
    return %arg0, %c0_i32, %c0_i32_0 : i32, i32, i32
  }
  func.func @transform_6(%arg0: i32) -> (i32, i32, i32) {
    %c0_i32 = arith.constant 0 : i32
    %c0_i32_0 = arith.constant 0 : i32
    %c0_i32_1 = arith.constant 0 : i32
    return %arg0, %c0_i32, %c0_i32_0 : i32, i32, i32
  }
}

module attributes {stable_mosaic.version = 11 : i64} {
  func.func @_bn_relu_kernel(%arg0: i32, %arg1: memref<256x128xbf16, #tpu.memory_space<vmem>>, %arg2: memref<1x128xf32, #tpu.memory_space<vmem>>, %arg3: memref<1x128xf32, #tpu.memory_space<vmem>>, %arg4: memref<256x128xf32, #tpu.memory_space<vmem>>) attributes {dimension_semantics = [#tpu.dimension_semantics<parallel>], iteration_bounds = array<i64: 2>, scalar_prefetch = 0 : i64, scratch_operands = 0 : i64, tpu.core_type = #tpu.core_type<tc>, window_params = [{transform_indices = @transform_0, window_bounds = array<i64: 256, 128>}, {pipeline_mode = #tpu.pipeline_mode<synchronous>, transform_indices = @transform_1, window_bounds = array<i64: 1, 128>}, {pipeline_mode = #tpu.pipeline_mode<synchronous>, transform_indices = @transform_2, window_bounds = array<i64: 1, 128>}, {transform_indices = @transform_3, window_bounds = array<i64: 256, 128>}]} {
    %c0 = arith.constant 0 : index
    %c0_0 = arith.constant 0 : index
    %0 = vector.load %arg1[%c0, %c0_0] : memref<256x128xbf16, #tpu.memory_space<vmem>>, vector<256x128xbf16>
    %1 = arith.extf %0 : vector<256x128xbf16> to vector<256x128xf32>
    %c0_1 = arith.constant 0 : index
    %c0_2 = arith.constant 0 : index
    %2 = vector.load %arg2[%c0_1, %c0_2] : memref<1x128xf32, #tpu.memory_space<vmem>>, vector<1x128xf32>
    %3 = vector.broadcast %2 : vector<1x128xf32> to vector<256x128xf32>
    %4 = arith.mulf %1, %3 : vector<256x128xf32>
    %c0_3 = arith.constant 0 : index
    %c0_4 = arith.constant 0 : index
    %5 = vector.load %arg3[%c0_3, %c0_4] : memref<1x128xf32, #tpu.memory_space<vmem>>, vector<1x128xf32>
    %6 = vector.broadcast %5 : vector<1x128xf32> to vector<256x128xf32>
    %7 = arith.addf %4, %6 : vector<256x128xf32>
    %cst = arith.constant 0.000000e+00 : f32
    %8 = vector.broadcast %cst : f32 to vector<256x128xf32>
    %9 = arith.maximumf %7, %8 : vector<256x128xf32>
    %c0_5 = arith.constant 0 : index
    %c0_6 = arith.constant 0 : index
    %10 = vector.load %arg4[%c0_5, %c0_6] : memref<256x128xf32, #tpu.memory_space<vmem>>, vector<256x128xf32>
    tpu.vector_store %arg4[%c0_5, %c0_6], %9 {strides = array<i32>} : memref<256x128xf32, #tpu.memory_space<vmem>>, vector<256x128xf32>,
    return
  }
  func.func @transform_0(%arg0: i32) -> (i32, i32) {
    %c0_i32 = arith.constant 0 : i32
    %c0_i32_0 = arith.constant 0 : i32
    return %arg0, %c0_i32 : i32, i32
  }
  func.func @transform_1(%arg0: i32) -> (i32, i32) {
    %c0_i32 = arith.constant 0 : i32
    %c0_i32_0 = arith.constant 0 : i32
    %c0_i32_1 = arith.constant 0 : i32
    return %c0_i32, %c0_i32_0 : i32, i32
  }
  func.func @transform_2(%arg0: i32) -> (i32, i32) {
    %c0_i32 = arith.constant 0 : i32
    %c0_i32_0 = arith.constant 0 : i32
    %c0_i32_1 = arith.constant 0 : i32
    return %c0_i32, %c0_i32_0 : i32, i32
  }
  func.func @transform_3(%arg0: i32) -> (i32, i32) {
    %c0_i32 = arith.constant 0 : i32
    %c0_i32_0 = arith.constant 0 : i32
    return %arg0, %c0_i32 : i32, i32
  }
}

</mosaic_0001>

<llo_original>
// kernel: aspp_forward.3
$region0: #{aspp_forward.3}
  #allocation0 [shape = 'u32[]', space=smem, size = 0x4, offset = 0x4, fixed_abs, tag = 'smem constant byte address 0x4 - core index']
  #allocation1 [shape = 'u32[144,128]{1,0:T(1,128)}', space=vmem, size = 0x12000, scoped, tag = 'internal scratch']
  #allocation2 [shape = 'f32[256,256]{1,0:T(8,128)}', space=vmem, size = 0x40000, scoped, tag = 'scratch operand']
  #allocation3 [shape = 's32[1]{0}', space=sflag, size = 0x4, scoped, tag = 'scoped memory for aspp_forward.3']
  #allocation4 [shape = 'u8[512]{0}', space=smem, size = 0x200, scoped, tag = 'prefetched SMEM operand 0']
  #allocation5 [shape = 'u8[512]{0}', space=smem, size = 0x200, scoped, tag = 'prefetched SMEM operand 1']
  #allocation6 [shape = 'u8[512]{0}', space=smem, size = 0x200, scoped, tag = 'prefetched SMEM operand 2']
  #allocation7 [shape = 'u8[512]{0}', space=smem, size = 0x200, scoped, tag = 'prefetched SMEM operand 3']
  %s0 = inlined_call_operand.vmem [shape: s32[7], index: 0, kind: input, shape index: {}]
  %s1 = inlined_call_operand.vmem [shape: s32[7], index: 1, kind: input, shape index: {}]
  %s2 = inlined_call_operand.vmem [shape: s32[7], index: 2, kind: input, shape index: {}]
  %s3 = inlined_call_operand.vmem [shape: s32[7], index: 3, kind: input, shape index: {}]
  %s4 = inlined_call_operand.vmem [shape: bf16[512,896], index: 4, kind: input, shape index: {}]
  %s5 = inlined_call_operand.vmem [shape: bf16[896,256], index: 5, kind: input, shape index: {}]
  %s6 = inlined_call_operand.vmem [shape: bf16[512,1024], index: 6, kind: output, shape index: {0}]
  %s7 = inlined_call_operand.vmem [shape: f32[2,1,1024], index: 7, kind: output, shape index: {1}]
  %s8 = inlined_call_operand.vmem [shape: f32[2,1,1024], index: 8, kind: output, shape index: {2}]
  %9 = xla_tuple %s6, %s7, %s8
  %s10 = sld [smem:[#allocation0]]
  $region140: #{aspp_forward.3} parent=0
    _
  %s12 = ssub.s32 1, %s10
  %s13 = scalar_select 0, %s12, %s10
  %s14 = sshll.u32 %s0, 4
  %s15 = int_to_ptr.vmem [resolvable:$true] %s14
  %17 = dma.vmem_to_smem %s15, 16, [#allocation4], [#allocation3]
  %s18 = sshll.u32 %s1, 4
  %s19 = int_to_ptr.vmem [resolvable:$true] %s18
  %21 = dma.vmem_to_smem %s19, 16, [#allocation5], [#allocation3]
  %s22 = sshll.u32 %s2, 4
  %s23 = int_to_ptr.vmem [resolvable:$true] %s22
  %25 = dma.vmem_to_smem %s23, 16, [#allocation6], [#allocation3]
  %s26 = sshll.u32 %s3, 4
  %s27 = int_to_ptr.vmem [resolvable:$true] %s26
  %29 = dma.vmem_to_smem %s27, 16, [#allocation7], [#allocation3]
  %30 = dma.done [#allocation3], 64
  %31 = sfence
  $region1: #{aspp_forward.3} parent=0
    #allocation8 [shape = 'u8[131072]{0}', space=vmem, size = 0x20000, scoped, tag = 'input window, operand 4']
    #allocation9 [shape = 'u8[262144]{0}', space=vmem, size = 0x40000, scoped, tag = 'output window, operand 0']
    loop: start=0, step=1, limit=16
    $region2: #{aspp_forward.3} parent=1 // loop_pre_header
      _
    $region3: #{aspp_forward.3} parent=1 // loop_header
      %s33 = sphi 0, %s37
      %p34 = scmp.ge.s32.totalorder %s33, 16
      %s40 = sphi 0, %s52
      %s41 = sphi 0, %s48
      %s42 = sphi 0, %s40
      %s43 = sphi 0, %s41
      %s44 = sphi 0, %s42
      %s45 = sphi 0, %s43
      %s59 = sphi 0, %s61
      %s62 = sphi 0, %s59
      %s63 = sphi 0, %s62
      %s79 = sphi 0, %s63
      %s87 = sphi 0, %s89
      %s90 = sphi 0, %s87
      %s91 = sphi 0, %s90
      %s107 = sphi 0, %s91
      %s117 = sphi 0, %s119
      %s120 = sphi 0, %s117
      %s121 = sphi 0, %s120
      %s137 = sphi 0, %s121
      %s147 = sphi 0, %s149
      %s150 = sphi 0, %s147
      %s151 = sphi 0, %s150
      %s167 = sphi 0, %s151
      %s177 = sphi 0, %s179
      %s180 = sphi 0, %s177
      %s181 = sphi 0, %s180
      %s197 = sphi 0, %s181
    $region4: #{aspp_forward.3} parent=1 // loop_header_branch
      %36 = sbr.rel (%p34) target = $region8
    $region5: #{aspp_forward.3} parent=1 // loop_body
      %s38 = ssub.s32 %s33, 1
      %s39 = ssub.s32 %s33, 2
      %s46 = sadd.s32 1, %s41
      %p47 = scmp.ge.s32.totalorder %s46, 7
      %s48 = scalar_select %p47, 0, %s46
      %s49 = sadd.s32 1, %s40
      %s50 = scalar_select %p47, %s49, %s40
      %p51 = scmp.ge.s32.totalorder %s50, 2
      %s52 = scalar_select %p51, 0, %s50
      %s53 = sld [smem:[#allocation5 + %s41]]
      %s54 = sld [smem:[#allocation5 + %s48]]
      %s55 = ssub.s32 %s40, %s52
      %s56 = ssub.s32 %s53, %s54
      %s57 = sor.u32 %s55, %s56
      %p58 = scmp.eq.s32.totalorder %s57, 0
      %s60 = sadd.s32 %s59, 1
      %s61 = scalar_select %p58, %s59, %s60
      %p64 = pneg %p58
      %p65 = scmp.eq.s32.totalorder %s33, 13
      %p66 = por %p64, %p65
      %p67 = scmp.ne.s32.totalorder %s59, %s62
      %p68 = scmp.eq.s32.totalorder %s33, 0
      %p69 = por %p67, %p68
      %p70 = scmp.ne.s32.totalorder %s59, %s62
      %p71 = scmp.eq.s32.totalorder %s38, 13
      %p72 = por %p70, %p71
      %p73 = scmp.ne.s32.totalorder %s62, %s63
      %p74 = scmp.eq.s32.totalorder %s38, 0
      %p75 = por %p73, %p74
      %p76 = scmp.ne.s32.totalorder %s62, %s63
      %p77 = scmp.eq.s32.totalorder %s39, 13
      %p78 = por %p76, %p77
      %p80 = scmp.ne.s32.totalorder %s63, %s79
      %p81 = scmp.eq.s32.totalorder %s39, 0
      %p82 = por %p80, %p81
      %s83 = sld [smem:[#allocation5 + %s41]]
      %s84 = sld [smem:[#allocation5 + %s48]]
      %s85 = ssub.s32 %s83, %s84
      %p86 = scmp.eq.s32.totalorder %s85, 0
      %s88 = sadd.s32 %s87, 1
      %s89 = scalar_select %p86, %s87, %s88
      %p92 = pneg %p86
      %p93 = scmp.eq.s32.totalorder %s33, 13
      %p94 = por %p92, %p93
      %p95 = scmp.ne.s32.totalorder %s87, %s90
      %p96 = scmp.eq.s32.totalorder %s33, 0
      %p97 = por %p95, %p96
      %p98 = scmp.ne.s32.totalorder %s87, %s90
      %p99 = scmp.eq.s32.totalorder %s38, 13
      %p100 = por %p98, %p99
      %p101 = scmp.ne.s32.totalorder %s90, %s91
      %p102 = scmp.eq.s32.totalorder %s38, 0
      %p103 = por %p101, %p102
      %p104 = scmp.ne.s32.totalorder %s90, %s91
      %p105 = scmp.eq.s32.totalorder %s39, 13
      %p106 = por %p104, %p105
      %p108 = scmp.ne.s32.totalorder %s91, %s107
      %p109 = scmp.eq.s32.totalorder %s39, 0
      %p110 = por %p108, %p109
      %s111 = sld [smem:[#allocation4 + %s41]]
      %s112 = sld [smem:[#allocation4 + %s48]]
      %s113 = ssub.s32 %s40, %s52
      %s114 = ssub.s32 %s111, %s112
      %s115 = sor.u32 %s113, %s114
      %p116 = scmp.eq.s32.totalorder %s115, 0
      %s118 = sadd.s32 %s117, 1
      %s119 = scalar_select %p116, %s117, %s118
      %p122 = pneg %p116
      %p123 = scmp.eq.s32.totalorder %s33, 13
      %p124 = por %p122, %p123
      %p125 = scmp.ne.s32.totalorder %s117, %s120
      %p126 = scmp.eq.s32.totalorder %s33, 0
      %p127 = por %p125, %p126
      %p128 = scmp.ne.s32.totalorder %s117, %s120
      %p129 = scmp.eq.s32.totalorder %s38, 13
      %p130 = por %p128, %p129
      %p131 = scmp.ne.s32.totalorder %s120, %s121
      %p132 = scmp.eq.s32.totalorder %s38, 0
      %p133 = por %p131, %p132
      %p134 = scmp.ne.s32.totalorder %s120, %s121
      %p135 = scmp.eq.s32.totalorder %s39, 13
      %p136 = por %p134, %p135
      %p138 = scmp.ne.s32.totalorder %s121, %s137
      %p139 = scmp.eq.s32.totalorder %s39, 0
      %p140 = por %p138, %p139
      %s141 = sld [smem:[#allocation4 + %s41]]
      %s142 = sld [smem:[#allocation4 + %s48]]
      %s143 = ssub.s32 %s40, %s52
      %s144 = ssub.s32 %s141, %s142
      %s145 = sor.u32 %s143, %s144
      %p146 = scmp.eq.s32.totalorder %s145, 0
      %s148 = sadd.s32 %s147, 1
      %s149 = scalar_select %p146, %s147, %s148
      %p152 = pneg %p146
      %p153 = scmp.eq.s32.totalorder %s33, 13
      %p154 = por %p152, %p153
      %p155 = scmp.ne.s32.totalorder %s147, %s150
      %p156 = scmp.eq.s32.totalorder %s33, 0
      %p157 = por %p155, %p156
      %p158 = scmp.ne.s32.totalorder %s147, %s150
      %p159 = scmp.eq.s32.totalorder %s38, 13
      %p160 = por %p158, %p159
      %p161 = scmp.ne.s32.totalorder %s150, %s151
      %p162 = scmp.eq.s32.totalorder %s38, 0
      %p163 = por %p161, %p162
      %p164 = scmp.ne.s32.totalorder %s150, %s151
      %p165 = scmp.eq.s32.totalorder %s39, 13
      %p166 = por %p164, %p165
      %p168 = scmp.ne.s32.totalorder %s151, %s167
      %p169 = scmp.eq.s32.totalorder %s39, 0
      %p170 = por %p168, %p169
      %s171 = sld [smem:[#allocation4 + %s41]]
      %s172 = sld [smem:[#allocation4 + %s48]]
      %s173 = ssub.s32 %s40, %s52
      %s174 = ssub.s32 %s171, %s172
      %s175 = sor.u32 %s173, %s174
      %p176 = scmp.eq.s32.totalorder %s175, 0
      %s178 = sadd.s32 %s177, 1
      %s179 = scalar_select %p176, %s177, %s178
      %p182 = pneg %p176
      %p183 = scmp.eq.s32.totalorder %s33, 13
      %p184 = por %p182, %p183
      %p185 = scmp.ne.s32.totalorder %s177, %s180
      %p186 = scmp.eq.s32.totalorder %s33, 0
      %p187 = por %p185, %p186
      %p188 = scmp.ne.s32.totalorder %s177, %s180
      %p189 = scmp.eq.s32.totalorder %s38, 13
      %p190 = por %p188, %p189
      %p191 = scmp.ne.s32.totalorder %s180, %s181
      %p192 = scmp.eq.s32.totalorder %s38, 0
      %p193 = por %p191, %p192
      %p194 = scmp.ne.s32.totalorder %s180, %s181
      %p195 = scmp.eq.s32.totalorder %s39, 13
      %p196 = por %p194, %p195
      %p198 = scmp.ne.s32.totalorder %s181, %s197
      %p199 = scmp.eq.s32.totalorder %s39, 0
      %p200 = por %p198, %p199
      %p201 = scmp.le.s32.totalorder 1, %s33
      %p202 = scmp.lt.s32.totalorder %s33, 15
      %p203 = pnand %p201, %p202
      %p204 = pneg %p203
      // Predicated region
      $region9: #{aspp_forward.3} parent=5 // pred_check
        _
      $region10: #{aspp_forward.3} parent=5 // pred_check_branch
        %206 = sbr.rel (%p203) target = $region12
      $region11: #{aspp_forward.3} parent=5 // pred_region
        %s207 = ssub.s32 %s33, 1
      $region12: #{aspp_forward.3} parent=5 // pred_fallthru
        _
      %p208 = scmp.lt.s32.totalorder %s33, 14
      // Predicated region
      $region13: #{aspp_forward.3} parent=5 // pred_check
        %p209 = pneg %p208
      $region14: #{aspp_forward.3} parent=5 // pred_check_branch
        %211 = sbr.rel (%p209) target = $region16
      $region15: #{aspp_forward.3} parent=5 // pred_region
        // Predicated region
        $region17: #{aspp_forward.3} parent=15 // pred_check
          %p212 = pneg %p69
        $region18: #{aspp_forward.3} parent=15 // pred_check_branch
          %214 = sbr.rel (%p212) target = $region20
        $region19: #{aspp_forward.3} parent=15 // pred_region
          %s215 = sand.u32 %s59, 1
          %s216 = sand.u32 %s59, 1
          %s217 = smul.addr %s216, 128
          %s218 = scalar_lea.vmem [#allocation8], %s217
          %s219 = sld [smem:[#allocation5 + %s41]]
          %s220 = smul.u32 32, %s40
          %s221 = smul.addr %s220, 7
          %s222 = sadd.s32 %s219, %s221
          %s223 = smul.addr %s222, 4
          %s224 = scalar_lea.vmem %s4, %s223
          // Predicated region
          $region21: #{aspp_forward.3} parent=19 // pred_check
            _
          $region22: #{aspp_forward.3} parent=19 // pred_check_branch
            %226 = sbr.rel (0) target = $region24
          $region23: #{aspp_forward.3} parent=19 // pred_region
            // Predicated region
            $region25: #{aspp_forward.3} parent=23 // pred_check
              _
            $region26: #{aspp_forward.3} parent=23 // pred_check_branch
              %228 = sbr.rel target = $region28
            $region27: #{aspp_forward.3} parent=23 // pred_region
              // Predicated region
              $region40: #{aspp_forward.3} parent=27 // pred_check
                _
              $region41: #{aspp_forward.3} parent=27 // pred_check_branch
                %305 = sbr.rel (0) target = $region43
              $region42: #{aspp_forward.3} parent=27 // pred_region
                loop: start=0, step=1, limit=1
                $region44: #{aspp_forward.3} parent=42 // loop_pre_header
                  _
                $region45: #{aspp_forward.3} parent=42 // loop_header
                  %s307 = sphi 0, %s311
                  %p308 = scmp.ge.s32.totalorder %s307, 1
                  %s312 = sphi %s224, %s224
                  %s313 = sphi %s218, %s218
                $region46: #{aspp_forward.3} parent=42 // loop_header_branch
                  %310 = sbr.rel (%p308) target = $region50
                $region47: #{aspp_forward.3} parent=42 // loop_body
                  _
                $region48: #{aspp_forward.3} parent=42 // loop_footer
                  %s311 = sadd.s32 1, %s307
                $region49: #{aspp_forward.3} parent=42 // loop_footer_branch
                  %306 = sbr.rel target = $region45
                $region50: #{aspp_forward.3} parent=42 // loop_exit
                  _
                loop: start=0, step=1, limit=1
                $region51: #{aspp_forward.3} parent=42 // loop_pre_header
                  _
                $region52: #{aspp_forward.3} parent=42 // loop_header
                  %s316 = sphi 0, %s320
                  %p317 = scmp.ge.s32.totalorder %s316, 1
                  %s321 = sphi %s224, %s224
                  %s322 = sphi %s218, %s218
                $region53: #{aspp_forward.3} parent=42 // loop_header_branch
                  %319 = sbr.rel (%p317) target = $region57
                $region54: #{aspp_forward.3} parent=42 // loop_body
                  %v323 = vld [vmem:[%s321] sm:$0xf]
                  %324 = vst [vmem:[%s322] sm:$0xf] %v323
                  %v325 = vld [vmem:[%s321 + $0x1c] sm:$0xf]
                  %326 = vst [vmem:[%s322 + $0x4] sm:$0xf] %v325
                  %v327 = vld [vmem:[%s321 + $0x38] sm:$0xf]
                  %328 = vst [vmem:[%s322 + $0x8] sm:$0xf] %v327
                  %v329 = vld [vmem:[%s321 + $0x54] sm:$0xf]
                  %330 = vst [vmem:[%s322 + $0xc] sm:$0xf] %v329
                  %v331 = vld [vmem:[%s321 + $0x70] sm:$0xf]
                  %332 = vst [vmem:[%s322 + $0x10] sm:$0xf] %v331
                  %v333 = vld [vmem:[%s321 + $0x8c] sm:$0xf]
                  %334 = vst [vmem:[%s322 + $0x14] sm:$0xf] %v333
                  %v335 = vld [vmem:[%s321 + $0xa8] sm:$0xf]
                  %336 = vst [vmem:[%s322 + $0x18] sm:$0xf] %v335
                  %v337 = vld [vmem:[%s321 + $0xc4] sm:$0xf]
                  %338 = vst [vmem:[%s322 + $0x1c] sm:$0xf] %v337
                  %v339 = vld [vmem:[%s321 + $0xe0] sm:$0xf]
                  %340 = vst [vmem:[%s322 + $0x20] sm:$0xf] %v339
                  %v341 = vld [vmem:[%s321 + $0xfc] sm:$0xf]
                  %342 = vst [vmem:[%s322 + $0x24] sm:$0xf] %v341
                  %v343 = vld [vmem:[%s321 + $0x118] sm:$0xf]
                  %344 = vst [vmem:[%s322 + $0x28] sm:$0xf] %v343
                  %v345 = vld [vmem:[%s321 + $0x134] sm:$0xf]
                  %346 = vst [vmem:[%s322 + $0x2c] sm:$0xf] %v345
                  %v347 = vld [vmem:[%s321 + $0x150] sm:$0xf]
                  %348 = vst [vmem:[%s322 + $0x30] sm:$0xf] %v347
                  %v349 = vld [vmem:[%s321 + $0x16c] sm:$0xf]
                  %350 = vst [vmem:[%s322 + $0x34] sm:$0xf] %v349
                  %v351 = vld [vmem:[%s321 + $0x188] sm:$0xf]
                  %352 = vst [vmem:[%s322 + $0x38] sm:$0xf] %v351
                  %v353 = vld [vmem:[%s321 + $0x1a4] sm:$0xf]
                  %354 = vst [vmem:[%s322 + $0x3c] sm:$0xf] %v353
                  %v355 = vld [vmem:[%s321 + $0x1c0] sm:$0xf]
                  %356 = vst [vmem:[%s322 + $0x40] sm:$0xf] %v355
                  %v357 = vld [vmem:[%s321 + $0x1dc] sm:$0xf]
                  %358 = vst [vmem:[%s322 + $0x44] sm:$0xf] %v357
                  %v359 = vld [vmem:[%s321 + $0x1f8] sm:$0xf]
                  %360 = vst [vmem:[%s322 + $0x48] sm:$0xf] %v359
                  %v361 = vld [vmem:[%s321 + $0x214] sm:$0xf]
                  %362 = vst [vmem:[%s322 + $0x4c] sm:$0xf] %v361
                  %v363 = vld [vmem:[%s321 + $0x230] sm:$0xf]
                  %364 = vst [vmem:[%s322 + $0x50] sm:$0xf] %v363
                  %v365 = vld [vmem:[%s321 + $0x24c] sm:$0xf]
                  %366 = vst [vmem:[%s322 + $0x54] sm:$0xf] %v365
                  %v367 = vld [vmem:[%s321 + $0x268] sm:$0xf]
                  %368 = vst [vmem:[%s322 + $0x58] sm:$0xf] %v367
                  %v369 = vld [vmem:[%s321 + $0x284] sm:$0xf]
                  %370 = vst [vmem:[%s322 + $0x5c] sm:$0xf] %v369
                  %v371 = vld [vmem:[%s321 + $0x2a0] sm:$0xf]
                  %372 = vst [vmem:[%s322 + $0x60] sm:$0xf] %v371
                  %v373 = vld [vmem:[%s321 + $0x2bc] sm:$0xf]
                  %374 = vst [vmem:[%s322 + $0x64] sm:$0xf] %v373
                  %v375 = vld [vmem:[%s321 + $0x2d8] sm:$0xf]
                  %376 = vst [vmem:[%s322 + $0x68] sm:$0xf] %v375
                  %v377 = vld [vmem:[%s321 + $0x2f4] sm:$0xf]
                  %378 = vst [vmem:[%s322 + $0x6c] sm:$0xf] %v377
                  %v379 = vld [vmem:[%s321 + $0x310] sm:$0xf]
                  %380 = vst [vmem:[%s322 + $0x70] sm:$0xf] %v379
                  %v381 = vld [vmem:[%s321 + $0x32c] sm:$0xf]
                  %382 = vst [vmem:[%s322 + $0x74] sm:$0xf] %v381
                  %v383 = vld [vmem:[%s321 + $0x348] sm:$0xf]
                  %384 = vst [vmem:[%s322 + $0x78] sm:$0xf] %v383
                  %v385 = vld [vmem:[%s321 + $0x364] sm:$0xf]
                  %386 = vst [vmem:[%s322 + $0x7c] sm:$0xf] %v385
                $region55: #{aspp_forward.3} parent=42 // loop_footer
                  %s320 = sadd.s32 1, %s316
                $region56: #{aspp_forward.3} parent=42 // loop_footer_branch
                  %315 = sbr.rel target = $region52
                $region57: #{aspp_forward.3} parent=42 // loop_exit
                  _
              $region43: #{aspp_forward.3} parent=27 // pred_fallthru
                _
            $region28: #{aspp_forward.3} parent=23 // pred_fallthru
              _
            // Predicated region
            $region29: #{aspp_forward.3} parent=23 // pred_check
              _
            $region30: #{aspp_forward.3} parent=23 // pred_check_branch
              %230 = sbr.rel (0) target = $region32
            $region31: #{aspp_forward.3} parent=23 // pred_region
              loop: start=0, step=1, limit=1
              $region33: #{aspp_forward.3} parent=31 // loop_pre_header
                _
              $region34: #{aspp_forward.3} parent=31 // loop_header
                %s233 = sphi 0, %s237
                %p234 = scmp.ge.s32.totalorder %s233, 1
                %s238 = sphi %s224, %s224
                %s239 = sphi %s218, %s218
              $region35: #{aspp_forward.3} parent=31 // loop_header_branch
                %236 = sbr.rel (%p234) target = $region39
              $region36: #{aspp_forward.3} parent=31 // loop_body
                %v240 = vld [vmem:[%s238] sm:$0xf]
                %241 = vst [vmem:[%s239] sm:$0xf] %v240
                %v242 = vld [vmem:[%s238 + $0x1c] sm:$0xf]
                %243 = vst [vmem:[%s239 + $0x4] sm:$0xf] %v242
                %v244 = vld [vmem:[%s238 + $0x38] sm:$0xf]
                %245 = vst [vmem:[%s239 + $0x8] sm:$0xf] %v244
                %v246 = vld [vmem:[%s238 + $0x54] sm:$0xf]
                %247 = vst [vmem:[%s239 + $0xc] sm:$0xf] %v246
                %v248 = vld [vmem:[%s238 + $0x70] sm:$0xf]
                %249 = vst [vmem:[%s239 + $0x10] sm:$0xf] %v248
                %v250 = vld [vmem:[%s238 + $0x8c] sm:$0xf]
                %251 = vst [vmem:[%s239 + $0x14] sm:$0xf] %v250
                %v252 = vld [vmem:[%s238 + $0xa8] sm:$0xf]
                %253 = vst [vmem:[%s239 + $0x18] sm:$0xf] %v252
                %v254 = vld [vmem:[%s238 + $0xc4] sm:$0xf]
                %255 = vst [vmem:[%s239 + $0x1c] sm:$0xf] %v254
                %v256 = vld [vmem:[%s238 + $0xe0] sm:$0xf]
                %257 = vst [vmem:[%s239 + $0x20] sm:$0xf] %v256
                %v258 = vld [vmem:[%s238 + $0xfc] sm:$0xf]
                %259 = vst [vmem:[%s239 + $0x24] sm:$0xf] %v258
                %v260 = vld [vmem:[%s238 + $0x118] sm:$0xf]
                %261 = vst [vmem:[%s239 + $0x28] sm:$0xf] %v260
                %v262 = vld [vmem:[%s238 + $0x134] sm:$0xf]
                %263 = vst [vmem:[%s239 + $0x2c] sm:$0xf] %v262
                %v264 = vld [vmem:[%s238 + $0x150] sm:$0xf]
                %265 = vst [vmem:[%s239 + $0x30] sm:$0xf] %v264
                %v266 = vld [vmem:[%s238 + $0x16c] sm:$0xf]
                %267 = vst [vmem:[%s239 + $0x34] sm:$0xf] %v266
                %v268 = vld [vmem:[%s238 + $0x188] sm:$0xf]
                %269 = vst [vmem:[%s239 + $0x38] sm:$0xf] %v268
                %v270 = vld [vmem:[%s238 + $0x1a4] sm:$0xf]
                %271 = vst [vmem:[%s239 + $0x3c] sm:$0xf] %v270
                %v272 = vld [vmem:[%s238 + $0x1c0] sm:$0xf]
                %273 = vst [vmem:[%s239 + $0x40] sm:$0xf] %v272
                %v274 = vld [vmem:[%s238 + $0x1dc] sm:$0xf]
                %275 = vst [vmem:[%s239 + $0x44] sm:$0xf] %v274
                %v276 = vld [vmem:[%s238 + $0x1f8] sm:$0xf]
                %277 = vst [vmem:[%s239 + $0x48] sm:$0xf] %v276
                %v278 = vld [vmem:[%s238 + $0x214] sm:$0xf]
                %279 = vst [vmem:[%s239 + $0x4c] sm:$0xf] %v278
                %v280 = vld [vmem:[%s238 + $0x230] sm:$0xf]
                %281 = vst [vmem:[%s239 + $0x50] sm:$0xf] %v280
                %v282 = vld [vmem:[%s238 + $0x24c] sm:$0xf]
                %283 = vst [vmem:[%s239 + $0x54] sm:$0xf] %v282
                %v284 = vld [vmem:[%s238 + $0x268] sm:$0xf]
                %285 = vst [vmem:[%s239 + $0x58] sm:$0xf] %v284
                %v286 = vld [vmem:[%s238 + $0x284] sm:$0xf]
                %287 = vst [vmem:[%s239 + $0x5c] sm:$0xf] %v286
                %v288 = vld [vmem:[%s238 + $0x2a0] sm:$0xf]
                %289 = vst [vmem:[%s239 + $0x60] sm:$0xf] %v288
                %v290 = vld [vmem:[%s238 + $0x2bc] sm:$0xf]
                %291 = vst [vmem:[%s239 + $0x64] sm:$0xf] %v290
                %v292 = vld [vmem:[%s238 + $0x2d8] sm:$0xf]
                %293 = vst [vmem:[%s239 + $0x68] sm:$0xf] %v292
                %v294 = vld [vmem:[%s238 + $0x2f4] sm:$0xf]
                %295 = vst [vmem:[%s239 + $0x6c] sm:$0xf] %v294
                %v296 = vld [vmem:[%s238 + $0x310] sm:$0xf]
                %297 = vst [vmem:[%s239 + $0x70] sm:$0xf] %v296
                %v298 = vld [vmem:[%s238 + $0x32c] sm:$0xf]
                %299 = vst [vmem:[%s239 + $0x74] sm:$0xf] %v298
                %v300 = vld [vmem:[%s238 + $0x348] sm:$0xf]
                %301 = vst [vmem:[%s239 + $0x78] sm:$0xf] %v300
                %v302 = vld [vmem:[%s238 + $0x364] sm:$0xf]
                %303 = vst [vmem:[%s239 + $0x7c] sm:$0xf] %v302
              $region37: #{aspp_forward.3} parent=31 // loop_footer
                %s237 = sadd.s32 1, %s233
              $region38: #{aspp_forward.3} parent=31 // loop_footer_branch
                %232 = sbr.rel target = $region34
              $region39: #{aspp_forward.3} parent=31 // loop_exit
                _
            $region32: #{aspp_forward.3} parent=23 // pred_fallthru
              _
          $region24: #{aspp_forward.3} parent=19 // pred_fallthru
            _
          %387 = vnop
        $region20: #{aspp_forward.3} parent=15 // pred_fallthru
          _
        // Predicated region
        $region58: #{aspp_forward.3} parent=15 // pred_check
          %p388 = pneg %p97
        $region59: #{aspp_forward.3} parent=15 // pred_check_branch
          %390 = sbr.rel (%p388) target = $region61
        $region60: #{aspp_forward.3} parent=15 // pred_region
          %s391 = sld [smem:[#allocation5 + %s41]]
          %s392 = smul.u32 16, %s391
          %p393 = scmp.lt.s32.totalorder %s392, 111
          %s394 = scalar_select %p393, %s392, 111
          %s395 = smul.addr %s394, 2
          %s396 = smul.addr %s395, 4
          %s397 = scalar_lea.vmem %s5, %s396
          %s398 = sld [smem:[#allocation5 + %s41]]
          %s399 = smul.u32 16, %s398
        $region61: #{aspp_forward.3} parent=15 // pred_fallthru
          _
      $region16: #{aspp_forward.3} parent=5 // pred_fallthru
        _
      %p400 = scmp.le.s32.totalorder 1, %s33
      %p401 = scmp.lt.s32.totalorder %s33, 15
      %p402 = pnand %p400, %p401
      %p403 = pneg %p402
      // Predicated region
      $region62: #{aspp_forward.3} parent=5 // pred_check
        _
      $region63: #{aspp_forward.3} parent=5 // pred_check_branch
        %405 = sbr.rel (%p402) target = $region65
      $region64: #{aspp_forward.3} parent=5 // pred_region
        %s406 = ssub.s32 %s33, 1
        %s407 = sand.u32 %s62, 1
        %s408 = sand.u32 %s62, 1
        %s409 = smul.addr %s408, 128
        %s410 = scalar_lea.vmem [#allocation8], %s409
        // Predicated region
        $region66: #{aspp_forward.3} parent=64 // pred_check
          %p411 = pneg %p75
        $region67: #{aspp_forward.3} parent=64 // pred_check_branch
          %413 = sbr.rel (%p411) target = $region69
        $region68: #{aspp_forward.3} parent=64 // pred_region
          _
        $region69: #{aspp_forward.3} parent=64 // pred_fallthru
          _
        %s414 = sand.u32 %s62, 1
        %s415 = sand.u32 %s62, 1
        %s416 = smul.addr %s415, 128
        %s417 = scalar_lea.vmem [#allocation8], %s416
        %p418 = pneg %p75
        %p419 = pneg %p72
        %s420 = sld [smem:[#allocation5 + %s43]]
        %s421 = smul.u32 16, %s420
        %p422 = scmp.lt.s32.totalorder %s421, 111
        %s423 = scalar_select %p422, %s421, 111
        %s424 = smul.addr %s423, 2
        %s425 = smul.addr %s424, 4
        %s426 = scalar_lea.vmem %s5, %s425
        %p427 = pneg %p103
        %p428 = pneg %p100
        %p429 = pneg %p133
        %p430 = pneg %p130
        %s431 = sand.u32 %s120, 1
        %s432 = sand.u32 %s120, 1
        %s433 = smul.addr %s432, 256
        %s434 = scalar_lea.vmem [#allocation9], %s433
        %p435 = pneg %p163
        %p436 = pneg %p160
        %s437 = sld [smem:[#allocation4 + %s43]]
        %s438 = smul.u32 2, %s437
        %p439 = scmp.lt.s32.totalorder %s42, 1
        %s440 = scalar_select %p439, %s42, 1
        %p441 = scmp.lt.s32.totalorder %s438, 7
        %s442 = scalar_select %p441, %s438, 7
        %s443 = smul.addr %s440, 8
        %s444 = sadd.s32 %s442, %s443
        %s445 = scalar_lea.vmem %s7, %s444
        %p446 = pneg %p193
        %p447 = pneg %p190
        %s448 = sld [smem:[#allocation4 + %s43]]
        %s449 = smul.u32 2, %s448
        %p450 = scmp.lt.s32.totalorder %s42, 1
        %s451 = scalar_select %p450, %s42, 1
        %p452 = scmp.lt.s32.totalorder %s449, 7
        %s453 = scalar_select %p452, %s449, 7
        %s454 = smul.addr %s451, 8
        %s455 = sadd.s32 %s453, %s454
        %s456 = scalar_lea.vmem %s8, %s455
        %s457 = sld [smem:[#allocation5 + %s43]]
        %s458 = smul.u32 32, %s42
        %s459 = sld [smem:[#allocation5 + %s43]]
        %s460 = smul.u32 16, %s459
        %p461 = scmp.lt.s32.totalorder %s460, 111
        %s462 = scalar_select %p461, %s460, 111
        %s463 = smul.addr %s462, 2
        %s464 = smul.addr %s463, 4
        %s465 = scalar_lea.vmem %s5, %s464
        %s466 = sld [smem:[#allocation5 + %s43]]
        %s467 = smul.u32 16, %s466
        %s468 = sld [smem:[#allocation4 + %s43]]
        %s469 = smul.u32 32, %s42
        %s470 = smul.u32 2, %s468
        %s471 = sld [smem:[#allocation4 + %s43]]
        %s472 = smul.u32 2, %s471
        %p473 = scmp.lt.s32.totalorder %s42, 1
        %s474 = scalar_select %p473, %s42, 1
        %p475 = scmp.lt.s32.totalorder %s472, 7
        %s476 = scalar_select %p475, %s472, 7
        %s477 = smul.addr %s474, 8
        %s478 = sadd.s32 %s476, %s477
        %s479 = scalar_lea.vmem %s7, %s478
        %s480 = sld [smem:[#allocation4 + %s43]]
        %s481 = smul.u32 2, %s480
        %s482 = sld [smem:[#allocation4 + %s43]]
        %s483 = smul.u32 2, %s482
        %p484 = scmp.lt.s32.totalorder %s42, 1
        %s485 = scalar_select %p484, %s42, 1
        %p486 = scmp.lt.s32.totalorder %s483, 7
        %s487 = scalar_select %p486, %s483, 7
        %s488 = smul.addr %s485, 8
        %s489 = sadd.s32 %s487, %s488
        %s490 = scalar_lea.vmem %s8, %s489
        %s491 = sld [smem:[#allocation4 + %s43]]
        %s492 = smul.u32 2, %s491
        %s494 = sld [smem:[#allocation6 + %s43]]
        %p495 = scmp.eq.s32.totalorder %s494, 1
        // Predicated region
        $region70: #{aspp_forward.3} parent=64 // pred_check
          %p496 = pneg %p495
        $region71: #{aspp_forward.3} parent=64 // pred_check_branch
          %498 = sbr.rel (%p496) target = $region73
        $region72: #{aspp_forward.3} parent=64 // pred_region
          %499 = vst [vmem:[#allocation2] sm:$0xff] 0.0
          %500 = vst [vmem:[#allocation2 + $0x8] sm:$0xff] 0.0
          %501 = vst [vmem:[#allocation2 + $0x10] sm:$0xff] 0.0
          %502 = vst [vmem:[#allocation2 + $0x18] sm:$0xff] 0.0
          %503 = vst [vmem:[#allocation2 + $0x20] sm:$0xff] 0.0
          %504 = vst [vmem:[#allocation2 + $0x28] sm:$0xff] 0.0
          %505 = vst [vmem:[#allocation2 + $0x30] sm:$0xff] 0.0
          %506 = vst [vmem:[#allocation2 + $0x38] sm:$0xff] 0.0
          %507 = vst [vmem:[#allocation2 + $0x40] sm:$0xff] 0.0
          %508 = vst [vmem:[#allocation2 + $0x48] sm:$0xff] 0.0
          %509 = vst [vmem:[#allocation2 + $0x50] sm:$0xff] 0.0
          %510 = vst [vmem:[#allocation2 + $0x58] sm:$0xff] 0.0
          %511 = vst [vmem:[#allocation2 + $0x60] sm:$0xff] 0.0
          %512 = vst [vmem:[#allocation2 + $0x68] sm:$0xff] 0.0
          %513 = vst [vmem:[#allocation2 + $0x70] sm:$0xff] 0.0
          %514 = vst [vmem:[#allocation2 + $0x78] sm:$0xff] 0.0
          %515 = vst [vmem:[#allocation2 + $0x80] sm:$0xff] 0.0
          %516 = vst [vmem:[#allocation2 + $0x88] sm:$0xff] 0.0
          %517 = vst [vmem:[#allocation2 + $0x90] sm:$0xff] 0.0
          %518 = vst [vmem:[#allocation2 + $0x98] sm:$0xff] 0.0
          %519 = vst [vmem:[#allocation2 + $0xa0] sm:$0xff] 0.0
          %520 = vst [vmem:[#allocation2 + $0xa8] sm:$0xff] 0.0
          %521 = vst [vmem:[#allocation2 + $0xb0] sm:$0xff] 0.0
          %522 = vst [vmem:[#allocation2 + $0xb8] sm:$0xff] 0.0
          %523 = vst [vmem:[#allocation2 + $0xc0] sm:$0xff] 0.0
          %524 = vst [vmem:[#allocation2 + $0xc8] sm:$0xff] 0.0
          %525 = vst [vmem:[#allocation2 + $0xd0] sm:$0xff] 0.0
          %526 = vst [vmem:[#allocation2 + $0xd8] sm:$0xff] 0.0
          %527 = vst [vmem:[#allocation2 + $0xe0] sm:$0xff] 0.0
          %528 = vst [vmem:[#allocation2 + $0xe8] sm:$0xff] 0.0
          %529 = vst [vmem:[#allocation2 + $0xf0] sm:$0xff] 0.0
          %530 = vst [vmem:[#allocation2 + $0xf8] sm:$0xff] 0.0
          %531 = vst [vmem:[#allocation2 + $0x100] sm:$0xff] 0.0
          %532 = vst [vmem:[#allocation2 + $0x108] sm:$0xff] 0.0
          %533 = vst [vmem:[#allocation2 + $0x110] sm:$0xff] 0.0
          %534 = vst [vmem:[#allocation2 + $0x118] sm:$0xff] 0.0
          %535 = vst [vmem:[#allocation2 + $0x120] sm:$0xff] 0.0
          %536 = vst [vmem:[#allocation2 + $0x128] sm:$0xff] 0.0
          %537 = vst [vmem:[#allocation2 + $0x130] sm:$0xff] 0.0
          %538 = vst [vmem:[#allocation2 + $0x138] sm:$0xff] 0.0
          %539 = vst [vmem:[#allocation2 + $0x140] sm:$0xff] 0.0
          %540 = vst [vmem:[#allocation2 + $0x148] sm:$0xff] 0.0
          %541 = vst [vmem:[#allocation2 + $0x150] sm:$0xff] 0.0
          %542 = vst [vmem:[#allocation2 + $0x158] sm:$0xff] 0.0
          %543 = vst [vmem:[#allocation2 + $0x160] sm:$0xff] 0.0
          %544 = vst [vmem:[#allocation2 + $0x168] sm:$0xff] 0.0
          %545 = vst [vmem:[#allocation2 + $0x170] sm:$0xff] 0.0
          %546 = vst [vmem:[#allocation2 + $0x178] sm:$0xff] 0.0
          %547 = vst [vmem:[#allocation2 + $0x180] sm:$0xff] 0.0
          %548 = vst [vmem:[#allocation2 + $0x188] sm:$0xff] 0.0
          %549 = vst [vmem:[#allocation2 + $0x190] sm:$0xff] 0.0
          %550 = vst [vmem:[#allocation2 + $0x198] sm:$0xff] 0.0
          %551 = vst [vmem:[#allocation2 + $0x1a0] sm:$0xff] 0.0
          %552 = vst [vmem:[#allocation2 + $0x1a8] sm:$0xff] 0.0
          %553 = vst [vmem:[#allocation2 + $0x1b0] sm:$0xff] 0.0
          %554 = vst [vmem:[#allocation2 + $0x1b8] sm:$0xff] 0.0
          %555 = vst [vmem:[#allocation2 + $0x1c0] sm:$0xff] 0.0
          %556 = vst [vmem:[#allocation2 + $0x1c8] sm:$0xff] 0.0
          %557 = vst [vmem:[#allocation2 + $0x1d0] sm:$0xff] 0.0
          %558 = vst [vmem:[#allocation2 + $0x1d8] sm:$0xff] 0.0
          %559 = vst [vmem:[#allocation2 + $0x1e0] sm:$0xff] 0.0
          %560 = vst [vmem:[#allocation2 + $0x1e8] sm:$0xff] 0.0
          %561 = vst [vmem:[#allocation2 + $0x1f0] sm:$0xff] 0.0
          %562 = vst [vmem:[#allocation2 + $0x1f8] sm:$0xff] 0.0
        $region73: #{aspp_forward.3} parent=64 // pred_fallthru
          _
        %v563 = vld [vmem:[#allocation2] sm:$0xff]
        %v564 = vld [vmem:[#allocation2 + $0x8] sm:$0xff]
        %v565 = vld [vmem:[#allocation2 + $0x10] sm:$0xff]
        %v566 = vld [vmem:[#allocation2 + $0x18] sm:$0xff]
        %v567 = vld [vmem:[#allocation2 + $0x20] sm:$0xff]
        %v568 = vld [vmem:[#allocation2 + $0x28] sm:$0xff]
        %v569 = vld [vmem:[#allocation2 + $0x30] sm:$0xff]
        %v570 = vld [vmem:[#allocation2 + $0x38] sm:$0xff]
        %v571 = vld [vmem:[#allocation2 + $0x40] sm:$0xff]
        %v572 = vld [vmem:[#allocation2 + $0x48] sm:$0xff]
        %v573 = vld [vmem:[#allocation2 + $0x50] sm:$0xff]
        %v574 = vld [vmem:[#allocation2 + $0x58] sm:$0xff]
        %v575 = vld [vmem:[#allocation2 + $0x60] sm:$0xff]
        %v576 = vld [vmem:[#allocation2 + $0x68] sm:$0xff]
        %v577 = vld [vmem:[#allocation2 + $0x70] sm:$0xff]
        %v578 = vld [vmem:[#allocation2 + $0x78] sm:$0xff]
        %v579 = vld [vmem:[#allocation2 + $0x80] sm:$0xff]
        %v580 = vld [vmem:[#allocation2 + $0x88] sm:$0xff]
        %v581 = vld [vmem:[#allocation2 + $0x90] sm:$0xff]
        %v582 = vld [vmem:[#allocation2 + $0x98] sm:$0xff]
        %v583 = vld [vmem:[#allocation2 + $0xa0] sm:$0xff]
        %v584 = vld [vmem:[#allocation2 + $0xa8] sm:$0xff]
        %v585 = vld [vmem:[#allocation2 + $0xb0] sm:$0xff]
        %v586 = vld [vmem:[#allocation2 + $0xb8] sm:$0xff]
        %v587 = vld [vmem:[#allocation2 + $0xc0] sm:$0xff]
        %v588 = vld [vmem:[#allocation2 + $0xc8] sm:$0xff]
        %v589 = vld [vmem:[#allocation2 + $0xd0] sm:$0xff]
        %v590 = vld [vmem:[#allocation2 + $0xd8] sm:$0xff]
        %v591 = vld [vmem:[#allocation2 + $0xe0] sm:$0xff]
        %v592 = vld [vmem:[#allocation2 + $0xe8] sm:$0xff]
        %v593 = vld [vmem:[#allocation2 + $0xf0] sm:$0xff]
        %v594 = vld [vmem:[#allocation2 + $0xf8] sm:$0xff]
        %v595 = vld [vmem:[#allocation2 + $0x100] sm:$0xff]
        %v596 = vld [vmem:[#allocation2 + $0x108] sm:$0xff]
        %v597 = vld [vmem:[#allocation2 + $0x110] sm:$0xff]
        %v598 = vld [vmem:[#allocation2 + $0x118] sm:$0xff]
        %v599 = vld [vmem:[#allocation2 + $0x120] sm:$0xff]
        %v600 = vld [vmem:[#allocation2 + $0x128] sm:$0xff]
        %v601 = vld [vmem:[#allocation2 + $0x130] sm:$0xff]
        %v602 = vld [vmem:[#allocation2 + $0x138] sm:$0xff]
        %v603 = vld [vmem:[#allocation2 + $0x140] sm:$0xff]
        %v604 = vld [vmem:[#allocation2 + $0x148] sm:$0xff]
        %v605 = vld [vmem:[#allocation2 + $0x150] sm:$0xff]
        %v606 = vld [vmem:[#allocation2 + $0x158] sm:$0xff]
        %v607 = vld [vmem:[#allocation2 + $0x160] sm:$0xff]
        %v608 = vld [vmem:[#allocation2 + $0x168] sm:$0xff]
        %v609 = vld [vmem:[#allocation2 + $0x170] sm:$0xff]
        %v610 = vld [vmem:[#allocation2 + $0x178] sm:$0xff]
        %v611 = vld [vmem:[#allocation2 + $0x180] sm:$0xff]
        %v612 = vld [vmem:[#allocation2 + $0x188] sm:$0xff]
        %v613 = vld [vmem:[#allocation2 + $0x190] sm:$0xff]
        %v614 = vld [vmem:[#allocation2 + $0x198] sm:$0xff]
        %v615 = vld [vmem:[#allocation2 + $0x1a0] sm:$0xff]
        %v616 = vld [vmem:[#allocation2 + $0x1a8] sm:$0xff]
        %v617 = vld [vmem:[#allocation2 + $0x1b0] sm:$0xff]
        %v618 = vld [vmem:[#allocation2 + $0x1b8] sm:$0xff]
        %v619 = vld [vmem:[#allocation2 + $0x1c0] sm:$0xff]
        %v620 = vld [vmem:[#allocation2 + $0x1c8] sm:$0xff]
        %v621 = vld [vmem:[#allocation2 + $0x1d0] sm:$0xff]
        %v622 = vld [vmem:[#allocation2 + $0x1d8] sm:$0xff]
        %v623 = vld [vmem:[#allocation2 + $0x1e0] sm:$0xff]
        %v624 = vld [vmem:[#allocation2 + $0x1e8] sm:$0xff]
        %v625 = vld [vmem:[#allocation2 + $0x1f0] sm:$0xff]
        %v626 = vld [vmem:[#allocation2 + $0x1f8] sm:$0xff]
        %v627 = vld [vmem:[%s410] sm:$0xf]
        %v628 = vld [vmem:[%s410 + $0x4] sm:$0xf]
        %v629 = vld [vmem:[%s410 + $0x8] sm:$0xf]
        %v630 = vld [vmem:[%s410 + $0xc] sm:$0xf]
        %v631 = vld [vmem:[%s410 + $0x10] sm:$0xf]
        %v632 = vld [vmem:[%s410 + $0x14] sm:$0xf]
        %v633 = vld [vmem:[%s410 + $0x18] sm:$0xf]
        %v634 = vld [vmem:[%s410 + $0x1c] sm:$0xf]
        %v635 = vld [vmem:[%s410 + $0x20] sm:$0xf]
        %v636 = vld [vmem:[%s410 + $0x24] sm:$0xf]
        %v637 = vld [vmem:[%s410 + $0x28] sm:$0xf]
        %v638 = vld [vmem:[%s410 + $0x2c] sm:$0xf]
        %v639 = vld [vmem:[%s410 + $0x30] sm:$0xf]
        %v640 = vld [vmem:[%s410 + $0x34] sm:$0xf]
        %v641 = vld [vmem:[%s410 + $0x38] sm:$0xf]
        %v642 = vld [vmem:[%s410 + $0x3c] sm:$0xf]
        %v643 = vld [vmem:[%s410 + $0x40] sm:$0xf]
        %v644 = vld [vmem:[%s410 + $0x44] sm:$0xf]
        %v645 = vld [vmem:[%s410 + $0x48] sm:$0xf]
        %v646 = vld [vmem:[%s410 + $0x4c] sm:$0xf]
        %v647 = vld [vmem:[%s410 + $0x50] sm:$0xf]
        %v648 = vld [vmem:[%s410 + $0x54] sm:$0xf]
        %v649 = vld [vmem:[%s410 + $0x58] sm:$0xf]
        %v650 = vld [vmem:[%s410 + $0x5c] sm:$0xf]
        %v651 = vld [vmem:[%s410 + $0x60] sm:$0xf]
        %v652 = vld [vmem:[%s410 + $0x64] sm:$0xf]
        %v653 = vld [vmem:[%s410 + $0x68] sm:$0xf]
        %v654 = vld [vmem:[%s410 + $0x6c] sm:$0xf]
        %v655 = vld [vmem:[%s410 + $0x70] sm:$0xf]
        %v656 = vld [vmem:[%s410 + $0x74] sm:$0xf]
        %v657 = vld [vmem:[%s410 + $0x78] sm:$0xf]
        %v658 = vld [vmem:[%s410 + $0x7c] sm:$0xf]
        %v659 = vld [vmem:[%s465] sm:$0xff]
        %v660 = vld [vmem:[%s465 + $0x8] sm:$0xff]
        %v661 = vld [vmem:[%s465 + $0x10] sm:$0xff]
        %v662 = vld [vmem:[%s465 + $0x18] sm:$0xff]
        %v663 = vld [vmem:[%s465 + $0x20] sm:$0xff]
        %v664 = vld [vmem:[%s465 + $0x28] sm:$0xff]
        %v665 = vld [vmem:[%s465 + $0x30] sm:$0xff]
        %v666 = vld [vmem:[%s465 + $0x38] sm:$0xff]
        %v667 = vld [vmem:[%s465 + $0x40] sm:$0xff]
        %v668 = vld [vmem:[%s465 + $0x48] sm:$0xff]
        %v669 = vld [vmem:[%s465 + $0x50] sm:$0xff]
        %v670 = vld [vmem:[%s465 + $0x58] sm:$0xff]
        %v671 = vld [vmem:[%s465 + $0x60] sm:$0xff]
        %v672 = vld [vmem:[%s465 + $0x68] sm:$0xff]
        %v673 = vld [vmem:[%s465 + $0x70] sm:$0xff]
        %v674 = vld [vmem:[%s465 + $0x78] sm:$0xff]
        %v707 = vunpack.c.l.b16 %v627
        %v708 = vunpack.c.l.b16 %v628
        %v709 = vunpack.c.l.b16 %v629
        %v710 = vunpack.c.l.b16 %v630
        %v711 = vunpack.c.l.b16 %v631
        %v712 = vunpack.c.l.b16 %v632
        %v713 = vunpack.c.l.b16 %v633
        %v714 = vunpack.c.l.b16 %v634
        %v715 = vunpack.c.l.b16 %v635
        %v716 = vunpack.c.l.b16 %v636
        %v717 = vunpack.c.l.b16 %v637
        %v718 = vunpack.c.l.b16 %v638
        %v719 = vunpack.c.l.b16 %v639
        %v720 = vunpack.c.l.b16 %v640
        %v721 = vunpack.c.l.b16 %v641
        %v722 = vunpack.c.l.b16 %v642
        %v723 = vunpack.c.l.b16 %v643
        %v724 = vunpack.c.l.b16 %v644
        %v725 = vunpack.c.l.b16 %v645
        %v726 = vunpack.c.l.b16 %v646
        %v727 = vunpack.c.l.b16 %v647
        %v728 = vunpack.c.l.b16 %v648
        %v729 = vunpack.c.l.b16 %v649
        %v730 = vunpack.c.l.b16 %v650
        %v731 = vunpack.c.l.b16 %v651
        %v732 = vunpack.c.l.b16 %v652
        %v733 = vunpack.c.l.b16 %v653
        %v734 = vunpack.c.l.b16 %v654
        %v735 = vunpack.c.l.b16 %v655
        %v736 = vunpack.c.l.b16 %v656
        %v737 = vunpack.c.l.b16 %v657
        %v738 = vunpack.c.l.b16 %v658
        %v739 = vpack.c.b16 %v708, %v707
        %v740 = vpack.c.b16 %v710, %v709
        %v741 = vpack.c.b16 %v712, %v711
        %v742 = vpack.c.b16 %v714, %v713
        %v743 = vpack.c.b16 %v716, %v715
        %v744 = vpack.c.b16 %v718, %v717
        %v745 = vpack.c.b16 %v720, %v719
        %v746 = vpack.c.b16 %v722, %v721
        %v747 = vpack.c.b16 %v724, %v723
        %v748 = vpack.c.b16 %v726, %v725
        %v749 = vpack.c.b16 %v728, %v727
        %v750 = vpack.c.b16 %v730, %v729
        %v751 = vpack.c.b16 %v732, %v731
        %v752 = vpack.c.b16 %v734, %v733
        %v753 = vpack.c.b16 %v736, %v735
        %v754 = vpack.c.b16 %v738, %v737
        %v787 = vunpack.c.l.b16 %v659
        %v788 = vunpack.c.h.b16 %v659
        %v789 = vunpack.c.l.b16 %v660
        %v790 = vunpack.c.h.b16 %v660
        %v791 = vunpack.c.l.b16 %v661
        %v792 = vunpack.c.h.b16 %v661
        %v793 = vunpack.c.l.b16 %v662
        %v794 = vunpack.c.h.b16 %v662
        %v795 = vunpack.c.l.b16 %v663
        %v796 = vunpack.c.h.b16 %v663
        %v797 = vunpack.c.l.b16 %v664
        %v798 = vunpack.c.h.b16 %v664
        %v799 = vunpack.c.l.b16 %v665
        %v800 = vunpack.c.h.b16 %v665
        %v801 = vunpack.c.l.b16 %v666
        %v802 = vunpack.c.h.b16 %v666
        %v803 = vunpack.c.l.b16 %v667
        %v804 = vunpack.c.h.b16 %v667
        %v805 = vunpack.c.l.b16 %v668
        %v806 = vunpack.c.h.b16 %v668
        %v807 = vunpack.c.l.b16 %v669
        %v808 = vunpack.c.h.b16 %v669
        %v809 = vunpack.c.l.b16 %v670
        %v810 = vunpack.c.h.b16 %v670
        %v811 = vunpack.c.l.b16 %v671
        %v812 = vunpack.c.h.b16 %v671
        %v813 = vunpack.c.l.b16 %v672
        %v814 = vunpack.c.h.b16 %v672
        %v815 = vunpack.c.l.b16 %v673
        %v816 = vunpack.c.h.b16 %v673
        %v817 = vunpack.c.l.b16 %v674
        %v818 = vunpack.c.h.b16 %v674
        %v819 = vpack.c.b16 %v789, %v787
        %v820 = vpack.c.b16 %v790, %v788
        %v821 = vpack.c.b16 %v793, %v791
        %v822 = vpack.c.b16 %v794, %v792
        %v823 = vpack.c.b16 %v797, %v795
        %v824 = vpack.c.b16 %v798, %v796
        %v825 = vpack.c.b16 %v801, %v799
        %v826 = vpack.c.b16 %v802, %v800
        %v827 = vpack.c.b16 %v805, %v803
        %v828 = vpack.c.b16 %v806, %v804
        %v829 = vpack.c.b16 %v809, %v807
        %v830 = vpack.c.b16 %v810, %v808
        %v831 = vpack.c.b16 %v813, %v811
        %v832 = vpack.c.b16 %v814, %v812
        %v833 = vpack.c.b16 %v817, %v815
        %v834 = vpack.c.b16 %v818, %v816
        %851 = vmatprep.subr.bf16.mxu0 %v820
        %852 = vmatpush1.bf16.msra.mxu0 %v819
        %853 = vmatprep.subr.bf16.mxu0 %v822
        %854 = vmatpush1.bf16.msra.mxu0 %v821
        %855 = vmatprep.subr.bf16.mxu0 %v824
        %856 = vmatpush1.bf16.msra.mxu0 %v823
        %857 = vmatprep.subr.bf16.mxu0 %v826
        %858 = vmatpush1.bf16.msra.mxu0 %v825
        %859 = vmatprep.subr.bf16.mxu0 %v828
        %860 = vmatpush1.bf16.msra.mxu0 %v827
        %861 = vmatprep.subr.bf16.mxu0 %v830
        %862 = vmatpush1.bf16.msra.mxu0 %v829
        %863 = vmatprep.subr.bf16.mxu0 %v832
        %864 = vmatpush1.bf16.msra.mxu0 %v831
        %865 = vmatprep.subr.bf16.mxu0 %v834
        %866 = vmatpush1.bf16.msra.mxu0 %v833
        %867 = vmatprep.subr.bf16.mxu0 0
        %868 = vmatpush1.bf16.msra.mxu0 0
        %869 = vmatprep.subr.bf16.mxu0 0
        %870 = vmatpush1.bf16.msra.mxu0 0
        %871 = vmatprep.subr.bf16.mxu0 0
        %872 = vmatpush1.bf16.msra.mxu0 0
        %873 = vmatprep.subr.bf16.mxu0 0
        %874 = vmatpush1.bf16.msra.mxu0 0
        %875 = vmatprep.subr.bf16.mxu0 0
        %876 = vmatpush1.bf16.msra.mxu0 0
        %877 = vmatprep.subr.bf16.mxu0 0
        %878 = vmatpush1.bf16.msra.mxu0 0
        %879 = vmatprep.subr.bf16.mxu0 0
        %880 = vmatpush1.bf16.msra.mxu0 0
        %881 = vmatprep.subr.bf16.mxu0 0
        %882 = vmatpush1.bf16.msra.mxu0 0
        %883 = vmatprep.mubr.bf16.mxu0 0
        %884 = vmatmul.mubr.bf16.gmra.mrb[0].mxu0 %v739
        %v885 = vpop.f32.mrb[0].mxu0
        %v886 = vadd.f32 0.0, %v885
        %v887 = vpop.f32.mrb[0].mxu0
        %v888 = vadd.f32 0.0, %v887
        %v889 = vpop.f32.mrb[0].mxu0
        %v890 = vadd.f32 0.0, %v889
        %v891 = vpop.f32.mrb[0].mxu0
        %v892 = vadd.f32 0.0, %v891
        %893 = vmatprep.mubr.bf16.mxu0 0
        %894 = vmatmul.mubr.bf16.gmra.mrb[0].mxu0 %v740
        %v895 = vpop.f32.mrb[0].mxu0
        %v896 = vadd.f32 0.0, %v895
        %v897 = vpop.f32.mrb[0].mxu0
        %v898 = vadd.f32 0.0, %v897
        %v899 = vpop.f32.mrb[0].mxu0
        %v900 = vadd.f32 0.0, %v899
        %v901 = vpop.f32.mrb[0].mxu0
        %v902 = vadd.f32 0.0, %v901
        %903 = vmatprep.mubr.bf16.mxu0 0
        %904 = vmatmul.mubr.bf16.gmra.mrb[0].mxu0 %v741
        %v905 = vpop.f32.mrb[0].mxu0
        %v906 = vadd.f32 0.0, %v905
        %v907 = vpop.f32.mrb[0].mxu0
        %v908 = vadd.f32 0.0, %v907
        %v909 = vpop.f32.mrb[0].mxu0
        %v910 = vadd.f32 0.0, %v909
        %v911 = vpop.f32.mrb[0].mxu0
        %v912 = vadd.f32 0.0, %v911
        %913 = vmatprep.mubr.bf16.mxu0 0
        %914 = vmatmul.mubr.bf16.gmra.mrb[0].mxu0 %v742
        %v915 = vpop.f32.mrb[0].mxu0
        %v916 = vadd.f32 0.0, %v915
        %v917 = vpop.f32.mrb[0].mxu0
        %v918 = vadd.f32 0.0, %v917
        %v919 = vpop.f32.mrb[0].mxu0
        %v920 = vadd.f32 0.0, %v919
        %v921 = vpop.f32.mrb[0].mxu0
        %v922 = vadd.f32 0.0, %v921
        %923 = vmatprep.mubr.bf16.mxu0 0
        %924 = vmatmul.mubr.bf16.gmra.mrb[0].mxu0 %v743
        %v925 = vpop.f32.mrb[0].mxu0
        %v926 = vadd.f32 0.0, %v925
        %v927 = vpop.f32.mrb[0].mxu0
        %v928 = vadd.f32 0.0, %v927
        %v929 = vpop.f32.mrb[0].mxu0
        %v930 = vadd.f32 0.0, %v929
        %v931 = vpop.f32.mrb[0].mxu0
        %v932 = vadd.f32 0.0, %v931
        %933 = vmatprep.mubr.bf16.mxu0 0
        %934 = vmatmul.mubr.bf16.gmra.mrb[0].mxu0 %v744
        %v935 = vpop.f32.mrb[0].mxu0
        %v936 = vadd.f32 0.0, %v935
        %v937 = vpop.f32.mrb[0].mxu0
        %v938 = vadd.f32 0.0, %v937
        %v939 = vpop.f32.mrb[0].mxu0
        %v940 = vadd.f32 0.0, %v939
        %v941 = vpop.f32.mrb[0].mxu0
        %v942 = vadd.f32 0.0, %v941
        %943 = vmatprep.mubr.bf16.mxu0 0
        %944 = vmatmul.mubr.bf16.gmra.mrb[0].mxu0 %v745
        %v945 = vpop.f32.mrb[0].mxu0
        %v946 = vadd.f32 0.0, %v945
        %v947 = vpop.f32.mrb[0].mxu0
        %v948 = vadd.f32 0.0, %v947
        %v949 = vpop.f32.mrb[0].mxu0
        %v950 = vadd.f32 0.0, %v949
        %v951 = vpop.f32.mrb[0].mxu0
        %v952 = vadd.f32 0.0, %v951
        %953 = vmatprep.mubr.bf16.mxu0 0
        %954 = vmatmul.mubr.bf16.gmra.mrb[0].mxu0 %v746
        %v955 = vpop.f32.mrb[0].mxu0
        %v956 = vadd.f32 0.0, %v955
        %v957 = vpop.f32.mrb[0].mxu0
        %v958 = vadd.f32 0.0, %v957
        %v959 = vpop.f32.mrb[0].mxu0
        %v960 = vadd.f32 0.0, %v959
        %v961 = vpop.f32.mrb[0].mxu0
        %v962 = vadd.f32 0.0, %v961
        %963 = vmatprep.mubr.bf16.mxu0 0
        %964 = vmatmul.mubr.bf16.gmra.mrb[0].mxu0 %v747
        %v965 = vpop.f32.mrb[0].mxu0
        %v966 = vadd.f32 0.0, %v965
        %v967 = vpop.f32.mrb[0].mxu0
        %v968 = vadd.f32 0.0, %v967
        %v969 = vpop.f32.mrb[0].mxu0
        %v970 = vadd.f32 0.0, %v969
        %v971 = vpop.f32.mrb[0].mxu0
        %v972 = vadd.f32 0.0, %v971
        %973 = vmatprep.mubr.bf16.mxu0 0
        %974 = vmatmul.mubr.bf16.gmra.mrb[0].mxu0 %v748
        %v975 = vpop.f32.mrb[0].mxu0
        %v976 = vadd.f32 0.0, %v975
        %v977 = vpop.f32.mrb[0].mxu0
        %v978 = vadd.f32 0.0, %v977
        %v979 = vpop.f32.mrb[0].mxu0
        %v980 = vadd.f32 0.0, %v979
        %v981 = vpop.f32.mrb[0].mxu0
        %v982 = vadd.f32 0.0, %v981
        %983 = vmatprep.mubr.bf16.mxu0 0
        %984 = vmatmul.mubr.bf16.gmra.mrb[0].mxu0 %v749
        %v985 = vpop.f32.mrb[0].mxu0
        %v986 = vadd.f32 0.0, %v985
        %v987 = vpop.f32.mrb[0].mxu0
        %v988 = vadd.f32 0.0, %v987
        %v989 = vpop.f32.mrb[0].mxu0
        %v990 = vadd.f32 0.0, %v989
        %v991 = vpop.f32.mrb[0].mxu0
        %v992 = vadd.f32 0.0, %v991
        %993 = vmatprep.mubr.bf16.mxu0 0
        %994 = vmatmul.mubr.bf16.gmra.mrb[0].mxu0 %v750
        %v995 = vpop.f32.mrb[0].mxu0
        %v996 = vadd.f32 0.0, %v995
        %v997 = vpop.f32.mrb[0].mxu0
        %v998 = vadd.f32 0.0, %v997
        %v999 = vpop.f32.mrb[0].mxu0
        %v1000 = vadd.f32 0.0, %v999
        %v1001 = vpop.f32.mrb[0].mxu0
        %v1002 = vadd.f32 0.0, %v1001
        %1003 = vmatprep.mubr.bf16.mxu0 0
        %1004 = vmatmul.mubr.bf16.gmra.mrb[0].mxu0 %v751
        %v1005 = vpop.f32.mrb[0].mxu0
        %v1006 = vadd.f32 0.0, %v1005
        %v1007 = vpop.f32.mrb[0].mxu0
        %v1008 = vadd.f32 0.0, %v1007
        %v1009 = vpop.f32.mrb[0].mxu0
        %v1010 = vadd.f32 0.0, %v1009
        %v1011 = vpop.f32.mrb[0].mxu0
        %v1012 = vadd.f32 0.0, %v1011
        %1013 = vmatprep.mubr.bf16.mxu0 0
        %1014 = vmatmul.mubr.bf16.gmra.mrb[0].mxu0 %v752
        %v1015 = vpop.f32.mrb[0].mxu0
        %v1016 = vadd.f32 0.0, %v1015
        %v1017 = vpop.f32.mrb[0].mxu0
        %v1018 = vadd.f32 0.0, %v1017
        %v1019 = vpop.f32.mrb[0].mxu0
        %v1020 = vadd.f32 0.0, %v1019
        %v1021 = vpop.f32.mrb[0].mxu0
        %v1022 = vadd.f32 0.0, %v1021
        %1023 = vmatprep.mubr.bf16.mxu0 0
        %1024 = vmatmul.mubr.bf16.gmra.mrb[0].mxu0 %v753
        %v1025 = vpop.f32.mrb[0].mxu0
        %v1026 = vadd.f32 0.0, %v1025
        %v1027 = vpop.f32.mrb[0].mxu0
        %v1028 = vadd.f32 0.0, %v1027
        %v1029 = vpop.f32.mrb[0].mxu0
        %v1030 = vadd.f32 0.0, %v1029
        %v1031 = vpop.f32.mrb[0].mxu0
        %v1032 = vadd.f32 0.0, %v1031
        %1033 = vmatprep.mubr.bf16.mxu0 0
        %1034 = vmatmul.mubr.bf16.gmra.mrb[0].mxu0 %v754
        %v1035 = vpop.f32.mrb[0].mxu0
        %v1036 = vadd.f32 0.0, %v1035
        %v1037 = vpop.f32.mrb[0].mxu0
        %v1038 = vadd.f32 0.0, %v1037
        %v1039 = vpop.f32.mrb[0].mxu0
        %v1040 = vadd.f32 0.0, %v1039
        %v1041 = vpop.f32.mrb[0].mxu0
        %v1042 = vadd.f32 0.0, %v1041
        %1043 = vdwg.mxu0
        %v1044 = vadd.f32 %v563, %v886
        %v1045 = vadd.f32 %v564, %v888
        %v1046 = vadd.f32 %v565, %v890
        %v1047 = vadd.f32 %v566, %v892
        %v1048 = vadd.f32 %v567, %v896
        %v1049 = vadd.f32 %v568, %v898
        %v1050 = vadd.f32 %v569, %v900
        %v1051 = vadd.f32 %v570, %v902
        %v1052 = vadd.f32 %v571, %v906
        %v1053 = vadd.f32 %v572, %v908
        %v1054 = vadd.f32 %v573, %v910
        %v1055 = vadd.f32 %v574, %v912
        %v1056 = vadd.f32 %v575, %v916
        %v1057 = vadd.f32 %v576, %v918
        %v1058 = vadd.f32 %v577, %v920
        %v1059 = vadd.f32 %v578, %v922
        %v1060 = vadd.f32 %v579, %v926
        %v1061 = vadd.f32 %v580, %v928
        %v1062 = vadd.f32 %v581, %v930
        %v1063 = vadd.f32 %v582, %v932
        %v1064 = vadd.f32 %v583, %v936
        %v1065 = vadd.f32 %v584, %v938
        %v1066 = vadd.f32 %v585, %v940
        %v1067 = vadd.f32 %v586, %v942
        %v1068 = vadd.f32 %v587, %v946
        %v1069 = vadd.f32 %v588, %v948
        %v1070 = vadd.f32 %v589, %v950
        %v1071 = vadd.f32 %v590, %v952
        %v1072 = vadd.f32 %v591, %v956
        %v1073 = vadd.f32 %v592, %v958
        %v1074 = vadd.f32 %v593, %v960
        %v1075 = vadd.f32 %v594, %v962
        %v1076 = vadd.f32 %v595, %v966
        %v1077 = vadd.f32 %v596, %v968
        %v1078 = vadd.f32 %v597, %v970
        %v1079 = vadd.f32 %v598, %v972
        %v1080 = vadd.f32 %v599, %v976
        %v1081 = vadd.f32 %v600, %v978
        %v1082 = vadd.f32 %v601, %v980
        %v1083 = vadd.f32 %v602, %v982
        %v1084 = vadd.f32 %v603, %v986
        %v1085 = vadd.f32 %v604, %v988
        %v1086 = vadd.f32 %v605, %v990
        %v1087 = vadd.f32 %v606, %v992
        %v1088 = vadd.f32 %v607, %v996
        %v1089 = vadd.f32 %v608, %v998
        %v1090 = vadd.f32 %v609, %v1000
        %v1091 = vadd.f32 %v610, %v1002
        %v1092 = vadd.f32 %v611, %v1006
        %v1093 = vadd.f32 %v612, %v1008
        %v1094 = vadd.f32 %v613, %v1010
        %v1095 = vadd.f32 %v614, %v1012
        %v1096 = vadd.f32 %v615, %v1016
        %v1097 = vadd.f32 %v616, %v1018
        %v1098 = vadd.f32 %v617, %v1020
        %v1099 = vadd.f32 %v618, %v1022
        %v1100 = vadd.f32 %v619, %v1026
        %v1101 = vadd.f32 %v620, %v1028
        %v1102 = vadd.f32 %v621, %v1030
        %v1103 = vadd.f32 %v622, %v1032
        %v1104 = vadd.f32 %v623, %v1036
        %v1105 = vadd.f32 %v624, %v1038
        %v1106 = vadd.f32 %v625, %v1040
        %v1107 = vadd.f32 %v626, %v1042
        %1108 = vst [vmem:[#allocation2] sm:$0xff] %v1044
        %1109 = vst [vmem:[#allocation2 + $0x8] sm:$0xff] %v1045
        %1110 = vst [vmem:[#allocation2 + $0x10] sm:$0xff] %v1046
        %1111 = vst [vmem:[#allocation2 + $0x18] sm:$0xff] %v1047
        %1112 = vst [vmem:[#allocation2 + $0x20] sm:$0xff] %v1048
        %1113 = vst [vmem:[#allocation2 + $0x28] sm:$0xff] %v1049
        %1114 = vst [vmem:[#allocation2 + $0x30] sm:$0xff] %v1050
        %1115 = vst [vmem:[#allocation2 + $0x38] sm:$0xff] %v1051
        %1116 = vst [vmem:[#allocation2 + $0x40] sm:$0xff] %v1052
        %1117 = vst [vmem:[#allocation2 + $0x48] sm:$0xff] %v1053
        %1118 = vst [vmem:[#allocation2 + $0x50] sm:$0xff] %v1054
        %1119 = vst [vmem:[#allocation2 + $0x58] sm:$0xff] %v1055
        %1120 = vst [vmem:[#allocation2 + $0x60] sm:$0xff] %v1056
        %1121 = vst [vmem:[#allocation2 + $0x68] sm:$0xff] %v1057
        %1122 = vst [vmem:[#allocation2 + $0x70] sm:$0xff] %v1058
        %1123 = vst [vmem:[#allocation2 + $0x78] sm:$0xff] %v1059
        %1124 = vst [vmem:[#allocation2 + $0x80] sm:$0xff] %v1060
        %1125 = vst [vmem:[#allocation2 + $0x88] sm:$0xff] %v1061
        %1126 = vst [vmem:[#allocation2 + $0x90] sm:$0xff] %v1062
        %1127 = vst [vmem:[#allocation2 + $0x98] sm:$0xff] %v1063
        %1128 = vst [vmem:[#allocation2 + $0xa0] sm:$0xff] %v1064
        %1129 = vst [vmem:[#allocation2 + $0xa8] sm:$0xff] %v1065
        %1130 = vst [vmem:[#allocation2 + $0xb0] sm:$0xff] %v1066
        %1131 = vst [vmem:[#allocation2 + $0xb8] sm:$0xff] %v1067
        %1132 = vst [vmem:[#allocation2 + $0xc0] sm:$0xff] %v1068
        %1133 = vst [vmem:[#allocation2 + $0xc8] sm:$0xff] %v1069
        %1134 = vst [vmem:[#allocation2 + $0xd0] sm:$0xff] %v1070
        %1135 = vst [vmem:[#allocation2 + $0xd8] sm:$0xff] %v1071
        %1136 = vst [vmem:[#allocation2 + $0xe0] sm:$0xff] %v1072
        %1137 = vst [vmem:[#allocation2 + $0xe8] sm:$0xff] %v1073
        %1138 = vst [vmem:[#allocation2 + $0xf0] sm:$0xff] %v1074
        %1139 = vst [vmem:[#allocation2 + $0xf8] sm:$0xff] %v1075
        %1140 = vst [vmem:[#allocation2 + $0x100] sm:$0xff] %v1076
        %1141 = vst [vmem:[#allocation2 + $0x108] sm:$0xff] %v1077
        %1142 = vst [vmem:[#allocation2 + $0x110] sm:$0xff] %v1078
        %1143 = vst [vmem:[#allocation2 + $0x118] sm:$0xff] %v1079
        %1144 = vst [vmem:[#allocation2 + $0x120] sm:$0xff] %v1080
        %1145 = vst [vmem:[#allocation2 + $0x128] sm:$0xff] %v1081
        %1146 = vst [vmem:[#allocation2 + $0x130] sm:$0xff] %v1082
        %1147 = vst [vmem:[#allocation2 + $0x138] sm:$0xff] %v1083
        %1148 = vst [vmem:[#allocation2 + $0x140] sm:$0xff] %v1084
        %1149 = vst [vmem:[#allocation2 + $0x148] sm:$0xff] %v1085
        %1150 = vst [vmem:[#allocation2 + $0x150] sm:$0xff] %v1086
        %1151 = vst [vmem:[#allocation2 + $0x158] sm:$0xff] %v1087
        %1152 = vst [vmem:[#allocation2 + $0x160] sm:$0xff] %v1088
        %1153 = vst [vmem:[#allocation2 + $0x168] sm:$0xff] %v1089
        %1154 = vst [vmem:[#allocation2 + $0x170] sm:$0xff] %v1090
        %1155 = vst [vmem:[#allocation2 + $0x178] sm:$0xff] %v1091
        %1156 = vst [vmem:[#allocation2 + $0x180] sm:$0xff] %v1092
        %1157 = vst [vmem:[#allocation2 + $0x188] sm:$0xff] %v1093
        %1158 = vst [vmem:[#allocation2 + $0x190] sm:$0xff] %v1094
        %1159 = vst [vmem:[#allocation2 + $0x198] sm:$0xff] %v1095
        %1160 = vst [vmem:[#allocation2 + $0x1a0] sm:$0xff] %v1096
        %1161 = vst [vmem:[#allocation2 + $0x1a8] sm:$0xff] %v1097
        %1162 = vst [vmem:[#allocation2 + $0x1b0] sm:$0xff] %v1098
        %1163 = vst [vmem:[#allocation2 + $0x1b8] sm:$0xff] %v1099
        %1164 = vst [vmem:[#allocation2 + $0x1c0] sm:$0xff] %v1100
        %1165 = vst [vmem:[#allocation2 + $0x1c8] sm:$0xff] %v1101
        %1166 = vst [vmem:[#allocation2 + $0x1d0] sm:$0xff] %v1102
        %1167 = vst [vmem:[#allocation2 + $0x1d8] sm:$0xff] %v1103
        %1168 = vst [vmem:[#allocation2 + $0x1e0] sm:$0xff] %v1104
        %1169 = vst [vmem:[#allocation2 + $0x1e8] sm:$0xff] %v1105
        %1170 = vst [vmem:[#allocation2 + $0x1f0] sm:$0xff] %v1106
        %1171 = vst [vmem:[#allocation2 + $0x1f8] sm:$0xff] %v1107
        %s1172 = sld [smem:[#allocation7 + %s43]]
        %p1173 = scmp.eq.s32.totalorder %s1172, 1
        // Predicated region
        $region74: #{aspp_forward.3} parent=64 // pred_check
          %p1174 = pneg %p1173
        $region75: #{aspp_forward.3} parent=64 // pred_check_branch
          %1176 = sbr.rel (%p1174) target = $region77
        $region76: #{aspp_forward.3} parent=64 // pred_region
          %v1177 = vld [vmem:[#allocation2] sm:$0xff]
          %v1178 = vld [vmem:[#allocation2 + $0x8] sm:$0xff]
          %v1179 = vld [vmem:[#allocation2 + $0x10] sm:$0xff]
          %v1180 = vld [vmem:[#allocation2 + $0x18] sm:$0xff]
          %v1181 = vld [vmem:[#allocation2 + $0x20] sm:$0xff]
          %v1182 = vld [vmem:[#allocation2 + $0x28] sm:$0xff]
          %v1183 = vld [vmem:[#allocation2 + $0x30] sm:$0xff]
          %v1184 = vld [vmem:[#allocation2 + $0x38] sm:$0xff]
          %v1185 = vld [vmem:[#allocation2 + $0x40] sm:$0xff]
          %v1186 = vld [vmem:[#allocation2 + $0x48] sm:$0xff]
          %v1187 = vld [vmem:[#allocation2 + $0x50] sm:$0xff]
          %v1188 = vld [vmem:[#allocation2 + $0x58] sm:$0xff]
          %v1189 = vld [vmem:[#allocation2 + $0x60] sm:$0xff]
          %v1190 = vld [vmem:[#allocation2 + $0x68] sm:$0xff]
          %v1191 = vld [vmem:[#allocation2 + $0x70] sm:$0xff]
          %v1192 = vld [vmem:[#allocation2 + $0x78] sm:$0xff]
          %v1193 = vld [vmem:[#allocation2 + $0x80] sm:$0xff]
          %v1194 = vld [vmem:[#allocation2 + $0x88] sm:$0xff]
          %v1195 = vld [vmem:[#allocation2 + $0x90] sm:$0xff]
          %v1196 = vld [vmem:[#allocation2 + $0x98] sm:$0xff]
          %v1197 = vld [vmem:[#allocation2 + $0xa0] sm:$0xff]
          %v1198 = vld [vmem:[#allocation2 + $0xa8] sm:$0xff]
          %v1199 = vld [vmem:[#allocation2 + $0xb0] sm:$0xff]
          %v1200 = vld [vmem:[#allocation2 + $0xb8] sm:$0xff]
          %v1201 = vld [vmem:[#allocation2 + $0xc0] sm:$0xff]
          %v1202 = vld [vmem:[#allocation2 + $0xc8] sm:$0xff]
          %v1203 = vld [vmem:[#allocation2 + $0xd0] sm:$0xff]
          %v1204 = vld [vmem:[#allocation2 + $0xd8] sm:$0xff]
          %v1205 = vld [vmem:[#allocation2 + $0xe0] sm:$0xff]
          %v1206 = vld [vmem:[#allocation2 + $0xe8] sm:$0xff]
          %v1207 = vld [vmem:[#allocation2 + $0xf0] sm:$0xff]
          %v1208 = vld [vmem:[#allocation2 + $0xf8] sm:$0xff]
          %v1209 = vld [vmem:[#allocation2 + $0x100] sm:$0xff]
          %v1210 = vld [vmem:[#allocation2 + $0x108] sm:$0xff]
          %v1211 = vld [vmem:[#allocation2 + $0x110] sm:$0xff]
          %v1212 = vld [vmem:[#allocation2 + $0x118] sm:$0xff]
          %v1213 = vld [vmem:[#allocation2 + $0x120] sm:$0xff]
          %v1214 = vld [vmem:[#allocation2 + $0x128] sm:$0xff]
          %v1215 = vld [vmem:[#allocation2 + $0x130] sm:$0xff]
          %v1216 = vld [vmem:[#allocation2 + $0x138] sm:$0xff]
          %v1217 = vld [vmem:[#allocation2 + $0x140] sm:$0xff]
          %v1218 = vld [vmem:[#allocation2 + $0x148] sm:$0xff]
          %v1219 = vld [vmem:[#allocation2 + $0x150] sm:$0xff]
          %v1220 = vld [vmem:[#allocation2 + $0x158] sm:$0xff]
          %v1221 = vld [vmem:[#allocation2 + $0x160] sm:$0xff]
          %v1222 = vld [vmem:[#allocation2 + $0x168] sm:$0xff]
          %v1223 = vld [vmem:[#allocation2 + $0x170] sm:$0xff]
          %v1224 = vld [vmem:[#allocation2 + $0x178] sm:$0xff]
          %v1225 = vld [vmem:[#allocation2 + $0x180] sm:$0xff]
          %v1226 = vld [vmem:[#allocation2 + $0x188] sm:$0xff]
          %v1227 = vld [vmem:[#allocation2 + $0x190] sm:$0xff]
          %v1228 = vld [vmem:[#allocation2 + $0x198] sm:$0xff]
          %v1229 = vld [vmem:[#allocation2 + $0x1a0] sm:$0xff]
          %v1230 = vld [vmem:[#allocation2 + $0x1a8] sm:$0xff]
          %v1231 = vld [vmem:[#allocation2 + $0x1b0] sm:$0xff]
          %v1232 = vld [vmem:[#allocation2 + $0x1b8] sm:$0xff]
          %v1233 = vld [vmem:[#allocation2 + $0x1c0] sm:$0xff]
          %v1234 = vld [vmem:[#allocation2 + $0x1c8] sm:$0xff]
          %v1235 = vld [vmem:[#allocation2 + $0x1d0] sm:$0xff]
          %v1236 = vld [vmem:[#allocation2 + $0x1d8] sm:$0xff]
          %v1237 = vld [vmem:[#allocation2 + $0x1e0] sm:$0xff]
          %v1238 = vld [vmem:[#allocation2 + $0x1e8] sm:$0xff]
          %v1239 = vld [vmem:[#allocation2 + $0x1f0] sm:$0xff]
          %v1240 = vld [vmem:[#allocation2 + $0x1f8] sm:$0xff]
          %v1241 = vadd.f32 %v1177, %v1179
          %v1242 = vadd.f32 %v1241, %v1181
          %v1243 = vadd.f32 %v1242, %v1183
          %v1244 = vadd.f32 %v1243, %v1185
          %v1245 = vadd.f32 %v1244, %v1187
          %v1246 = vadd.f32 %v1245, %v1189
          %v1247 = vadd.f32 %v1246, %v1191
          %v1248 = vadd.f32 %v1247, %v1193
          %v1249 = vadd.f32 %v1248, %v1195
          %v1250 = vadd.f32 %v1249, %v1197
          %v1251 = vadd.f32 %v1250, %v1199
          %v1252 = vadd.f32 %v1251, %v1201
          %v1253 = vadd.f32 %v1252, %v1203
          %v1254 = vadd.f32 %v1253, %v1205
          %v1255 = vadd.f32 %v1254, %v1207
          %v1256 = vadd.f32 %v1255, %v1209
          %v1257 = vadd.f32 %v1256, %v1211
          %v1258 = vadd.f32 %v1257, %v1213
          %v1259 = vadd.f32 %v1258, %v1215
          %v1260 = vadd.f32 %v1259, %v1217
          %v1261 = vadd.f32 %v1260, %v1219
          %v1262 = vadd.f32 %v1261, %v1221
          %v1263 = vadd.f32 %v1262, %v1223
          %v1264 = vadd.f32 %v1263, %v1225
          %v1265 = vadd.f32 %v1264, %v1227
          %v1266 = vadd.f32 %v1265, %v1229
          %v1267 = vadd.f32 %v1266, %v1231
          %v1268 = vadd.f32 %v1267, %v1233
          %v1269 = vadd.f32 %v1268, %v1235
          %v1270 = vadd.f32 %v1269, %v1237
          %v1271 = vadd.f32 %v1270, %v1239
          %v1272 = vrot.slane %v1271, 4
          %v1273 = vadd.f32 %v1271, %v1272
          %v1274 = vrot.slane %v1273, 2
          %v1275 = vadd.f32 %v1273, %v1274
          %v1276 = vrot.slane %v1275, 1
          %v1277 = vadd.f32 %v1275, %v1276
          %v1278 = vadd.f32 %v1178, %v1180
          %v1279 = vadd.f32 %v1278, %v1182
          %v1280 = vadd.f32 %v1279, %v1184
          %v1281 = vadd.f32 %v1280, %v1186
          %v1282 = vadd.f32 %v1281, %v1188
          %v1283 = vadd.f32 %v1282, %v1190
          %v1284 = vadd.f32 %v1283, %v1192
          %v1285 = vadd.f32 %v1284, %v1194
          %v1286 = vadd.f32 %v1285, %v1196
          %v1287 = vadd.f32 %v1286, %v1198
          %v1288 = vadd.f32 %v1287, %v1200
          %v1289 = vadd.f32 %v1288, %v1202
          %v1290 = vadd.f32 %v1289, %v1204
          %v1291 = vadd.f32 %v1290, %v1206
          %v1292 = vadd.f32 %v1291, %v1208
          %v1293 = vadd.f32 %v1292, %v1210
          %v1294 = vadd.f32 %v1293, %v1212
          %v1295 = vadd.f32 %v1294, %v1214
          %v1296 = vadd.f32 %v1295, %v1216
          %v1297 = vadd.f32 %v1296, %v1218
          %v1298 = vadd.f32 %v1297, %v1220
          %v1299 = vadd.f32 %v1298, %v1222
          %v1300 = vadd.f32 %v1299, %v1224
          %v1301 = vadd.f32 %v1300, %v1226
          %v1302 = vadd.f32 %v1301, %v1228
          %v1303 = vadd.f32 %v1302, %v1230
          %v1304 = vadd.f32 %v1303, %v1232
          %v1305 = vadd.f32 %v1304, %v1234
          %v1306 = vadd.f32 %v1305, %v1236
          %v1307 = vadd.f32 %v1306, %v1238
          %v1308 = vadd.f32 %v1307, %v1240
          %v1309 = vrot.slane %v1308, 4
          %v1310 = vadd.f32 %v1308, %v1309
          %v1311 = vrot.slane %v1310, 2
          %v1312 = vadd.f32 %v1310, %v1311
          %v1313 = vrot.slane %v1312, 1
          %v1314 = vadd.f32 %v1312, %v1313
          %v1317 = vcombine.low %v1277, %v1314
          %v1319 = vunpack.c.l.s4 1966171168
          %v1320 = vunpack.c.0.s8 %v1319
          %v1321 = vlaneseq
          %v1322 = vshrl.u32 %v1321, 7
          %v1323 = vsub.s32 %v1320, %v1322
          %v1324 = vrot.slane %v1317, %v1323
          %v1326 = vunpack.c.l.s4 1966171168
          %v1327 = vunpack.c.0.s8 %v1326
          %v1328 = vlaneseq
          %v1329 = vshrl.u32 %v1328, 7
          %v1330 = vsub.s32 %v1327, %v1329
          %v1331 = vrot.slane %v1324, %v1330
          %v1333 = vlaneseq
          %vm1334 = vcmp.ge.s32.totalorder %v1333, 0
          %vm1335 = vcmp.lt.s32.totalorder %v1333, 256
          %vm1336 = vmand %vm1334, %vm1335
          %1337 = vst.msk [vmem:[%s479] sm:$0x3] %vm1336, %v1331
          %v1338 = vmul.f32 %v1177, %v1177
          %v1339 = vmul.f32 %v1178, %v1178
          %v1340 = vmul.f32 %v1179, %v1179
          %v1341 = vmul.f32 %v1180, %v1180
          %v1342 = vmul.f32 %v1181, %v1181
          %v1343 = vmul.f32 %v1182, %v1182
          %v1344 = vmul.f32 %v1183, %v1183
          %v1345 = vmul.f32 %v1184, %v1184
          %v1346 = vmul.f32 %v1185, %v1185
          %v1347 = vmul.f32 %v1186, %v1186
          %v1348 = vmul.f32 %v1187, %v1187
          %v1349 = vmul.f32 %v1188, %v1188
          %v1350 = vmul.f32 %v1189, %v1189
          %v1351 = vmul.f32 %v1190, %v1190
          %v1352 = vmul.f32 %v1191, %v1191
          %v1353 = vmul.f32 %v1192, %v1192
          %v1354 = vmul.f32 %v1193, %v1193
          %v1355 = vmul.f32 %v1194, %v1194
          %v1356 = vmul.f32 %v1195, %v1195
          %v1357 = vmul.f32 %v1196, %v1196
          %v1358 = vmul.f32 %v1197, %v1197
          %v1359 = vmul.f32 %v1198, %v1198
          %v1360 = vmul.f32 %v1199, %v1199
          %v1361 = vmul.f32 %v1200, %v1200
          %v1362 = vmul.f32 %v1201, %v1201
          %v1363 = vmul.f32 %v1202, %v1202
          %v1364 = vmul.f32 %v1203, %v1203
          %v1365 = vmul.f32 %v1204, %v1204
          %v1366 = vmul.f32 %v1205, %v1205
          %v1367 = vmul.f32 %v1206, %v1206
          %v1368 = vmul.f32 %v1207, %v1207
          %v1369 = vmul.f32 %v1208, %v1208
          %v1370 = vmul.f32 %v1209, %v1209
          %v1371 = vmul.f32 %v1210, %v1210
          %v1372 = vmul.f32 %v1211, %v1211
          %v1373 = vmul.f32 %v1212, %v1212
          %v1374 = vmul.f32 %v1213, %v1213
          %v1375 = vmul.f32 %v1214, %v1214
          %v1376 = vmul.f32 %v1215, %v1215
          %v1377 = vmul.f32 %v1216, %v1216
          %v1378 = vmul.f32 %v1217, %v1217
          %v1379 = vmul.f32 %v1218, %v1218
          %v1380 = vmul.f32 %v1219, %v1219
          %v1381 = vmul.f32 %v1220, %v1220
          %v1382 = vmul.f32 %v1221, %v1221
          %v1383 = vmul.f32 %v1222, %v1222
          %v1384 = vmul.f32 %v1223, %v1223
          %v1385 = vmul.f32 %v1224, %v1224
          %v1386 = vmul.f32 %v1225, %v1225
          %v1387 = vmul.f32 %v1226, %v1226
          %v1388 = vmul.f32 %v1227, %v1227
          %v1389 = vmul.f32 %v1228, %v1228
          %v1390 = vmul.f32 %v1229, %v1229
          %v1391 = vmul.f32 %v1230, %v1230
          %v1392 = vmul.f32 %v1231, %v1231
          %v1393 = vmul.f32 %v1232, %v1232
          %v1394 = vmul.f32 %v1233, %v1233
          %v1395 = vmul.f32 %v1234, %v1234
          %v1396 = vmul.f32 %v1235, %v1235
          %v1397 = vmul.f32 %v1236, %v1236
          %v1398 = vmul.f32 %v1237, %v1237
          %v1399 = vmul.f32 %v1238, %v1238
          %v1400 = vmul.f32 %v1239, %v1239
          %v1401 = vmul.f32 %v1240, %v1240
          %v1402 = vadd.f32 %v1338, %v1340
          %v1403 = vadd.f32 %v1402, %v1342
          %v1404 = vadd.f32 %v1403, %v1344
          %v1405 = vadd.f32 %v1404, %v1346
          %v1406 = vadd.f32 %v1405, %v1348
          %v1407 = vadd.f32 %v1406, %v1350
          %v1408 = vadd.f32 %v1407, %v1352
          %v1409 = vadd.f32 %v1408, %v1354
          %v1410 = vadd.f32 %v1409, %v1356
          %v1411 = vadd.f32 %v1410, %v1358
          %v1412 = vadd.f32 %v1411, %v1360
          %v1413 = vadd.f32 %v1412, %v1362
          %v1414 = vadd.f32 %v1413, %v1364
          %v1415 = vadd.f32 %v1414, %v1366
          %v1416 = vadd.f32 %v1415, %v1368
          %v1417 = vadd.f32 %v1416, %v1370
          %v1418 = vadd.f32 %v1417, %v1372
          %v1419 = vadd.f32 %v1418, %v1374
          %v1420 = vadd.f32 %v1419, %v1376
          %v1421 = vadd.f32 %v1420, %v1378
          %v1422 = vadd.f32 %v1421, %v1380
          %v1423 = vadd.f32 %v1422, %v1382
          %v1424 = vadd.f32 %v1423, %v1384
          %v1425 = vadd.f32 %v1424, %v1386
          %v1426 = vadd.f32 %v1425, %v1388
          %v1427 = vadd.f32 %v1426, %v1390
          %v1428 = vadd.f32 %v1427, %v1392
          %v1429 = vadd.f32 %v1428, %v1394
          %v1430 = vadd.f32 %v1429, %v1396
          %v1431 = vadd.f32 %v1430, %v1398
          %v1432 = vadd.f32 %v1431, %v1400
          %v1433 = vrot.slane %v1432, 4
          %v1434 = vadd.f32 %v1432, %v1433
          %v1435 = vrot.slane %v1434, 2
          %v1436 = vadd.f32 %v1434, %v1435
          %v1437 = vrot.slane %v1436, 1
          %v1438 = vadd.f32 %v1436, %v1437
          %v1439 = vadd.f32 %v1339, %v1341
          %v1440 = vadd.f32 %v1439, %v1343
          %v1441 = vadd.f32 %v1440, %v1345
          %v1442 = vadd.f32 %v1441, %v1347
          %v1443 = vadd.f32 %v1442, %v1349
          %v1444 = vadd.f32 %v1443, %v1351
          %v1445 = vadd.f32 %v1444, %v1353
          %v1446 = vadd.f32 %v1445, %v1355
          %v1447 = vadd.f32 %v1446, %v1357
          %v1448 = vadd.f32 %v1447, %v1359
          %v1449 = vadd.f32 %v1448, %v1361
          %v1450 = vadd.f32 %v1449, %v1363
          %v1451 = vadd.f32 %v1450, %v1365
          %v1452 = vadd.f32 %v1451, %v1367
          %v1453 = vadd.f32 %v1452, %v1369
          %v1454 = vadd.f32 %v1453, %v1371
          %v1455 = vadd.f32 %v1454, %v1373
          %v1456 = vadd.f32 %v1455, %v1375
          %v1457 = vadd.f32 %v1456, %v1377
          %v1458 = vadd.f32 %v1457, %v1379
          %v1459 = vadd.f32 %v1458, %v1381
          %v1460 = vadd.f32 %v1459, %v1383
          %v1461 = vadd.f32 %v1460, %v1385
          %v1462 = vadd.f32 %v1461, %v1387
          %v1463 = vadd.f32 %v1462, %v1389
          %v1464 = vadd.f32 %v1463, %v1391
          %v1465 = vadd.f32 %v1464, %v1393
          %v1466 = vadd.f32 %v1465, %v1395
          %v1467 = vadd.f32 %v1466, %v1397
          %v1468 = vadd.f32 %v1467, %v1399
          %v1469 = vadd.f32 %v1468, %v1401
          %v1470 = vrot.slane %v1469, 4
          %v1471 = vadd.f32 %v1469, %v1470
          %v1472 = vrot.slane %v1471, 2
          %v1473 = vadd.f32 %v1471, %v1472
          %v1474 = vrot.slane %v1473, 1
          %v1475 = vadd.f32 %v1473, %v1474
          %v1478 = vcombine.low %v1438, %v1475
          %v1480 = vunpack.c.l.s4 1966171168
          %v1481 = vunpack.c.0.s8 %v1480
          %v1482 = vlaneseq
          %v1483 = vshrl.u32 %v1482, 7
          %v1484 = vsub.s32 %v1481, %v1483
          %v1485 = vrot.slane %v1478, %v1484
          %v1487 = vunpack.c.l.s4 1966171168
          %v1488 = vunpack.c.0.s8 %v1487
          %v1489 = vlaneseq
          %v1490 = vshrl.u32 %v1489, 7
          %v1491 = vsub.s32 %v1488, %v1490
          %v1492 = vrot.slane %v1485, %v1491
          %1494 = vst.msk [vmem:[%s490] sm:$0x3] %vm1336, %v1492
          %v1495 = vpack.c.bf16 %v1179, %v1177
          %v1496 = vpack.c.bf16 %v1180, %v1178
          %v1497 = vpack.c.bf16 %v1183, %v1181
          %v1498 = vpack.c.bf16 %v1184, %v1182
          %v1499 = vpack.c.bf16 %v1187, %v1185
          %v1500 = vpack.c.bf16 %v1188, %v1186
          %v1501 = vpack.c.bf16 %v1191, %v1189
          %v1502 = vpack.c.bf16 %v1192, %v1190
          %v1503 = vpack.c.bf16 %v1195, %v1193
          %v1504 = vpack.c.bf16 %v1196, %v1194
          %v1505 = vpack.c.bf16 %v1199, %v1197
          %v1506 = vpack.c.bf16 %v1200, %v1198
          %v1507 = vpack.c.bf16 %v1203, %v1201
          %v1508 = vpack.c.bf16 %v1204, %v1202
          %v1509 = vpack.c.bf16 %v1207, %v1205
          %v1510 = vpack.c.bf16 %v1208, %v1206
          %v1511 = vpack.c.bf16 %v1211, %v1209
          %v1512 = vpack.c.bf16 %v1212, %v1210
          %v1513 = vpack.c.bf16 %v1215, %v1213
          %v1514 = vpack.c.bf16 %v1216, %v1214
          %v1515 = vpack.c.bf16 %v1219, %v1217
          %v1516 = vpack.c.bf16 %v1220, %v1218
          %v1517 = vpack.c.bf16 %v1223, %v1221
          %v1518 = vpack.c.bf16 %v1224, %v1222
          %v1519 = vpack.c.bf16 %v1227, %v1225
          %v1520 = vpack.c.bf16 %v1228, %v1226
          %v1521 = vpack.c.bf16 %v1231, %v1229
          %v1522 = vpack.c.bf16 %v1232, %v1230
          %v1523 = vpack.c.bf16 %v1235, %v1233
          %v1524 = vpack.c.bf16 %v1236, %v1234
          %v1525 = vpack.c.bf16 %v1239, %v1237
          %v1526 = vpack.c.bf16 %v1240, %v1238
          %v1559 = vunpack.c.l.b16 %v1495
          %v1560 = vunpack.c.l.b16 %v1496
          %v1561 = vunpack.c.h.b16 %v1495
          %v1562 = vunpack.c.h.b16 %v1496
          %v1563 = vunpack.c.l.b16 %v1497
          %v1564 = vunpack.c.l.b16 %v1498
          %v1565 = vunpack.c.h.b16 %v1497
          %v1566 = vunpack.c.h.b16 %v1498
          %v1567 = vunpack.c.l.b16 %v1499
          %v1568 = vunpack.c.l.b16 %v1500
          %v1569 = vunpack.c.h.b16 %v1499
          %v1570 = vunpack.c.h.b16 %v1500
          %v1571 = vunpack.c.l.b16 %v1501
          %v1572 = vunpack.c.l.b16 %v1502
          %v1573 = vunpack.c.h.b16 %v1501
          %v1574 = vunpack.c.h.b16 %v1502
          %v1575 = vunpack.c.l.b16 %v1503
          %v1576 = vunpack.c.l.b16 %v1504
          %v1577 = vunpack.c.h.b16 %v1503
          %v1578 = vunpack.c.h.b16 %v1504
          %v1579 = vunpack.c.l.b16 %v1505
          %v1580 = vunpack.c.l.b16 %v1506
          %v1581 = vunpack.c.h.b16 %v1505
          %v1582 = vunpack.c.h.b16 %v1506
          %v1583 = vunpack.c.l.b16 %v1507
          %v1584 = vunpack.c.l.b16 %v1508
          %v1585 = vunpack.c.h.b16 %v1507
          %v1586 = vunpack.c.h.b16 %v1508
          %v1587 = vunpack.c.l.b16 %v1509
          %v1588 = vunpack.c.l.b16 %v1510
          %v1589 = vunpack.c.h.b16 %v1509
          %v1590 = vunpack.c.h.b16 %v1510
          %v1591 = vunpack.c.l.b16 %v1511
          %v1592 = vunpack.c.l.b16 %v1512
          %v1593 = vunpack.c.h.b16 %v1511
          %v1594 = vunpack.c.h.b16 %v1512
          %v1595 = vunpack.c.l.b16 %v1513
          %v1596 = vunpack.c.l.b16 %v1514
          %v1597 = vunpack.c.h.b16 %v1513
          %v1598 = vunpack.c.h.b16 %v1514
          %v1599 = vunpack.c.l.b16 %v1515
          %v1600 = vunpack.c.l.b16 %v1516
          %v1601 = vunpack.c.h.b16 %v1515
          %v1602 = vunpack.c.h.b16 %v1516
          %v1603 = vunpack.c.l.b16 %v1517
          %v1604 = vunpack.c.l.b16 %v1518
          %v1605 = vunpack.c.h.b16 %v1517
          %v1606 = vunpack.c.h.b16 %v1518
          %v1607 = vunpack.c.l.b16 %v1519
          %v1608 = vunpack.c.l.b16 %v1520
          %v1609 = vunpack.c.h.b16 %v1519
          %v1610 = vunpack.c.h.b16 %v1520
          %v1611 = vunpack.c.l.b16 %v1521
          %v1612 = vunpack.c.l.b16 %v1522
          %v1613 = vunpack.c.h.b16 %v1521
          %v1614 = vunpack.c.h.b16 %v1522
          %v1615 = vunpack.c.l.b16 %v1523
          %v1616 = vunpack.c.l.b16 %v1524
          %v1617 = vunpack.c.h.b16 %v1523
          %v1618 = vunpack.c.h.b16 %v1524
          %v1619 = vunpack.c.l.b16 %v1525
          %v1620 = vunpack.c.l.b16 %v1526
          %v1621 = vunpack.c.h.b16 %v1525
          %v1622 = vunpack.c.h.b16 %v1526
          %v1623 = vpack.c.b16 %v1560, %v1559
          %v1624 = vpack.c.b16 %v1562, %v1561
          %v1625 = vpack.c.b16 %v1564, %v1563
          %v1626 = vpack.c.b16 %v1566, %v1565
          %v1627 = vpack.c.b16 %v1568, %v1567
          %v1628 = vpack.c.b16 %v1570, %v1569
          %v1629 = vpack.c.b16 %v1572, %v1571
          %v1630 = vpack.c.b16 %v1574, %v1573
          %v1631 = vpack.c.b16 %v1576, %v1575
          %v1632 = vpack.c.b16 %v1578, %v1577
          %v1633 = vpack.c.b16 %v1580, %v1579
          %v1634 = vpack.c.b16 %v1582, %v1581
          %v1635 = vpack.c.b16 %v1584, %v1583
          %v1636 = vpack.c.b16 %v1586, %v1585
          %v1637 = vpack.c.b16 %v1588, %v1587
          %v1638 = vpack.c.b16 %v1590, %v1589
          %v1639 = vpack.c.b16 %v1592, %v1591
          %v1640 = vpack.c.b16 %v1594, %v1593
          %v1641 = vpack.c.b16 %v1596, %v1595
          %v1642 = vpack.c.b16 %v1598, %v1597
          %v1643 = vpack.c.b16 %v1600, %v1599
          %v1644 = vpack.c.b16 %v1602, %v1601
          %v1645 = vpack.c.b16 %v1604, %v1603
          %v1646 = vpack.c.b16 %v1606, %v1605
          %v1647 = vpack.c.b16 %v1608, %v1607
          %v1648 = vpack.c.b16 %v1610, %v1609
          %v1649 = vpack.c.b16 %v1612, %v1611
          %v1650 = vpack.c.b16 %v1614, %v1613
          %v1651 = vpack.c.b16 %v1616, %v1615
          %v1652 = vpack.c.b16 %v1618, %v1617
          %v1653 = vpack.c.b16 %v1620, %v1619
          %v1654 = vpack.c.b16 %v1622, %v1621
          %1687 = vst [vmem:[%s434] sm:$0xff] %v1623
          %1688 = vst [vmem:[%s434 + $0x8] sm:$0xff] %v1624
          %1689 = vst [vmem:[%s434 + $0x10] sm:$0xff] %v1625
          %1690 = vst [vmem:[%s434 + $0x18] sm:$0xff] %v1626
          %1691 = vst [vmem:[%s434 + $0x20] sm:$0xff] %v1627
          %1692 = vst [vmem:[%s434 + $0x28] sm:$0xff] %v1628
          %1693 = vst [vmem:[%s434 + $0x30] sm:$0xff] %v1629
          %1694 = vst [vmem:[%s434 + $0x38] sm:$0xff] %v1630
          %1695 = vst [vmem:[%s434 + $0x40] sm:$0xff] %v1631
          %1696 = vst [vmem:[%s434 + $0x48] sm:$0xff] %v1632
          %1697 = vst [vmem:[%s434 + $0x50] sm:$0xff] %v1633
          %1698 = vst [vmem:[%s434 + $0x58] sm:$0xff] %v1634
          %1699 = vst [vmem:[%s434 + $0x60] sm:$0xff] %v1635
          %1700 = vst [vmem:[%s434 + $0x68] sm:$0xff] %v1636
          %1701 = vst [vmem:[%s434 + $0x70] sm:$0xff] %v1637
          %1702 = vst [vmem:[%s434 + $0x78] sm:$0xff] %v1638
          %1703 = vst [vmem:[%s434 + $0x80] sm:$0xff] %v1639
          %1704 = vst [vmem:[%s434 + $0x88] sm:$0xff] %v1640
          %1705 = vst [vmem:[%s434 + $0x90] sm:$0xff] %v1641
          %1706 = vst [vmem:[%s434 + $0x98] sm:$0xff] %v1642
          %1707 = vst [vmem:[%s434 + $0xa0] sm:$0xff] %v1643
          %1708 = vst [vmem:[%s434 + $0xa8] sm:$0xff] %v1644
          %1709 = vst [vmem:[%s434 + $0xb0] sm:$0xff] %v1645
          %1710 = vst [vmem:[%s434 + $0xb8] sm:$0xff] %v1646
          %1711 = vst [vmem:[%s434 + $0xc0] sm:$0xff] %v1647
          %1712 = vst [vmem:[%s434 + $0xc8] sm:$0xff] %v1648
          %1713 = vst [vmem:[%s434 + $0xd0] sm:$0xff] %v1649
          %1714 = vst [vmem:[%s434 + $0xd8] sm:$0xff] %v1650
          %1715 = vst [vmem:[%s434 + $0xe0] sm:$0xff] %v1651
          %1716 = vst [vmem:[%s434 + $0xe8] sm:$0xff] %v1652
          %1717 = vst [vmem:[%s434 + $0xf0] sm:$0xff] %v1653
          %1718 = vst [vmem:[%s434 + $0xf8] sm:$0xff] %v1654
        $region77: #{aspp_forward.3} parent=64 // pred_fallthru
          _
        %s1719 = sand.u32 %s120, 1
        %s1720 = sand.u32 %s120, 1
        %s1721 = smul.addr %s1720, 256
        %s1722 = scalar_lea.vmem [#allocation9], %s1721
        %s1723 = sld [smem:[#allocation4 + %s43]]
        %s1724 = smul.u32 2, %s1723
        %p1725 = scmp.lt.s32.totalorder %s42, 1
        %s1726 = scalar_select %p1725, %s42, 1
        %p1727 = scmp.lt.s32.totalorder %s1724, 7
        %s1728 = scalar_select %p1727, %s1724, 7
        %s1729 = smul.addr %s1726, 8
        %s1730 = sadd.s32 %s1728, %s1729
        %s1731 = scalar_lea.vmem %s7, %s1730
        %s1732 = sld [smem:[#allocation4 + %s43]]
        %s1733 = smul.u32 2, %s1732
        %p1734 = scmp.lt.s32.totalorder %s42, 1
        %s1735 = scalar_select %p1734, %s42, 1
        %p1736 = scmp.lt.s32.totalorder %s1733, 7
        %s1737 = scalar_select %p1736, %s1733, 7
        %s1738 = smul.addr %s1735, 8
        %s1739 = sadd.s32 %s1737, %s1738
        %s1740 = scalar_lea.vmem %s8, %s1739
        // Predicated region
        $region78: #{aspp_forward.3} parent=64 // pred_check
          %p1741 = pneg %p130
        $region79: #{aspp_forward.3} parent=64 // pred_check_branch
          %1743 = sbr.rel (%p1741) target = $region81
        $region80: #{aspp_forward.3} parent=64 // pred_region
          %s1744 = sld [smem:[#allocation4 + %s43]]
          %s1745 = smul.u32 32, %s42
          %s1746 = smul.u32 2, %s1744
          %s1747 = smul.addr %s1745, 8
          %s1748 = sadd.s32 %s1746, %s1747
          %s1749 = smul.addr %s1748, 4
          %s1750 = scalar_lea.vmem %s6, %s1749
          // Predicated region
          $region82: #{aspp_forward.3} parent=80 // pred_check
            _
          $region83: #{aspp_forward.3} parent=80 // pred_check_branch
            %1752 = sbr.rel (0) target = $region85
          $region84: #{aspp_forward.3} parent=80 // pred_region
            // Predicated region
            $region86: #{aspp_forward.3} parent=84 // pred_check
              _
            $region87: #{aspp_forward.3} parent=84 // pred_check_branch
              %1754 = sbr.rel (0) target = $region89
            $region88: #{aspp_forward.3} parent=84 // pred_region
              // Predicated region
              $region101: #{aspp_forward.3} parent=88 // pred_check
                _
              $region102: #{aspp_forward.3} parent=88 // pred_check_branch
                %1831 = sbr.rel (0) target = $region104
              $region103: #{aspp_forward.3} parent=88 // pred_region
                loop: start=0, step=1, limit=1
                $region105: #{aspp_forward.3} parent=103 // loop_pre_header
                  _
                $region106: #{aspp_forward.3} parent=103 // loop_header
                  %s1833 = sphi 0, %s1837
                  %p1834 = scmp.ge.s32.totalorder %s1833, 1
                  %s1838 = sphi %s1722, %s1722
                  %s1839 = sphi %s1750, %s1750
                $region107: #{aspp_forward.3} parent=103 // loop_header_branch
                  %1836 = sbr.rel (%p1834) target = $region111
                $region108: #{aspp_forward.3} parent=103 // loop_body
                  %v1840 = vld [vmem:[%s1838] sm:$0xff]
                  %1841 = vst [vmem:[%s1839] sm:$0xff] %v1840
                  %v1842 = vld [vmem:[%s1838 + $0x8] sm:$0xff]
                  %1843 = vst [vmem:[%s1839 + $0x20] sm:$0xff] %v1842
                  %v1844 = vld [vmem:[%s1838 + $0x10] sm:$0xff]
                  %1845 = vst [vmem:[%s1839 + $0x40] sm:$0xff] %v1844
                  %v1846 = vld [vmem:[%s1838 + $0x18] sm:$0xff]
                  %1847 = vst [vmem:[%s1839 + $0x60] sm:$0xff] %v1846
                  %v1848 = vld [vmem:[%s1838 + $0x20] sm:$0xff]
                  %1849 = vst [vmem:[%s1839 + $0x80] sm:$0xff] %v1848
                  %v1850 = vld [vmem:[%s1838 + $0x28] sm:$0xff]
                  %1851 = vst [vmem:[%s1839 + $0xa0] sm:$0xff] %v1850
                  %v1852 = vld [vmem:[%s1838 + $0x30] sm:$0xff]
                  %1853 = vst [vmem:[%s1839 + $0xc0] sm:$0xff] %v1852
                  %v1854 = vld [vmem:[%s1838 + $0x38] sm:$0xff]
                  %1855 = vst [vmem:[%s1839 + $0xe0] sm:$0xff] %v1854
                  %v1856 = vld [vmem:[%s1838 + $0x40] sm:$0xff]
                  %1857 = vst [vmem:[%s1839 + $0x100] sm:$0xff] %v1856
                  %v1858 = vld [vmem:[%s1838 + $0x48] sm:$0xff]
                  %1859 = vst [vmem:[%s1839 + $0x120] sm:$0xff] %v1858
                  %v1860 = vld [vmem:[%s1838 + $0x50] sm:$0xff]
                  %1861 = vst [vmem:[%s1839 + $0x140] sm:$0xff] %v1860
                  %v1862 = vld [vmem:[%s1838 + $0x58] sm:$0xff]
                  %1863 = vst [vmem:[%s1839 + $0x160] sm:$0xff] %v1862
                  %v1864 = vld [vmem:[%s1838 + $0x60] sm:$0xff]
                  %1865 = vst [vmem:[%s1839 + $0x180] sm:$0xff] %v1864
                  %v1866 = vld [vmem:[%s1838 + $0x68] sm:$0xff]
                  %1867 = vst [vmem:[%s1839 + $0x1a0] sm:$0xff] %v1866
                  %v1868 = vld [vmem:[%s1838 + $0x70] sm:$0xff]
                  %1869 = vst [vmem:[%s1839 + $0x1c0] sm:$0xff] %v1868
                  %v1870 = vld [vmem:[%s1838 + $0x78] sm:$0xff]
                  %1871 = vst [vmem:[%s1839 + $0x1e0] sm:$0xff] %v1870
                  %v1872 = vld [vmem:[%s1838 + $0x80] sm:$0xff]
                  %1873 = vst [vmem:[%s1839 + $0x200] sm:$0xff] %v1872
                  %v1874 = vld [vmem:[%s1838 + $0x88] sm:$0xff]
                  %1875 = vst [vmem:[%s1839 + $0x220] sm:$0xff] %v1874
                  %v1876 = vld [vmem:[%s1838 + $0x90] sm:$0xff]
                  %1877 = vst [vmem:[%s1839 + $0x240] sm:$0xff] %v1876
                  %v1878 = vld [vmem:[%s1838 + $0x98] sm:$0xff]
                  %1879 = vst [vmem:[%s1839 + $0x260] sm:$0xff] %v1878
                  %v1880 = vld [vmem:[%s1838 + $0xa0] sm:$0xff]
                  %1881 = vst [vmem:[%s1839 + $0x280] sm:$0xff] %v1880
                  %v1882 = vld [vmem:[%s1838 + $0xa8] sm:$0xff]
                  %1883 = vst [vmem:[%s1839 + $0x2a0] sm:$0xff] %v1882
                  %v1884 = vld [vmem:[%s1838 + $0xb0] sm:$0xff]
                  %1885 = vst [vmem:[%s1839 + $0x2c0] sm:$0xff] %v1884
                  %v1886 = vld [vmem:[%s1838 + $0xb8] sm:$0xff]
                  %1887 = vst [vmem:[%s1839 + $0x2e0] sm:$0xff] %v1886
                  %v1888 = vld [vmem:[%s1838 + $0xc0] sm:$0xff]
                  %1889 = vst [vmem:[%s1839 + $0x300] sm:$0xff] %v1888
                  %v1890 = vld [vmem:[%s1838 + $0xc8] sm:$0xff]
                  %1891 = vst [vmem:[%s1839 + $0x320] sm:$0xff] %v1890
                  %v1892 = vld [vmem:[%s1838 + $0xd0] sm:$0xff]
                  %1893 = vst [vmem:[%s1839 + $0x340] sm:$0xff] %v1892
                  %v1894 = vld [vmem:[%s1838 + $0xd8] sm:$0xff]
                  %1895 = vst [vmem:[%s1839 + $0x360] sm:$0xff] %v1894
                  %v1896 = vld [vmem:[%s1838 + $0xe0] sm:$0xff]
                  %1897 = vst [vmem:[%s1839 + $0x380] sm:$0xff] %v1896
                  %v1898 = vld [vmem:[%s1838 + $0xe8] sm:$0xff]
                  %1899 = vst [vmem:[%s1839 + $0x3a0] sm:$0xff] %v1898
                  %v1900 = vld [vmem:[%s1838 + $0xf0] sm:$0xff]
                  %1901 = vst [vmem:[%s1839 + $0x3c0] sm:$0xff] %v1900
                  %v1902 = vld [vmem:[%s1838 + $0xf8] sm:$0xff]
                  %1903 = vst [vmem:[%s1839 + $0x3e0] sm:$0xff] %v1902
                $region109: #{aspp_forward.3} parent=103 // loop_footer
                  %s1837 = sadd.s32 1, %s1833
                $region110: #{aspp_forward.3} parent=103 // loop_footer_branch
                  %1832 = sbr.rel target = $region106
                $region111: #{aspp_forward.3} parent=103 // loop_exit
                  _
              $region104: #{aspp_forward.3} parent=88 // pred_fallthru
                _
              // Predicated region
              $region112: #{aspp_forward.3} parent=88 // pred_check
                _
              $region113: #{aspp_forward.3} parent=88 // pred_check_branch
                %1905 = sbr.rel target = $region115
              $region114: #{aspp_forward.3} parent=88 // pred_region
                _
              $region115: #{aspp_forward.3} parent=88 // pred_fallthru
                _
            $region89: #{aspp_forward.3} parent=84 // pred_fallthru
              _
            // Predicated region
            $region90: #{aspp_forward.3} parent=84 // pred_check
              _
            $region91: #{aspp_forward.3} parent=84 // pred_check_branch
              %1756 = sbr.rel target = $region93
            $region92: #{aspp_forward.3} parent=84 // pred_region
              loop: start=0, step=1, limit=1
              $region94: #{aspp_forward.3} parent=92 // loop_pre_header
                _
              $region95: #{aspp_forward.3} parent=92 // loop_header
                %s1759 = sphi 0, %s1763
                %p1760 = scmp.ge.s32.totalorder %s1759, 1
                %s1764 = sphi %s1722, %s1722
                %s1765 = sphi %s1750, %s1750
              $region96: #{aspp_forward.3} parent=92 // loop_header_branch
                %1762 = sbr.rel (%p1760) target = $region100
              $region97: #{aspp_forward.3} parent=92 // loop_body
                %v1766 = vld [vmem:[%s1764] sm:$0xff]
                %1767 = vst [vmem:[%s1765] sm:$0xff] %v1766
                %v1768 = vld [vmem:[%s1764 + $0x8] sm:$0xff]
                %1769 = vst [vmem:[%s1765 + $0x20] sm:$0xff] %v1768
                %v1770 = vld [vmem:[%s1764 + $0x10] sm:$0xff]
                %1771 = vst [vmem:[%s1765 + $0x40] sm:$0xff] %v1770
                %v1772 = vld [vmem:[%s1764 + $0x18] sm:$0xff]
                %1773 = vst [vmem:[%s1765 + $0x60] sm:$0xff] %v1772
                %v1774 = vld [vmem:[%s1764 + $0x20] sm:$0xff]
                %1775 = vst [vmem:[%s1765 + $0x80] sm:$0xff] %v1774
                %v1776 = vld [vmem:[%s1764 + $0x28] sm:$0xff]
                %1777 = vst [vmem:[%s1765 + $0xa0] sm:$0xff] %v1776
                %v1778 = vld [vmem:[%s1764 + $0x30] sm:$0xff]
                %1779 = vst [vmem:[%s1765 + $0xc0] sm:$0xff] %v1778
                %v1780 = vld [vmem:[%s1764 + $0x38] sm:$0xff]
                %1781 = vst [vmem:[%s1765 + $0xe0] sm:$0xff] %v1780
                %v1782 = vld [vmem:[%s1764 + $0x40] sm:$0xff]
                %1783 = vst [vmem:[%s1765 + $0x100] sm:$0xff] %v1782
                %v1784 = vld [vmem:[%s1764 + $0x48] sm:$0xff]
                %1785 = vst [vmem:[%s1765 + $0x120] sm:$0xff] %v1784
                %v1786 = vld [vmem:[%s1764 + $0x50] sm:$0xff]
                %1787 = vst [vmem:[%s1765 + $0x140] sm:$0xff] %v1786
                %v1788 = vld [vmem:[%s1764 + $0x58] sm:$0xff]
                %1789 = vst [vmem:[%s1765 + $0x160] sm:$0xff] %v1788
                %v1790 = vld [vmem:[%s1764 + $0x60] sm:$0xff]
                %1791 = vst [vmem:[%s1765 + $0x180] sm:$0xff] %v1790
                %v1792 = vld [vmem:[%s1764 + $0x68] sm:$0xff]
                %1793 = vst [vmem:[%s1765 + $0x1a0] sm:$0xff] %v1792
                %v1794 = vld [vmem:[%s1764 + $0x70] sm:$0xff]
                %1795 = vst [vmem:[%s1765 + $0x1c0] sm:$0xff] %v1794
                %v1796 = vld [vmem:[%s1764 + $0x78] sm:$0xff]
                %1797 = vst [vmem:[%s1765 + $0x1e0] sm:$0xff] %v1796
                %v1798 = vld [vmem:[%s1764 + $0x80] sm:$0xff]
                %1799 = vst [vmem:[%s1765 + $0x200] sm:$0xff] %v1798
                %v1800 = vld [vmem:[%s1764 + $0x88] sm:$0xff]
                %1801 = vst [vmem:[%s1765 + $0x220] sm:$0xff] %v1800
                %v1802 = vld [vmem:[%s1764 + $0x90] sm:$0xff]
                %1803 = vst [vmem:[%s1765 + $0x240] sm:$0xff] %v1802
                %v1804 = vld [vmem:[%s1764 + $0x98] sm:$0xff]
                %1805 = vst [vmem:[%s1765 + $0x260] sm:$0xff] %v1804
                %v1806 = vld [vmem:[%s1764 + $0xa0] sm:$0xff]
                %1807 = vst [vmem:[%s1765 + $0x280] sm:$0xff] %v1806
                %v1808 = vld [vmem:[%s1764 + $0xa8] sm:$0xff]
                %1809 = vst [vmem:[%s1765 + $0x2a0] sm:$0xff] %v1808
                %v1810 = vld [vmem:[%s1764 + $0xb0] sm:$0xff]
                %1811 = vst [vmem:[%s1765 + $0x2c0] sm:$0xff] %v1810
                %v1812 = vld [vmem:[%s1764 + $0xb8] sm:$0xff]
                %1813 = vst [vmem:[%s1765 + $0x2e0] sm:$0xff] %v1812
                %v1814 = vld [vmem:[%s1764 + $0xc0] sm:$0xff]
                %1815 = vst [vmem:[%s1765 + $0x300] sm:$0xff] %v1814
                %v1816 = vld [vmem:[%s1764 + $0xc8] sm:$0xff]
                %1817 = vst [vmem:[%s1765 + $0x320] sm:$0xff] %v1816
                %v1818 = vld [vmem:[%s1764 + $0xd0] sm:$0xff]
                %1819 = vst [vmem:[%s1765 + $0x340] sm:$0xff] %v1818
                %v1820 = vld [vmem:[%s1764 + $0xd8] sm:$0xff]
                %1821 = vst [vmem:[%s1765 + $0x360] sm:$0xff] %v1820
                %v1822 = vld [vmem:[%s1764 + $0xe0] sm:$0xff]
                %1823 = vst [vmem:[%s1765 + $0x380] sm:$0xff] %v1822
                %v1824 = vld [vmem:[%s1764 + $0xe8] sm:$0xff]
                %1825 = vst [vmem:[%s1765 + $0x3a0] sm:$0xff] %v1824
                %v1826 = vld [vmem:[%s1764 + $0xf0] sm:$0xff]
                %1827 = vst [vmem:[%s1765 + $0x3c0] sm:$0xff] %v1826
                %v1828 = vld [vmem:[%s1764 + $0xf8] sm:$0xff]
                %1829 = vst [vmem:[%s1765 + $0x3e0] sm:$0xff] %v1828
              $region98: #{aspp_forward.3} parent=92 // loop_footer
                %s1763 = sadd.s32 1, %s1759
              $region99: #{aspp_forward.3} parent=92 // loop_footer_branch
                %1758 = sbr.rel target = $region95
              $region100: #{aspp_forward.3} parent=92 // loop_exit
                _
            $region93: #{aspp_forward.3} parent=84 // pred_fallthru
              _
          $region85: #{aspp_forward.3} parent=80 // pred_fallthru
            _
          %1906 = vnop
        $region81: #{aspp_forward.3} parent=64 // pred_fallthru
          _
        // Predicated region
        $region116: #{aspp_forward.3} parent=64 // pred_check
          %p1907 = pneg %p160
        $region117: #{aspp_forward.3} parent=64 // pred_check_branch
          %1909 = sbr.rel (%p1907) target = $region119
        $region118: #{aspp_forward.3} parent=64 // pred_region
          %s1910 = sld [smem:[#allocation4 + %s43]]
          %s1911 = smul.u32 2, %s1910
        $region119: #{aspp_forward.3} parent=64 // pred_fallthru
          _
        // Predicated region
        $region120: #{aspp_forward.3} parent=64 // pred_check
          %p1912 = pneg %p190
        $region121: #{aspp_forward.3} parent=64 // pred_check_branch
          %1914 = sbr.rel (%p1912) target = $region123
        $region122: #{aspp_forward.3} parent=64 // pred_region
          %s1915 = sld [smem:[#allocation4 + %s43]]
          %s1916 = smul.u32 2, %s1915
        $region123: #{aspp_forward.3} parent=64 // pred_fallthru
          _
      $region65: #{aspp_forward.3} parent=5 // pred_fallthru
        _
      %p1917 = scmp.le.s32.totalorder 2, %s33
      // Predicated region
      $region124: #{aspp_forward.3} parent=5 // pred_check
        %p1918 = pneg %p1917
      $region125: #{aspp_forward.3} parent=5 // pred_check_branch
        %1920 = sbr.rel (%p1918) target = $region127
      $region126: #{aspp_forward.3} parent=5 // pred_region
        %s1921 = ssub.s32 %s33, 2
        // Predicated region
        $region128: #{aspp_forward.3} parent=126 // pred_check
          %p1922 = pneg %p136
        $region129: #{aspp_forward.3} parent=126 // pred_check_branch
          %1924 = sbr.rel (%p1922) target = $region131
        $region130: #{aspp_forward.3} parent=126 // pred_region
          %s1925 = sand.u32 %s121, 1
          %s1926 = sand.u32 %s121, 1
          %s1927 = smul.addr %s1926, 256
          %s1928 = scalar_lea.vmem [#allocation9], %s1927
        $region131: #{aspp_forward.3} parent=126 // pred_fallthru
          _
        // Predicated region
        $region132: #{aspp_forward.3} parent=126 // pred_check
          %p1929 = pneg %p166
        $region133: #{aspp_forward.3} parent=126 // pred_check_branch
          %1931 = sbr.rel (%p1929) target = $region135
        $region134: #{aspp_forward.3} parent=126 // pred_region
          %s1932 = sld [smem:[#allocation4 + %s45]]
          %s1933 = smul.u32 2, %s1932
          %p1934 = scmp.lt.s32.totalorder %s44, 1
          %s1935 = scalar_select %p1934, %s44, 1
          %p1936 = scmp.lt.s32.totalorder %s1933, 7
          %s1937 = scalar_select %p1936, %s1933, 7
          %s1938 = smul.addr %s1935, 8
          %s1939 = sadd.s32 %s1937, %s1938
          %s1940 = scalar_lea.vmem %s7, %s1939
        $region135: #{aspp_forward.3} parent=126 // pred_fallthru
          _
        // Predicated region
        $region136: #{aspp_forward.3} parent=126 // pred_check
          %p1941 = pneg %p196
        $region137: #{aspp_forward.3} parent=126 // pred_check_branch
          %1943 = sbr.rel (%p1941) target = $region139
        $region138: #{aspp_forward.3} parent=126 // pred_region
          %s1944 = sld [smem:[#allocation4 + %s45]]
          %s1945 = smul.u32 2, %s1944
          %p1946 = scmp.lt.s32.totalorder %s44, 1
          %s1947 = scalar_select %p1946, %s44, 1
          %p1948 = scmp.lt.s32.totalorder %s1945, 7
          %s1949 = scalar_select %p1948, %s1945, 7
          %s1950 = smul.addr %s1947, 8
          %s1951 = sadd.s32 %s1949, %s1950
          %s1952 = scalar_lea.vmem %s8, %s1951
        $region139: #{aspp_forward.3} parent=126 // pred_fallthru
          _
      $region127: #{aspp_forward.3} parent=5 // pred_fallthru
        _
    $region6: #{aspp_forward.3} parent=1 // loop_footer
      %s37 = sadd.s32 1, %s33
    $region7: #{aspp_forward.3} parent=1 // loop_footer_branch
      %32 = sbr.rel target = $region3
    $region8: #{aspp_forward.3} parent=1 // loop_exit
      _

// kernel: aspp_forward.4
$region0: #{aspp_forward.4}
  #allocation0 [shape = 'u32[]', space=smem, size = 0x4, offset = 0x4, fixed_abs, tag = 'smem constant byte address 0x4 - core index']
  #allocation1 [shape = 'u32[144,128]{1,0:T(1,128)}', space=vmem, size = 0x12000, scoped, tag = 'internal scratch']
  %s0 = inlined_call_operand.vmem [shape: bf16[512,1024], index: 0, kind: input, shape index: {}]
  %s1 = inlined_call_operand.vmem [shape: f32[1,1024], index: 1, kind: input, shape index: {}]
  %s2 = inlined_call_operand.vmem [shape: f32[1,1024], index: 2, kind: input, shape index: {}]
  %s3 = inlined_call_operand.vmem [shape: bf16[1024,128], index: 3, kind: input, shape index: {}]
  %s4 = inlined_call_operand.vmem [shape: bf16[512,128], index: 4, kind: output, shape index: {0}]
  %s5 = inlined_call_operand.vmem [shape: f32[2,1,128], index: 5, kind: output, shape index: {1}]
  %s6 = inlined_call_operand.vmem [shape: f32[2,1,128], index: 6, kind: output, shape index: {2}]
  %7 = xla_tuple %s4, %s5, %s6
  %s8 = sld [smem:[#allocation0]]
  $region65: #{aspp_forward.4} parent=0
    _
  %s10 = ssub.s32 1, %s8
  %s11 = scalar_select 0, %s10, %s8
  loop: start=0, step=1, limit=4
  $region2: #{aspp_forward.4} parent=0 // loop_pre_header
    _
  $region3: #{aspp_forward.4} parent=0 // loop_header
    %s13 = sphi 0, %s17
    %p14 = scmp.ge.s32.totalorder %s13, 4
    %s23 = sphi 0, %s25
    %s26 = sphi 0, %s23
    %s27 = sphi 0, %s26
    %s43 = sphi 0, %s27
    %s47 = sphi 0, %s47
    %s49 = sphi 0, %s47
    %s50 = sphi 0, %s49
    %s64 = sphi 0, %s50
    %s68 = sphi 0, %s68
    %s70 = sphi 0, %s68
    %s71 = sphi 0, %s70
    %s85 = sphi 0, %s71
    %s89 = sphi 0, %s89
    %s91 = sphi 0, %s89
    %s92 = sphi 0, %s91
    %s106 = sphi 0, %s92
    %s112 = sphi 0, %s114
    %s115 = sphi 0, %s112
    %s116 = sphi 0, %s115
    %s132 = sphi 0, %s116
    %s138 = sphi 0, %s140
    %s141 = sphi 0, %s138
    %s142 = sphi 0, %s141
    %s158 = sphi 0, %s142
    %s164 = sphi 0, %s166
    %s167 = sphi 0, %s164
    %s168 = sphi 0, %s167
    %s184 = sphi 0, %s168
  $region4: #{aspp_forward.4} parent=0 // loop_header_branch
    %16 = sbr.rel (%p14) target = $region8
  $region5: #{aspp_forward.4} parent=0 // loop_body
    %s18 = ssub.s32 %s13, 1
    %s19 = ssub.s32 %s13, 2
    %s20 = sadd.s32 %s13, 1
    %s21 = ssub.s32 %s13, %s20
    %p22 = scmp.eq.s32.totalorder %s21, 0
    %s24 = sadd.s32 %s23, 1
    %s25 = scalar_select %p22, %s23, %s24
    %p28 = pneg %p22
    %p29 = scmp.eq.s32.totalorder %s13, 1
    %p30 = por %p28, %p29
    %p31 = scmp.ne.s32.totalorder %s23, %s26
    %p32 = scmp.eq.s32.totalorder %s13, 0
    %p33 = por %p31, %p32
    %p34 = scmp.ne.s32.totalorder %s23, %s26
    %p35 = scmp.eq.s32.totalorder %s18, 1
    %p36 = por %p34, %p35
    %p37 = scmp.ne.s32.totalorder %s26, %s27
    %p38 = scmp.eq.s32.totalorder %s18, 0
    %p39 = por %p37, %p38
    %p40 = scmp.ne.s32.totalorder %s26, %s27
    %p41 = scmp.eq.s32.totalorder %s19, 1
    %p42 = por %p40, %p41
    %p44 = scmp.ne.s32.totalorder %s27, %s43
    %p45 = scmp.eq.s32.totalorder %s19, 0
    %p46 = por %p44, %p45
    %s48 = sadd.s32 %s47, 1
    %p51 = scmp.eq.s32.totalorder %s13, 1
    %p52 = scmp.ne.s32.totalorder %s47, %s49
    %p53 = scmp.eq.s32.totalorder %s13, 0
    %p54 = por %p52, %p53
    %p55 = scmp.ne.s32.totalorder %s47, %s49
    %p56 = scmp.eq.s32.totalorder %s18, 1
    %p57 = por %p55, %p56
    %p58 = scmp.ne.s32.totalorder %s49, %s50
    %p59 = scmp.eq.s32.totalorder %s18, 0
    %p60 = por %p58, %p59
    %p61 = scmp.ne.s32.totalorder %s49, %s50
    %p62 = scmp.eq.s32.totalorder %s19, 1
    %p63 = por %p61, %p62
    %p65 = scmp.ne.s32.totalorder %s50, %s64
    %p66 = scmp.eq.s32.totalorder %s19, 0
    %p67 = por %p65, %p66
    %s69 = sadd.s32 %s68, 1
    %p72 = scmp.eq.s32.totalorder %s13, 1
    %p73 = scmp.ne.s32.totalorder %s68, %s70
    %p74 = scmp.eq.s32.totalorder %s13, 0
    %p75 = por %p73, %p74
    %p76 = scmp.ne.s32.totalorder %s68, %s70
    %p77 = scmp.eq.s32.totalorder %s18, 1
    %p78 = por %p76, %p77
    %p79 = scmp.ne.s32.totalorder %s70, %s71
    %p80 = scmp.eq.s32.totalorder %s18, 0
    %p81 = por %p79, %p80
    %p82 = scmp.ne.s32.totalorder %s70, %s71
    %p83 = scmp.eq.s32.totalorder %s19, 1
    %p84 = por %p82, %p83
    %p86 = scmp.ne.s32.totalorder %s71, %s85
    %p87 = scmp.eq.s32.totalorder %s19, 0
    %p88 = por %p86, %p87
    %s90 = sadd.s32 %s89, 1
    %p93 = scmp.eq.s32.totalorder %s13, 1
    %p94 = scmp.ne.s32.totalorder %s89, %s91
    %p95 = scmp.eq.s32.totalorder %s13, 0
    %p96 = por %p94, %p95
    %p97 = scmp.ne.s32.totalorder %s89, %s91
    %p98 = scmp.eq.s32.totalorder %s18, 1
    %p99 = por %p97, %p98
    %p100 = scmp.ne.s32.totalorder %s91, %s92
    %p101 = scmp.eq.s32.totalorder %s18, 0
    %p102 = por %p100, %p101
    %p103 = scmp.ne.s32.totalorder %s91, %s92
    %p104 = scmp.eq.s32.totalorder %s19, 1
    %p105 = por %p103, %p104
    %p107 = scmp.ne.s32.totalorder %s92, %s106
    %p108 = scmp.eq.s32.totalorder %s19, 0
    %p109 = por %p107, %p108
    %s110 = ssub.s32 %s13, %s20
    %p111 = scmp.eq.s32.totalorder %s110, 0
    %s113 = sadd.s32 %s112, 1
    %s114 = scalar_select %p111, %s112, %s113
    %p117 = pneg %p111
    %p118 = scmp.eq.s32.totalorder %s13, 1
    %p119 = por %p117, %p118
    %p120 = scmp.ne.s32.totalorder %s112, %s115
    %p121 = scmp.eq.s32.totalorder %s13, 0
    %p122 = por %p120, %p121
    %p123 = scmp.ne.s32.totalorder %s112, %s115
    %p124 = scmp.eq.s32.totalorder %s18, 1
    %p125 = por %p123, %p124
    %p126 = scmp.ne.s32.totalorder %s115, %s116
    %p127 = scmp.eq.s32.totalorder %s18, 0
    %p128 = por %p126, %p127
    %p129 = scmp.ne.s32.totalorder %s115, %s116
    %p130 = scmp.eq.s32.totalorder %s19, 1
    %p131 = por %p129, %p130
    %p133 = scmp.ne.s32.totalorder %s116, %s132
    %p134 = scmp.eq.s32.totalorder %s19, 0
    %p135 = por %p133, %p134
    %s136 = ssub.s32 %s13, %s20
    %p137 = scmp.eq.s32.totalorder %s136, 0
    %s139 = sadd.s32 %s138, 1
    %s140 = scalar_select %p137, %s138, %s139
    %p143 = pneg %p137
    %p144 = scmp.eq.s32.totalorder %s13, 1
    %p145 = por %p143, %p144
    %p146 = scmp.ne.s32.totalorder %s138, %s141
    %p147 = scmp.eq.s32.totalorder %s13, 0
    %p148 = por %p146, %p147
    %p149 = scmp.ne.s32.totalorder %s138, %s141
    %p150 = scmp.eq.s32.totalorder %s18, 1
    %p151 = por %p149, %p150
    %p152 = scmp.ne.s32.totalorder %s141, %s142
    %p153 = scmp.eq.s32.totalorder %s18, 0
    %p154 = por %p152, %p153
    %p155 = scmp.ne.s32.totalorder %s141, %s142
    %p156 = scmp.eq.s32.totalorder %s19, 1
    %p157 = por %p155, %p156
    %p159 = scmp.ne.s32.totalorder %s142, %s158
    %p160 = scmp.eq.s32.totalorder %s19, 0
    %p161 = por %p159, %p160
    %s162 = ssub.s32 %s13, %s20
    %p163 = scmp.eq.s32.totalorder %s162, 0
    %s165 = sadd.s32 %s164, 1
    %s166 = scalar_select %p163, %s164, %s165
    %p169 = pneg %p163
    %p170 = scmp.eq.s32.totalorder %s13, 1
    %p171 = por %p169, %p170
    %p172 = scmp.ne.s32.totalorder %s164, %s167
    %p173 = scmp.eq.s32.totalorder %s13, 0
    %p174 = por %p172, %p173
    %p175 = scmp.ne.s32.totalorder %s164, %s167
    %p176 = scmp.eq.s32.totalorder %s18, 1
    %p177 = por %p175, %p176
    %p178 = scmp.ne.s32.totalorder %s167, %s168
    %p179 = scmp.eq.s32.totalorder %s18, 0
    %p180 = por %p178, %p179
    %p181 = scmp.ne.s32.totalorder %s167, %s168
    %p182 = scmp.eq.s32.totalorder %s19, 1
    %p183 = por %p181, %p182
    %p185 = scmp.ne.s32.totalorder %s168, %s184
    %p186 = scmp.eq.s32.totalorder %s19, 0
    %p187 = por %p185, %p186
    %p188 = scmp.le.s32.totalorder 1, %s13
    %p189 = scmp.lt.s32.totalorder %s13, 3
    %p190 = pnand %p188, %p189
    %p191 = pneg %p190
    // Predicated region
    $region9: #{aspp_forward.4} parent=5 // pred_check
      _
    $region10: #{aspp_forward.4} parent=5 // pred_check_branch
      %193 = sbr.rel (%p190) target = $region12
    $region11: #{aspp_forward.4} parent=5 // pred_region
      %s194 = ssub.s32 %s13, 1
      // Predicated region
      $region13: #{aspp_forward.4} parent=11 // pred_check
        %p195 = pneg %p60
      $region14: #{aspp_forward.4} parent=11 // pred_check_branch
        %197 = sbr.rel (%p195) target = $region16
      $region15: #{aspp_forward.4} parent=11 // pred_region
        _
      $region16: #{aspp_forward.4} parent=11 // pred_fallthru
        _
      // Predicated region
      $region17: #{aspp_forward.4} parent=11 // pred_check
        %p198 = pneg %p81
      $region18: #{aspp_forward.4} parent=11 // pred_check_branch
        %200 = sbr.rel (%p198) target = $region20
      $region19: #{aspp_forward.4} parent=11 // pred_region
        _
      $region20: #{aspp_forward.4} parent=11 // pred_fallthru
        _
      // Predicated region
      $region21: #{aspp_forward.4} parent=11 // pred_check
        %p201 = pneg %p102
      $region22: #{aspp_forward.4} parent=11 // pred_check_branch
        %203 = sbr.rel (%p201) target = $region24
      $region23: #{aspp_forward.4} parent=11 // pred_region
        _
      $region24: #{aspp_forward.4} parent=11 // pred_fallthru
        _
    $region12: #{aspp_forward.4} parent=5 // pred_fallthru
      _
    %p204 = scmp.lt.s32.totalorder %s13, 2
    // Predicated region
    $region25: #{aspp_forward.4} parent=5 // pred_check
      %p205 = pneg %p204
    $region26: #{aspp_forward.4} parent=5 // pred_check_branch
      %207 = sbr.rel (%p205) target = $region28
    $region27: #{aspp_forward.4} parent=5 // pred_region
      // Predicated region
      $region29: #{aspp_forward.4} parent=27 // pred_check
        %p208 = pneg %p33
      $region30: #{aspp_forward.4} parent=27 // pred_check_branch
        %210 = sbr.rel (%p208) target = $region32
      $region31: #{aspp_forward.4} parent=27 // pred_region
        %s211 = smul.u32 32, %s13
        %p212 = scmp.lt.s32.totalorder %s211, 63
        %s213 = scalar_select %p212, %s211, 63
        %s214 = smul.addr %s213, 8
        %s215 = smul.addr %s214, 4
        %s216 = scalar_lea.vmem %s0, %s215
        %s217 = smul.u32 32, %s13
      $region32: #{aspp_forward.4} parent=27 // pred_fallthru
        _
    $region28: #{aspp_forward.4} parent=5 // pred_fallthru
      _
    %p218 = scmp.le.s32.totalorder 1, %s13
    %p219 = scmp.lt.s32.totalorder %s13, 3
    %p220 = pnand %p218, %p219
    %p221 = pneg %p220
    // Predicated region
    $region33: #{aspp_forward.4} parent=5 // pred_check
      _
    $region34: #{aspp_forward.4} parent=5 // pred_check_branch
      %223 = sbr.rel (%p220) target = $region36
    $region35: #{aspp_forward.4} parent=5 // pred_region
      %s224 = ssub.s32 %s13, 1
      %s225 = smul.u32 32, %s18
      %p226 = scmp.lt.s32.totalorder %s225, 63
      %s227 = scalar_select %p226, %s225, 63
      %s228 = smul.addr %s227, 8
      %s229 = smul.addr %s228, 4
      %s230 = scalar_lea.vmem %s0, %s229
      %p231 = pneg %p39
      %p232 = pneg %p36
      %p233 = pneg %p60
      %p234 = pneg %p57
      %p235 = pneg %p81
      %p236 = pneg %p78
      %p237 = pneg %p102
      %p238 = pneg %p99
      %p239 = pneg %p128
      %p240 = pneg %p125
      %s241 = smul.u32 32, %s18
      %p242 = scmp.lt.s32.totalorder %s241, 63
      %s243 = scalar_select %p242, %s241, 63
      %s244 = smul.addr %s243, 4
      %s245 = scalar_lea.vmem %s4, %s244
      %p246 = pneg %p154
      %p247 = pneg %p151
      %p248 = scmp.lt.s32.totalorder %s18, 1
      %s249 = scalar_select %p248, %s18, 1
      %s250 = scalar_lea.vmem %s5, %s249
      %p251 = pneg %p180
      %p252 = pneg %p177
      %p253 = scmp.lt.s32.totalorder %s18, 1
      %s254 = scalar_select %p253, %s18, 1
      %s255 = scalar_lea.vmem %s6, %s254
      %s256 = smul.u32 32, %s18
      %p257 = scmp.lt.s32.totalorder %s256, 63
      %s258 = scalar_select %p257, %s256, 63
      %s259 = smul.addr %s258, 8
      %s260 = smul.addr %s259, 4
      %s261 = scalar_lea.vmem %s0, %s260
      %s262 = smul.u32 32, %s18
      %s263 = smul.u32 32, %s18
      %p264 = scmp.lt.s32.totalorder %s263, 63
      %s265 = scalar_select %p264, %s263, 63
      %s266 = smul.addr %s265, 4
      %s267 = scalar_lea.vmem %s4, %s266
      %s268 = smul.u32 32, %s18
      %p269 = scmp.lt.s32.totalorder %s18, 1
      %s270 = scalar_select %p269, %s18, 1
      %s271 = scalar_lea.vmem %s5, %s270
      %p272 = scmp.lt.s32.totalorder %s18, 1
      %s273 = scalar_select %p272, %s18, 1
      %s274 = scalar_lea.vmem %s6, %s273
      %v276 = vld [vmem:[%s261] sm:$0xff]
      %v277 = vld [vmem:[%s261 + $0x8] sm:$0xff]
      %v278 = vld [vmem:[%s261 + $0x10] sm:$0xff]
      %v279 = vld [vmem:[%s261 + $0x18] sm:$0xff]
      %v280 = vld [vmem:[%s261 + $0x20] sm:$0xff]
      %v281 = vld [vmem:[%s261 + $0x28] sm:$0xff]
      %v282 = vld [vmem:[%s261 + $0x30] sm:$0xff]
      %v283 = vld [vmem:[%s261 + $0x38] sm:$0xff]
      %v284 = vld [vmem:[%s261 + $0x40] sm:$0xff]
      %v285 = vld [vmem:[%s261 + $0x48] sm:$0xff]
      %v286 = vld [vmem:[%s261 + $0x50] sm:$0xff]
      %v287 = vld [vmem:[%s261 + $0x58] sm:$0xff]
      %v288 = vld [vmem:[%s261 + $0x60] sm:$0xff]
      %v289 = vld [vmem:[%s261 + $0x68] sm:$0xff]
      %v290 = vld [vmem:[%s261 + $0x70] sm:$0xff]
      %v291 = vld [vmem:[%s261 + $0x78] sm:$0xff]
      %v292 = vld [vmem:[%s261 + $0x80] sm:$0xff]
      %v293 = vld [vmem:[%s261 + $0x88] sm:$0xff]
      %v294 = vld [vmem:[%s261 + $0x90] sm:$0xff]
      %v295 = vld [vmem:[%s261 + $0x98] sm:$0xff]
      %v296 = vld [vmem:[%s261 + $0xa0] sm:$0xff]
      %v297 = vld [vmem:[%s261 + $0xa8] sm:$0xff]
      %v298 = vld [vmem:[%s261 + $0xb0] sm:$0xff]
      %v299 = vld [vmem:[%s261 + $0xb8] sm:$0xff]
      %v300 = vld [vmem:[%s261 + $0xc0] sm:$0xff]
      %v301 = vld [vmem:[%s261 + $0xc8] sm:$0xff]
      %v302 = vld [vmem:[%s261 + $0xd0] sm:$0xff]
      %v303 = vld [vmem:[%s261 + $0xd8] sm:$0xff]
      %v304 = vld [vmem:[%s261 + $0xe0] sm:$0xff]
      %v305 = vld [vmem:[%s261 + $0xe8] sm:$0xff]
      %v306 = vld [vmem:[%s261 + $0xf0] sm:$0xff]
      %v307 = vld [vmem:[%s261 + $0xf8] sm:$0xff]
      %v308 = vld [vmem:[%s261 + $0x100] sm:$0xff]
      %v309 = vld [vmem:[%s261 + $0x108] sm:$0xff]
      %v310 = vld [vmem:[%s261 + $0x110] sm:$0xff]
      %v311 = vld [vmem:[%s261 + $0x118] sm:$0xff]
      %v312 = vld [vmem:[%s261 + $0x120] sm:$0xff]
      %v313 = vld [vmem:[%s261 + $0x128] sm:$0xff]
      %v314 = vld [vmem:[%s261 + $0x130] sm:$0xff]
      %v315 = vld [vmem:[%s261 + $0x138] sm:$0xff]
      %v316 = vld [vmem:[%s261 + $0x140] sm:$0xff]
      %v317 = vld [vmem:[%s261 + $0x148] sm:$0xff]
      %v318 = vld [vmem:[%s261 + $0x150] sm:$0xff]
      %v319 = vld [vmem:[%s261 + $0x158] sm:$0xff]
      %v320 = vld [vmem:[%s261 + $0x160] sm:$0xff]
      %v321 = vld [vmem:[%s261 + $0x168] sm:$0xff]
      %v322 = vld [vmem:[%s261 + $0x170] sm:$0xff]
      %v323 = vld [vmem:[%s261 + $0x178] sm:$0xff]
      %v324 = vld [vmem:[%s261 + $0x180] sm:$0xff]
      %v325 = vld [vmem:[%s261 + $0x188] sm:$0xff]
      %v326 = vld [vmem:[%s261 + $0x190] sm:$0xff]
      %v327 = vld [vmem:[%s261 + $0x198] sm:$0xff]
      %v328 = vld [vmem:[%s261 + $0x1a0] sm:$0xff]
      %v329 = vld [vmem:[%s261 + $0x1a8] sm:$0xff]
      %v330 = vld [vmem:[%s261 + $0x1b0] sm:$0xff]
      %v331 = vld [vmem:[%s261 + $0x1b8] sm:$0xff]
      %v332 = vld [vmem:[%s261 + $0x1c0] sm:$0xff]
      %v333 = vld [vmem:[%s261 + $0x1c8] sm:$0xff]
      %v334 = vld [vmem:[%s261 + $0x1d0] sm:$0xff]
      %v335 = vld [vmem:[%s261 + $0x1d8] sm:$0xff]
      %v336 = vld [vmem:[%s261 + $0x1e0] sm:$0xff]
      %v337 = vld [vmem:[%s261 + $0x1e8] sm:$0xff]
      %v338 = vld [vmem:[%s261 + $0x1f0] sm:$0xff]
      %v339 = vld [vmem:[%s261 + $0x1f8] sm:$0xff]
      %v340 = vld [vmem:[%s261 + $0x200] sm:$0xff]
      %v341 = vld [vmem:[%s261 + $0x208] sm:$0xff]
      %v342 = vld [vmem:[%s261 + $0x210] sm:$0xff]
      %v343 = vld [vmem:[%s261 + $0x218] sm:$0xff]
      %v344 = vld [vmem:[%s261 + $0x220] sm:$0xff]
      %v345 = vld [vmem:[%s261 + $0x228] sm:$0xff]
      %v346 = vld [vmem:[%s261 + $0x230] sm:$0xff]
      %v347 = vld [vmem:[%s261 + $0x238] sm:$0xff]
      %v348 = vld [vmem:[%s261 + $0x240] sm:$0xff]
      %v349 = vld [vmem:[%s261 + $0x248] sm:$0xff]
      %v350 = vld [vmem:[%s261 + $0x250] sm:$0xff]
      %v351 = vld [vmem:[%s261 + $0x258] sm:$0xff]
      %v352 = vld [vmem:[%s261 + $0x260] sm:$0xff]
      %v353 = vld [vmem:[%s261 + $0x268] sm:$0xff]
      %v354 = vld [vmem:[%s261 + $0x270] sm:$0xff]
      %v355 = vld [vmem:[%s261 + $0x278] sm:$0xff]
      %v356 = vld [vmem:[%s261 + $0x280] sm:$0xff]
      %v357 = vld [vmem:[%s261 + $0x288] sm:$0xff]
      %v358 = vld [vmem:[%s261 + $0x290] sm:$0xff]
      %v359 = vld [vmem:[%s261 + $0x298] sm:$0xff]
      %v360 = vld [vmem:[%s261 + $0x2a0] sm:$0xff]
      %v361 = vld [vmem:[%s261 + $0x2a8] sm:$0xff]
      %v362 = vld [vmem:[%s261 + $0x2b0] sm:$0xff]
      %v363 = vld [vmem:[%s261 + $0x2b8] sm:$0xff]
      %v364 = vld [vmem:[%s261 + $0x2c0] sm:$0xff]
      %v365 = vld [vmem:[%s261 + $0x2c8] sm:$0xff]
      %v366 = vld [vmem:[%s261 + $0x2d0] sm:$0xff]
      %v367 = vld [vmem:[%s261 + $0x2d8] sm:$0xff]
      %v368 = vld [vmem:[%s261 + $0x2e0] sm:$0xff]
      %v369 = vld [vmem:[%s261 + $0x2e8] sm:$0xff]
      %v370 = vld [vmem:[%s261 + $0x2f0] sm:$0xff]
      %v371 = vld [vmem:[%s261 + $0x2f8] sm:$0xff]
      %v372 = vld [vmem:[%s261 + $0x300] sm:$0xff]
      %v373 = vld [vmem:[%s261 + $0x308] sm:$0xff]
      %v374 = vld [vmem:[%s261 + $0x310] sm:$0xff]
      %v375 = vld [vmem:[%s261 + $0x318] sm:$0xff]
      %v376 = vld [vmem:[%s261 + $0x320] sm:$0xff]
      %v377 = vld [vmem:[%s261 + $0x328] sm:$0xff]
      %v378 = vld [vmem:[%s261 + $0x330] sm:$0xff]
      %v379 = vld [vmem:[%s261 + $0x338] sm:$0xff]
      %v380 = vld [vmem:[%s261 + $0x340] sm:$0xff]
      %v381 = vld [vmem:[%s261 + $0x348] sm:$0xff]
      %v382 = vld [vmem:[%s261 + $0x350] sm:$0xff]
      %v383 = vld [vmem:[%s261 + $0x358] sm:$0xff]
      %v384 = vld [vmem:[%s261 + $0x360] sm:$0xff]
      %v385 = vld [vmem:[%s261 + $0x368] sm:$0xff]
      %v386 = vld [vmem:[%s261 + $0x370] sm:$0xff]
      %v387 = vld [vmem:[%s261 + $0x378] sm:$0xff]
      %v388 = vld [vmem:[%s261 + $0x380] sm:$0xff]
      %v389 = vld [vmem:[%s261 + $0x388] sm:$0xff]
      %v390 = vld [vmem:[%s261 + $0x390] sm:$0xff]
      %v391 = vld [vmem:[%s261 + $0x398] sm:$0xff]
      %v392 = vld [vmem:[%s261 + $0x3a0] sm:$0xff]
      %v393 = vld [vmem:[%s261 + $0x3a8] sm:$0xff]
      %v394 = vld [vmem:[%s261 + $0x3b0] sm:$0xff]
      %v395 = vld [vmem:[%s261 + $0x3b8] sm:$0xff]
      %v396 = vld [vmem:[%s261 + $0x3c0] sm:$0xff]
      %v397 = vld [vmem:[%s261 + $0x3c8] sm:$0xff]
      %v398 = vld [vmem:[%s261 + $0x3d0] sm:$0xff]
      %v399 = vld [vmem:[%s261 + $0x3d8] sm:$0xff]
      %v400 = vld [vmem:[%s261 + $0x3e0] sm:$0xff]
      %v401 = vld [vmem:[%s261 + $0x3e8] sm:$0xff]
      %v402 = vld [vmem:[%s261 + $0x3f0] sm:$0xff]
      %v403 = vld [vmem:[%s261 + $0x3f8] sm:$0xff]
      %v404 = vunpack.c.l.bf16 %v276
      %v405 = vunpack.c.h.bf16 %v276
      %v406 = vunpack.c.l.bf16 %v277
      %v407 = vunpack.c.h.bf16 %v277
      %v408 = vunpack.c.l.bf16 %v278
      %v409 = vunpack.c.h.bf16 %v278
      %v410 = vunpack.c.l.bf16 %v279
      %v411 = vunpack.c.h.bf16 %v279
      %v412 = vunpack.c.l.bf16 %v280
      %v413 = vunpack.c.h.bf16 %v280
      %v414 = vunpack.c.l.bf16 %v281
      %v415 = vunpack.c.h.bf16 %v281
      %v416 = vunpack.c.l.bf16 %v282
      %v417 = vunpack.c.h.bf16 %v282
      %v418 = vunpack.c.l.bf16 %v283
      %v419 = vunpack.c.h.bf16 %v283
      %v420 = vunpack.c.l.bf16 %v284
      %v421 = vunpack.c.h.bf16 %v284
      %v422 = vunpack.c.l.bf16 %v285
      %v423 = vunpack.c.h.bf16 %v285
      %v424 = vunpack.c.l.bf16 %v286
      %v425 = vunpack.c.h.bf16 %v286
      %v426 = vunpack.c.l.bf16 %v287
      %v427 = vunpack.c.h.bf16 %v287
      %v428 = vunpack.c.l.bf16 %v288
      %v429 = vunpack.c.h.bf16 %v288
      %v430 = vunpack.c.l.bf16 %v289
      %v431 = vunpack.c.h.bf16 %v289
      %v432 = vunpack.c.l.bf16 %v290
      %v433 = vunpack.c.h.bf16 %v290
      %v434 = vunpack.c.l.bf16 %v291
      %v435 = vunpack.c.h.bf16 %v291
      %v436 = vunpack.c.l.bf16 %v292
      %v437 = vunpack.c.h.bf16 %v292
      %v438 = vunpack.c.l.bf16 %v293
      %v439 = vunpack.c.h.bf16 %v293
      %v440 = vunpack.c.l.bf16 %v294
      %v441 = vunpack.c.h.bf16 %v294
      %v442 = vunpack.c.l.bf16 %v295
      %v443 = vunpack.c.h.bf16 %v295
      %v444 = vunpack.c.l.bf16 %v296
      %v445 = vunpack.c.h.bf16 %v296
      %v446 = vunpack.c.l.bf16 %v297
      %v447 = vunpack.c.h.bf16 %v297
      %v448 = vunpack.c.l.bf16 %v298
      %v449 = vunpack.c.h.bf16 %v298
      %v450 = vunpack.c.l.bf16 %v299
      %v451 = vunpack.c.h.bf16 %v299
      %v452 = vunpack.c.l.bf16 %v300
      %v453 = vunpack.c.h.bf16 %v300
      %v454 = vunpack.c.l.bf16 %v301
      %v455 = vunpack.c.h.bf16 %v301
      %v456 = vunpack.c.l.bf16 %v302
      %v457 = vunpack.c.h.bf16 %v302
      %v458 = vunpack.c.l.bf16 %v303
      %v459 = vunpack.c.h.bf16 %v303
      %v460 = vunpack.c.l.bf16 %v304
      %v461 = vunpack.c.h.bf16 %v304
      %v462 = vunpack.c.l.bf16 %v305
      %v463 = vunpack.c.h.bf16 %v305
      %v464 = vunpack.c.l.bf16 %v306
      %v465 = vunpack.c.h.bf16 %v306
      %v466 = vunpack.c.l.bf16 %v307
      %v467 = vunpack.c.h.bf16 %v307
      %v468 = vunpack.c.l.bf16 %v308
      %v469 = vunpack.c.h.bf16 %v308
      %v470 = vunpack.c.l.bf16 %v309
      %v471 = vunpack.c.h.bf16 %v309
      %v472 = vunpack.c.l.bf16 %v310
      %v473 = vunpack.c.h.bf16 %v310
      %v474 = vunpack.c.l.bf16 %v311
      %v475 = vunpack.c.h.bf16 %v311
      %v476 = vunpack.c.l.bf16 %v312
      %v477 = vunpack.c.h.bf16 %v312
      %v478 = vunpack.c.l.bf16 %v313
      %v479 = vunpack.c.h.bf16 %v313
      %v480 = vunpack.c.l.bf16 %v314
      %v481 = vunpack.c.h.bf16 %v314
      %v482 = vunpack.c.l.bf16 %v315
      %v483 = vunpack.c.h.bf16 %v315
      %v484 = vunpack.c.l.bf16 %v316
      %v485 = vunpack.c.h.bf16 %v316
      %v486 = vunpack.c.l.bf16 %v317
      %v487 = vunpack.c.h.bf16 %v317
      %v488 = vunpack.c.l.bf16 %v318
      %v489 = vunpack.c.h.bf16 %v318
      %v490 = vunpack.c.l.bf16 %v319
      %v491 = vunpack.c.h.bf16 %v319
      %v492 = vunpack.c.l.bf16 %v320
      %v493 = vunpack.c.h.bf16 %v320
      %v494 = vunpack.c.l.bf16 %v321
      %v495 = vunpack.c.h.bf16 %v321
      %v496 = vunpack.c.l.bf16 %v322
      %v497 = vunpack.c.h.bf16 %v322
      %v498 = vunpack.c.l.bf16 %v323
      %v499 = vunpack.c.h.bf16 %v323
      %v500 = vunpack.c.l.bf16 %v324
      %v501 = vunpack.c.h.bf16 %v324
      %v502 = vunpack.c.l.bf16 %v325
      %v503 = vunpack.c.h.bf16 %v325
      %v504 = vunpack.c.l.bf16 %v326
      %v505 = vunpack.c.h.bf16 %v326
      %v506 = vunpack.c.l.bf16 %v327
      %v507 = vunpack.c.h.bf16 %v327
      %v508 = vunpack.c.l.bf16 %v328
      %v509 = vunpack.c.h.bf16 %v328
      %v510 = vunpack.c.l.bf16 %v329
      %v511 = vunpack.c.h.bf16 %v329
      %v512 = vunpack.c.l.bf16 %v330
      %v513 = vunpack.c.h.bf16 %v330
      %v514 = vunpack.c.l.bf16 %v331
      %v515 = vunpack.c.h.bf16 %v331
      %v516 = vunpack.c.l.bf16 %v332
      %v517 = vunpack.c.h.bf16 %v332
      %v518 = vunpack.c.l.bf16 %v333
      %v519 = vunpack.c.h.bf16 %v333
      %v520 = vunpack.c.l.bf16 %v334
      %v521 = vunpack.c.h.bf16 %v334
      %v522 = vunpack.c.l.bf16 %v335
      %v523 = vunpack.c.h.bf16 %v335
      %v524 = vunpack.c.l.bf16 %v336
      %v525 = vunpack.c.h.bf16 %v336
      %v526 = vunpack.c.l.bf16 %v337
      %v527 = vunpack.c.h.bf16 %v337
      %v528 = vunpack.c.l.bf16 %v338
      %v529 = vunpack.c.h.bf16 %v338
      %v530 = vunpack.c.l.bf16 %v339
      %v531 = vunpack.c.h.bf16 %v339
      %v532 = vunpack.c.l.bf16 %v340
      %v533 = vunpack.c.h.bf16 %v340
      %v534 = vunpack.c.l.bf16 %v341
      %v535 = vunpack.c.h.bf16 %v341
      %v536 = vunpack.c.l.bf16 %v342
      %v537 = vunpack.c.h.bf16 %v342
      %v538 = vunpack.c.l.bf16 %v343
      %v539 = vunpack.c.h.bf16 %v343
      %v540 = vunpack.c.l.bf16 %v344
      %v541 = vunpack.c.h.bf16 %v344
      %v542 = vunpack.c.l.bf16 %v345
      %v543 = vunpack.c.h.bf16 %v345
      %v544 = vunpack.c.l.bf16 %v346
      %v545 = vunpack.c.h.bf16 %v346
      %v546 = vunpack.c.l.bf16 %v347
      %v547 = vunpack.c.h.bf16 %v347
      %v548 = vunpack.c.l.bf16 %v348
      %v549 = vunpack.c.h.bf16 %v348
      %v550 = vunpack.c.l.bf16 %v349
      %v551 = vunpack.c.h.bf16 %v349
      %v552 = vunpack.c.l.bf16 %v350
      %v553 = vunpack.c.h.bf16 %v350
      %v554 = vunpack.c.l.bf16 %v351
      %v555 = vunpack.c.h.bf16 %v351
      %v556 = vunpack.c.l.bf16 %v352
      %v557 = vunpack.c.h.bf16 %v352
      %v558 = vunpack.c.l.bf16 %v353
      %v559 = vunpack.c.h.bf16 %v353
      %v560 = vunpack.c.l.bf16 %v354
      %v561 = vunpack.c.h.bf16 %v354
      %v562 = vunpack.c.l.bf16 %v355
      %v563 = vunpack.c.h.bf16 %v355
      %v564 = vunpack.c.l.bf16 %v356
      %v565 = vunpack.c.h.bf16 %v356
      %v566 = vunpack.c.l.bf16 %v357
      %v567 = vunpack.c.h.bf16 %v357
      %v568 = vunpack.c.l.bf16 %v358
      %v569 = vunpack.c.h.bf16 %v358
      %v570 = vunpack.c.l.bf16 %v359
      %v571 = vunpack.c.h.bf16 %v359
      %v572 = vunpack.c.l.bf16 %v360
      %v573 = vunpack.c.h.bf16 %v360
      %v574 = vunpack.c.l.bf16 %v361
      %v575 = vunpack.c.h.bf16 %v361
      %v576 = vunpack.c.l.bf16 %v362
      %v577 = vunpack.c.h.bf16 %v362
      %v578 = vunpack.c.l.bf16 %v363
      %v579 = vunpack.c.h.bf16 %v363
      %v580 = vunpack.c.l.bf16 %v364
      %v581 = vunpack.c.h.bf16 %v364
      %v582 = vunpack.c.l.bf16 %v365
      %v583 = vunpack.c.h.bf16 %v365
      %v584 = vunpack.c.l.bf16 %v366
      %v585 = vunpack.c.h.bf16 %v366
      %v586 = vunpack.c.l.bf16 %v367
      %v587 = vunpack.c.h.bf16 %v367
      %v588 = vunpack.c.l.bf16 %v368
      %v589 = vunpack.c.h.bf16 %v368
      %v590 = vunpack.c.l.bf16 %v369
      %v591 = vunpack.c.h.bf16 %v369
      %v592 = vunpack.c.l.bf16 %v370
      %v593 = vunpack.c.h.bf16 %v370
      %v594 = vunpack.c.l.bf16 %v371
      %v595 = vunpack.c.h.bf16 %v371
      %v596 = vunpack.c.l.bf16 %v372
      %v597 = vunpack.c.h.bf16 %v372
      %v598 = vunpack.c.l.bf16 %v373
      %v599 = vunpack.c.h.bf16 %v373
      %v600 = vunpack.c.l.bf16 %v374
      %v601 = vunpack.c.h.bf16 %v374
      %v602 = vunpack.c.l.bf16 %v375
      %v603 = vunpack.c.h.bf16 %v375
      %v604 = vunpack.c.l.bf16 %v376
      %v605 = vunpack.c.h.bf16 %v376
      %v606 = vunpack.c.l.bf16 %v377
      %v607 = vunpack.c.h.bf16 %v377
      %v608 = vunpack.c.l.bf16 %v378
      %v609 = vunpack.c.h.bf16 %v378
      %v610 = vunpack.c.l.bf16 %v379
      %v611 = vunpack.c.h.bf16 %v379
      %v612 = vunpack.c.l.bf16 %v380
      %v613 = vunpack.c.h.bf16 %v380
      %v614 = vunpack.c.l.bf16 %v381
      %v615 = vunpack.c.h.bf16 %v381
      %v616 = vunpack.c.l.bf16 %v382
      %v617 = vunpack.c.h.bf16 %v382
      %v618 = vunpack.c.l.bf16 %v383
      %v619 = vunpack.c.h.bf16 %v383
      %v620 = vunpack.c.l.bf16 %v384
      %v621 = vunpack.c.h.bf16 %v384
      %v622 = vunpack.c.l.bf16 %v385
      %v623 = vunpack.c.h.bf16 %v385
      %v624 = vunpack.c.l.bf16 %v386
      %v625 = vunpack.c.h.bf16 %v386
      %v626 = vunpack.c.l.bf16 %v387
      %v627 = vunpack.c.h.bf16 %v387
      %v628 = vunpack.c.l.bf16 %v388
      %v629 = vunpack.c.h.bf16 %v388
      %v630 = vunpack.c.l.bf16 %v389
      %v631 = vunpack.c.h.bf16 %v389
      %v632 = vunpack.c.l.bf16 %v390
      %v633 = vunpack.c.h.bf16 %v390
      %v634 = vunpack.c.l.bf16 %v391
      %v635 = vunpack.c.h.bf16 %v391
      %v636 = vunpack.c.l.bf16 %v392
      %v637 = vunpack.c.h.bf16 %v392
      %v638 = vunpack.c.l.bf16 %v393
      %v639 = vunpack.c.h.bf16 %v393
      %v640 = vunpack.c.l.bf16 %v394
      %v641 = vunpack.c.h.bf16 %v394
      %v642 = vunpack.c.l.bf16 %v395
      %v643 = vunpack.c.h.bf16 %v395
      %v644 = vunpack.c.l.bf16 %v396
      %v645 = vunpack.c.h.bf16 %v396
      %v646 = vunpack.c.l.bf16 %v397
      %v647 = vunpack.c.h.bf16 %v397
      %v648 = vunpack.c.l.bf16 %v398
      %v649 = vunpack.c.h.bf16 %v398
      %v650 = vunpack.c.l.bf16 %v399
      %v651 = vunpack.c.h.bf16 %v399
      %v652 = vunpack.c.l.bf16 %v400
      %v653 = vunpack.c.h.bf16 %v400
      %v654 = vunpack.c.l.bf16 %v401
      %v655 = vunpack.c.h.bf16 %v401
      %v656 = vunpack.c.l.bf16 %v402
      %v657 = vunpack.c.h.bf16 %v402
      %v658 = vunpack.c.l.bf16 %v403
      %v659 = vunpack.c.h.bf16 %v403
      %v660 = vld [vmem:[%s1] sm:$0xff]
      %v662 = vlaneseq
      %v663 = vshrl.u32 %v662, 7
      %v664 = vsub.s32 0, %v663
      %v665 = vrot.slane %v660, %v664
      %v666 = vlaneseq
      %v667 = vshrl.u32 %v666, 7
      %v668 = vsub.s32 1, %v667
      %v669 = vrot.slane %v660, %v668
      %v670 = vlaneseq
      %v671 = vshrl.u32 %v670, 7
      %v672 = vsub.s32 2, %v671
      %v673 = vrot.slane %v660, %v672
      %v674 = vlaneseq
      %v675 = vshrl.u32 %v674, 7
      %v676 = vsub.s32 3, %v675
      %v677 = vrot.slane %v660, %v676
      %v678 = vlaneseq
      %v679 = vshrl.u32 %v678, 7
      %v680 = vsub.s32 4, %v679
      %v681 = vrot.slane %v660, %v680
      %v682 = vlaneseq
      %v683 = vshrl.u32 %v682, 7
      %v684 = vsub.s32 5, %v683
      %v685 = vrot.slane %v660, %v684
      %v686 = vlaneseq
      %v687 = vshrl.u32 %v686, 7
      %v688 = vsub.s32 6, %v687
      %v689 = vrot.slane %v660, %v688
      %v690 = vlaneseq
      %v691 = vshrl.u32 %v690, 7
      %v692 = vsub.s32 7, %v691
      %v693 = vrot.slane %v660, %v692
      %v702 = vmul.f32 %v404, %v665
      %v703 = vmul.f32 %v405, %v669
      %v704 = vmul.f32 %v406, %v673
      %v705 = vmul.f32 %v407, %v677
      %v706 = vmul.f32 %v408, %v681
      %v707 = vmul.f32 %v409, %v685
      %v708 = vmul.f32 %v410, %v689
      %v709 = vmul.f32 %v411, %v693
      %v710 = vmul.f32 %v412, %v665
      %v711 = vmul.f32 %v413, %v669
      %v712 = vmul.f32 %v414, %v673
      %v713 = vmul.f32 %v415, %v677
      %v714 = vmul.f32 %v416, %v681
      %v715 = vmul.f32 %v417, %v685
      %v716 = vmul.f32 %v418, %v689
      %v717 = vmul.f32 %v419, %v693
      %v718 = vmul.f32 %v420, %v665
      %v719 = vmul.f32 %v421, %v669
      %v720 = vmul.f32 %v422, %v673
      %v721 = vmul.f32 %v423, %v677
      %v722 = vmul.f32 %v424, %v681
      %v723 = vmul.f32 %v425, %v685
      %v724 = vmul.f32 %v426, %v689
      %v725 = vmul.f32 %v427, %v693
      %v726 = vmul.f32 %v428, %v665
      %v727 = vmul.f32 %v429, %v669
      %v728 = vmul.f32 %v430, %v673
      %v729 = vmul.f32 %v431, %v677
      %v730 = vmul.f32 %v432, %v681
      %v731 = vmul.f32 %v433, %v685
      %v732 = vmul.f32 %v434, %v689
      %v733 = vmul.f32 %v435, %v693
      %v734 = vmul.f32 %v436, %v665
      %v735 = vmul.f32 %v437, %v669
      %v736 = vmul.f32 %v438, %v673
      %v737 = vmul.f32 %v439, %v677
      %v738 = vmul.f32 %v440, %v681
      %v739 = vmul.f32 %v441, %v685
      %v740 = vmul.f32 %v442, %v689
      %v741 = vmul.f32 %v443, %v693
      %v742 = vmul.f32 %v444, %v665
      %v743 = vmul.f32 %v445, %v669
      %v744 = vmul.f32 %v446, %v673
      %v745 = vmul.f32 %v447, %v677
      %v746 = vmul.f32 %v448, %v681
      %v747 = vmul.f32 %v449, %v685
      %v748 = vmul.f32 %v450, %v689
      %v749 = vmul.f32 %v451, %v693
      %v750 = vmul.f32 %v452, %v665
      %v751 = vmul.f32 %v453, %v669
      %v752 = vmul.f32 %v454, %v673
      %v753 = vmul.f32 %v455, %v677
      %v754 = vmul.f32 %v456, %v681
      %v755 = vmul.f32 %v457, %v685
      %v756 = vmul.f32 %v458, %v689
      %v757 = vmul.f32 %v459, %v693
      %v758 = vmul.f32 %v460, %v665
      %v759 = vmul.f32 %v461, %v669
      %v760 = vmul.f32 %v462, %v673
      %v761 = vmul.f32 %v463, %v677
      %v762 = vmul.f32 %v464, %v681
      %v763 = vmul.f32 %v465, %v685
      %v764 = vmul.f32 %v466, %v689
      %v765 = vmul.f32 %v467, %v693
      %v766 = vmul.f32 %v468, %v665
      %v767 = vmul.f32 %v469, %v669
      %v768 = vmul.f32 %v470, %v673
      %v769 = vmul.f32 %v471, %v677
      %v770 = vmul.f32 %v472, %v681
      %v771 = vmul.f32 %v473, %v685
      %v772 = vmul.f32 %v474, %v689
      %v773 = vmul.f32 %v475, %v693
      %v774 = vmul.f32 %v476, %v665
      %v775 = vmul.f32 %v477, %v669
      %v776 = vmul.f32 %v478, %v673
      %v777 = vmul.f32 %v479, %v677
      %v778 = vmul.f32 %v480, %v681
      %v779 = vmul.f32 %v481, %v685
      %v780 = vmul.f32 %v482, %v689
      %v781 = vmul.f32 %v483, %v693
      %v782 = vmul.f32 %v484, %v665
      %v783 = vmul.f32 %v485, %v669
      %v784 = vmul.f32 %v486, %v673
      %v785 = vmul.f32 %v487, %v677
      %v786 = vmul.f32 %v488, %v681
      %v787 = vmul.f32 %v489, %v685
      %v788 = vmul.f32 %v490, %v689
      %v789 = vmul.f32 %v491, %v693
      %v790 = vmul.f32 %v492, %v665
      %v791 = vmul.f32 %v493, %v669
      %v792 = vmul.f32 %v494, %v673
      %v793 = vmul.f32 %v495, %v677
      %v794 = vmul.f32 %v496, %v681
      %v795 = vmul.f32 %v497, %v685
      %v796 = vmul.f32 %v498, %v689
      %v797 = vmul.f32 %v499, %v693
      %v798 = vmul.f32 %v500, %v665
      %v799 = vmul.f32 %v501, %v669
      %v800 = vmul.f32 %v502, %v673
      %v801 = vmul.f32 %v503, %v677
      %v802 = vmul.f32 %v504, %v681
      %v803 = vmul.f32 %v505, %v685
      %v804 = vmul.f32 %v506, %v689
      %v805 = vmul.f32 %v507, %v693
      %v806 = vmul.f32 %v508, %v665
      %v807 = vmul.f32 %v509, %v669
      %v808 = vmul.f32 %v510, %v673
      %v809 = vmul.f32 %v511, %v677
      %v810 = vmul.f32 %v512, %v681
      %v811 = vmul.f32 %v513, %v685
      %v812 = vmul.f32 %v514, %v689
      %v813 = vmul.f32 %v515, %v693
      %v814 = vmul.f32 %v516, %v665
      %v815 = vmul.f32 %v517, %v669
      %v816 = vmul.f32 %v518, %v673
      %v817 = vmul.f32 %v519, %v677
      %v818 = vmul.f32 %v520, %v681
      %v819 = vmul.f32 %v521, %v685
      %v820 = vmul.f32 %v522, %v689
      %v821 = vmul.f32 %v523, %v693
      %v822 = vmul.f32 %v524, %v665
      %v823 = vmul.f32 %v525, %v669
      %v824 = vmul.f32 %v526, %v673
      %v825 = vmul.f32 %v527, %v677
      %v826 = vmul.f32 %v528, %v681
      %v827 = vmul.f32 %v529, %v685
      %v828 = vmul.f32 %v530, %v689
      %v829 = vmul.f32 %v531, %v693
      %v830 = vmul.f32 %v532, %v665
      %v831 = vmul.f32 %v533, %v669
      %v832 = vmul.f32 %v534, %v673
      %v833 = vmul.f32 %v535, %v677
      %v834 = vmul.f32 %v536, %v681
      %v835 = vmul.f32 %v537, %v685
      %v836 = vmul.f32 %v538, %v689
      %v837 = vmul.f32 %v539, %v693
      %v838 = vmul.f32 %v540, %v665
      %v839 = vmul.f32 %v541, %v669
      %v840 = vmul.f32 %v542, %v673
      %v841 = vmul.f32 %v543, %v677
      %v842 = vmul.f32 %v544, %v681
      %v843 = vmul.f32 %v545, %v685
      %v844 = vmul.f32 %v546, %v689
      %v845 = vmul.f32 %v547, %v693
      %v846 = vmul.f32 %v548, %v665
      %v847 = vmul.f32 %v549, %v669
      %v848 = vmul.f32 %v550, %v673
      %v849 = vmul.f32 %v551, %v677
      %v850 = vmul.f32 %v552, %v681
      %v851 = vmul.f32 %v553, %v685
      %v852 = vmul.f32 %v554, %v689
      %v853 = vmul.f32 %v555, %v693
      %v854 = vmul.f32 %v556, %v665
      %v855 = vmul.f32 %v557, %v669
      %v856 = vmul.f32 %v558, %v673
      %v857 = vmul.f32 %v559, %v677
      %v858 = vmul.f32 %v560, %v681
      %v859 = vmul.f32 %v561, %v685
      %v860 = vmul.f32 %v562, %v689
      %v861 = vmul.f32 %v563, %v693
      %v862 = vmul.f32 %v564, %v665
      %v863 = vmul.f32 %v565, %v669
      %v864 = vmul.f32 %v566, %v673
      %v865 = vmul.f32 %v567, %v677
      %v866 = vmul.f32 %v568, %v681
      %v867 = vmul.f32 %v569, %v685
      %v868 = vmul.f32 %v570, %v689
      %v869 = vmul.f32 %v571, %v693
      %v870 = vmul.f32 %v572, %v665
      %v871 = vmul.f32 %v573, %v669
      %v872 = vmul.f32 %v574, %v673
      %v873 = vmul.f32 %v575, %v677
      %v874 = vmul.f32 %v576, %v681
      %v875 = vmul.f32 %v577, %v685
      %v876 = vmul.f32 %v578, %v689
      %v877 = vmul.f32 %v579, %v693
      %v878 = vmul.f32 %v580, %v665
      %v879 = vmul.f32 %v581, %v669
      %v880 = vmul.f32 %v582, %v673
      %v881 = vmul.f32 %v583, %v677
      %v882 = vmul.f32 %v584, %v681
      %v883 = vmul.f32 %v585, %v685
      %v884 = vmul.f32 %v586, %v689
      %v885 = vmul.f32 %v587, %v693
      %v886 = vmul.f32 %v588, %v665
      %v887 = vmul.f32 %v589, %v669
      %v888 = vmul.f32 %v590, %v673
      %v889 = vmul.f32 %v591, %v677
      %v890 = vmul.f32 %v592, %v681
      %v891 = vmul.f32 %v593, %v685
      %v892 = vmul.f32 %v594, %v689
      %v893 = vmul.f32 %v595, %v693
      %v894 = vmul.f32 %v596, %v665
      %v895 = vmul.f32 %v597, %v669
      %v896 = vmul.f32 %v598, %v673
      %v897 = vmul.f32 %v599, %v677
      %v898 = vmul.f32 %v600, %v681
      %v899 = vmul.f32 %v601, %v685
      %v900 = vmul.f32 %v602, %v689
      %v901 = vmul.f32 %v603, %v693
      %v902 = vmul.f32 %v604, %v665
      %v903 = vmul.f32 %v605, %v669
      %v904 = vmul.f32 %v606, %v673
      %v905 = vmul.f32 %v607, %v677
      %v906 = vmul.f32 %v608, %v681
      %v907 = vmul.f32 %v609, %v685
      %v908 = vmul.f32 %v610, %v689
      %v909 = vmul.f32 %v611, %v693
      %v910 = vmul.f32 %v612, %v665
      %v911 = vmul.f32 %v613, %v669
      %v912 = vmul.f32 %v614, %v673
      %v913 = vmul.f32 %v615, %v677
      %v914 = vmul.f32 %v616, %v681
      %v915 = vmul.f32 %v617, %v685
      %v916 = vmul.f32 %v618, %v689
      %v917 = vmul.f32 %v619, %v693
      %v918 = vmul.f32 %v620, %v665
      %v919 = vmul.f32 %v621, %v669
      %v920 = vmul.f32 %v622, %v673
      %v921 = vmul.f32 %v623, %v677
      %v922 = vmul.f32 %v624, %v681
      %v923 = vmul.f32 %v625, %v685
      %v924 = vmul.f32 %v626, %v689
      %v925 = vmul.f32 %v627, %v693
      %v926 = vmul.f32 %v628, %v665
      %v927 = vmul.f32 %v629, %v669
      %v928 = vmul.f32 %v630, %v673
      %v929 = vmul.f32 %v631, %v677
      %v930 = vmul.f32 %v632, %v681
      %v931 = vmul.f32 %v633, %v685
      %v932 = vmul.f32 %v634, %v689
      %v933 = vmul.f32 %v635, %v693
      %v934 = vmul.f32 %v636, %v665
      %v935 = vmul.f32 %v637, %v669
      %v936 = vmul.f32 %v638, %v673
      %v937 = vmul.f32 %v639, %v677
      %v938 = vmul.f32 %v640, %v681
      %v939 = vmul.f32 %v641, %v685
      %v940 = vmul.f32 %v642, %v689
      %v941 = vmul.f32 %v643, %v693
      %v942 = vmul.f32 %v644, %v665
      %v943 = vmul.f32 %v645, %v669
      %v944 = vmul.f32 %v646, %v673
      %v945 = vmul.f32 %v647, %v677
      %v946 = vmul.f32 %v648, %v681
      %v947 = vmul.f32 %v649, %v685
      %v948 = vmul.f32 %v650, %v689
      %v949 = vmul.f32 %v651, %v693
      %v950 = vmul.f32 %v652, %v665
      %v951 = vmul.f32 %v653, %v669
      %v952 = vmul.f32 %v654, %v673
      %v953 = vmul.f32 %v655, %v677
      %v954 = vmul.f32 %v656, %v681
      %v955 = vmul.f32 %v657, %v685
      %v956 = vmul.f32 %v658, %v689
      %v957 = vmul.f32 %v659, %v693
      %v958 = vld [vmem:[%s2] sm:$0xff]
      %v960 = vlaneseq
      %v961 = vshrl.u32 %v960, 7
      %v962 = vsub.s32 0, %v961
      %v963 = vrot.slane %v958, %v962
      %v964 = vlaneseq
      %v965 = vshrl.u32 %v964, 7
      %v966 = vsub.s32 1, %v965
      %v967 = vrot.slane %v958, %v966
      %v968 = vlaneseq
      %v969 = vshrl.u32 %v968, 7
      %v970 = vsub.s32 2, %v969
      %v971 = vrot.slane %v958, %v970
      %v972 = vlaneseq
      %v973 = vshrl.u32 %v972, 7
      %v974 = vsub.s32 3, %v973
      %v975 = vrot.slane %v958, %v974
      %v976 = vlaneseq
      %v977 = vshrl.u32 %v976, 7
      %v978 = vsub.s32 4, %v977
      %v979 = vrot.slane %v958, %v978
      %v980 = vlaneseq
      %v981 = vshrl.u32 %v980, 7
      %v982 = vsub.s32 5, %v981
      %v983 = vrot.slane %v958, %v982
      %v984 = vlaneseq
      %v985 = vshrl.u32 %v984, 7
      %v986 = vsub.s32 6, %v985
      %v987 = vrot.slane %v958, %v986
      %v988 = vlaneseq
      %v989 = vshrl.u32 %v988, 7
      %v990 = vsub.s32 7, %v989
      %v991 = vrot.slane %v958, %v990
      %v1000 = vadd.f32 %v702, %v963
      %v1001 = vadd.f32 %v703, %v967
      %v1002 = vadd.f32 %v704, %v971
      %v1003 = vadd.f32 %v705, %v975
      %v1004 = vadd.f32 %v706, %v979
      %v1005 = vadd.f32 %v707, %v983
      %v1006 = vadd.f32 %v708, %v987
      %v1007 = vadd.f32 %v709, %v991
      %v1008 = vadd.f32 %v710, %v963
      %v1009 = vadd.f32 %v711, %v967
      %v1010 = vadd.f32 %v712, %v971
      %v1011 = vadd.f32 %v713, %v975
      %v1012 = vadd.f32 %v714, %v979
      %v1013 = vadd.f32 %v715, %v983
      %v1014 = vadd.f32 %v716, %v987
      %v1015 = vadd.f32 %v717, %v991
      %v1016 = vadd.f32 %v718, %v963
      %v1017 = vadd.f32 %v719, %v967
      %v1018 = vadd.f32 %v720, %v971
      %v1019 = vadd.f32 %v721, %v975
      %v1020 = vadd.f32 %v722, %v979
      %v1021 = vadd.f32 %v723, %v983
      %v1022 = vadd.f32 %v724, %v987
      %v1023 = vadd.f32 %v725, %v991
      %v1024 = vadd.f32 %v726, %v963
      %v1025 = vadd.f32 %v727, %v967
      %v1026 = vadd.f32 %v728, %v971
      %v1027 = vadd.f32 %v729, %v975
      %v1028 = vadd.f32 %v730, %v979
      %v1029 = vadd.f32 %v731, %v983
      %v1030 = vadd.f32 %v732, %v987
      %v1031 = vadd.f32 %v733, %v991
      %v1032 = vadd.f32 %v734, %v963
      %v1033 = vadd.f32 %v735, %v967
      %v1034 = vadd.f32 %v736, %v971
      %v1035 = vadd.f32 %v737, %v975
      %v1036 = vadd.f32 %v738, %v979
      %v1037 = vadd.f32 %v739, %v983
      %v1038 = vadd.f32 %v740, %v987
      %v1039 = vadd.f32 %v741, %v991
      %v1040 = vadd.f32 %v742, %v963
      %v1041 = vadd.f32 %v743, %v967
      %v1042 = vadd.f32 %v744, %v971
      %v1043 = vadd.f32 %v745, %v975
      %v1044 = vadd.f32 %v746, %v979
      %v1045 = vadd.f32 %v747, %v983
      %v1046 = vadd.f32 %v748, %v987
      %v1047 = vadd.f32 %v749, %v991
      %v1048 = vadd.f32 %v750, %v963
      %v1049 = vadd.f32 %v751, %v967
      %v1050 = vadd.f32 %v752, %v971
      %v1051 = vadd.f32 %v753, %v975
      %v1052 = vadd.f32 %v754, %v979
      %v1053 = vadd.f32 %v755, %v983
      %v1054 = vadd.f32 %v756, %v987
      %v1055 = vadd.f32 %v757, %v991
      %v1056 = vadd.f32 %v758, %v963
      %v1057 = vadd.f32 %v759, %v967
      %v1058 = vadd.f32 %v760, %v971
      %v1059 = vadd.f32 %v761, %v975
      %v1060 = vadd.f32 %v762, %v979
      %v1061 = vadd.f32 %v763, %v983
      %v1062 = vadd.f32 %v764, %v987
      %v1063 = vadd.f32 %v765, %v991
      %v1064 = vadd.f32 %v766, %v963
      %v1065 = vadd.f32 %v767, %v967
      %v1066 = vadd.f32 %v768, %v971
      %v1067 = vadd.f32 %v769, %v975
      %v1068 = vadd.f32 %v770, %v979
      %v1069 = vadd.f32 %v771, %v983
      %v1070 = vadd.f32 %v772, %v987
      %v1071 = vadd.f32 %v773, %v991
      %v1072 = vadd.f32 %v774, %v963
      %v1073 = vadd.f32 %v775, %v967
      %v1074 = vadd.f32 %v776, %v971
      %v1075 = vadd.f32 %v777, %v975
      %v1076 = vadd.f32 %v778, %v979
      %v1077 = vadd.f32 %v779, %v983
      %v1078 = vadd.f32 %v780, %v987
      %v1079 = vadd.f32 %v781, %v991
      %v1080 = vadd.f32 %v782, %v963
      %v1081 = vadd.f32 %v783, %v967
      %v1082 = vadd.f32 %v784, %v971
      %v1083 = vadd.f32 %v785, %v975
      %v1084 = vadd.f32 %v786, %v979
      %v1085 = vadd.f32 %v787, %v983
      %v1086 = vadd.f32 %v788, %v987
      %v1087 = vadd.f32 %v789, %v991
      %v1088 = vadd.f32 %v790, %v963
      %v1089 = vadd.f32 %v791, %v967
      %v1090 = vadd.f32 %v792, %v971
      %v1091 = vadd.f32 %v793, %v975
      %v1092 = vadd.f32 %v794, %v979
      %v1093 = vadd.f32 %v795, %v983
      %v1094 = vadd.f32 %v796, %v987
      %v1095 = vadd.f32 %v797, %v991
      %v1096 = vadd.f32 %v798, %v963
      %v1097 = vadd.f32 %v799, %v967
      %v1098 = vadd.f32 %v800, %v971
      %v1099 = vadd.f32 %v801, %v975
      %v1100 = vadd.f32 %v802, %v979
      %v1101 = vadd.f32 %v803, %v983
      %v1102 = vadd.f32 %v804, %v987
      %v1103 = vadd.f32 %v805, %v991
      %v1104 = vadd.f32 %v806, %v963
      %v1105 = vadd.f32 %v807, %v967
      %v1106 = vadd.f32 %v808, %v971
      %v1107 = vadd.f32 %v809, %v975
      %v1108 = vadd.f32 %v810, %v979
      %v1109 = vadd.f32 %v811, %v983
      %v1110 = vadd.f32 %v812, %v987
      %v1111 = vadd.f32 %v813, %v991
      %v1112 = vadd.f32 %v814, %v963
      %v1113 = vadd.f32 %v815, %v967
      %v1114 = vadd.f32 %v816, %v971
      %v1115 = vadd.f32 %v817, %v975
      %v1116 = vadd.f32 %v818, %v979
      %v1117 = vadd.f32 %v819, %v983
      %v1118 = vadd.f32 %v820, %v987
      %v1119 = vadd.f32 %v821, %v991
      %v1120 = vadd.f32 %v822, %v963
      %v1121 = vadd.f32 %v823, %v967
      %v1122 = vadd.f32 %v824, %v971
      %v1123 = vadd.f32 %v825, %v975
      %v1124 = vadd.f32 %v826, %v979
      %v1125 = vadd.f32 %v827, %v983
      %v1126 = vadd.f32 %v828, %v987
      %v1127 = vadd.f32 %v829, %v991
      %v1128 = vadd.f32 %v830, %v963
      %v1129 = vadd.f32 %v831, %v967
      %v1130 = vadd.f32 %v832, %v971
      %v1131 = vadd.f32 %v833, %v975
      %v1132 = vadd.f32 %v834, %v979
      %v1133 = vadd.f32 %v835, %v983
      %v1134 = vadd.f32 %v836, %v987
      %v1135 = vadd.f32 %v837, %v991
      %v1136 = vadd.f32 %v838, %v963
      %v1137 = vadd.f32 %v839, %v967
      %v1138 = vadd.f32 %v840, %v971
      %v1139 = vadd.f32 %v841, %v975
      %v1140 = vadd.f32 %v842, %v979
      %v1141 = vadd.f32 %v843, %v983
      %v1142 = vadd.f32 %v844, %v987
      %v1143 = vadd.f32 %v845, %v991
      %v1144 = vadd.f32 %v846, %v963
      %v1145 = vadd.f32 %v847, %v967
      %v1146 = vadd.f32 %v848, %v971
      %v1147 = vadd.f32 %v849, %v975
      %v1148 = vadd.f32 %v850, %v979
      %v1149 = vadd.f32 %v851, %v983
      %v1150 = vadd.f32 %v852, %v987
      %v1151 = vadd.f32 %v853, %v991
      %v1152 = vadd.f32 %v854, %v963
      %v1153 = vadd.f32 %v855, %v967
      %v1154 = vadd.f32 %v856, %v971
      %v1155 = vadd.f32 %v857, %v975
      %v1156 = vadd.f32 %v858, %v979
      %v1157 = vadd.f32 %v859, %v983
      %v1158 = vadd.f32 %v860, %v987
      %v1159 = vadd.f32 %v861, %v991
      %v1160 = vadd.f32 %v862, %v963
      %v1161 = vadd.f32 %v863, %v967
      %v1162 = vadd.f32 %v864, %v971
      %v1163 = vadd.f32 %v865, %v975
      %v1164 = vadd.f32 %v866, %v979
      %v1165 = vadd.f32 %v867, %v983
      %v1166 = vadd.f32 %v868, %v987
      %v1167 = vadd.f32 %v869, %v991
      %v1168 = vadd.f32 %v870, %v963
      %v1169 = vadd.f32 %v871, %v967
      %v1170 = vadd.f32 %v872, %v971
      %v1171 = vadd.f32 %v873, %v975
      %v1172 = vadd.f32 %v874, %v979
      %v1173 = vadd.f32 %v875, %v983
      %v1174 = vadd.f32 %v876, %v987
      %v1175 = vadd.f32 %v877, %v991
      %v1176 = vadd.f32 %v878, %v963
      %v1177 = vadd.f32 %v879, %v967
      %v1178 = vadd.f32 %v880, %v971
      %v1179 = vadd.f32 %v881, %v975
      %v1180 = vadd.f32 %v882, %v979
      %v1181 = vadd.f32 %v883, %v983
      %v1182 = vadd.f32 %v884, %v987
      %v1183 = vadd.f32 %v885, %v991
      %v1184 = vadd.f32 %v886, %v963
      %v1185 = vadd.f32 %v887, %v967
      %v1186 = vadd.f32 %v888, %v971
      %v1187 = vadd.f32 %v889, %v975
      %v1188 = vadd.f32 %v890, %v979
      %v1189 = vadd.f32 %v891, %v983
      %v1190 = vadd.f32 %v892, %v987
      %v1191 = vadd.f32 %v893, %v991
      %v1192 = vadd.f32 %v894, %v963
      %v1193 = vadd.f32 %v895, %v967
      %v1194 = vadd.f32 %v896, %v971
      %v1195 = vadd.f32 %v897, %v975
      %v1196 = vadd.f32 %v898, %v979
      %v1197 = vadd.f32 %v899, %v983
      %v1198 = vadd.f32 %v900, %v987
      %v1199 = vadd.f32 %v901, %v991
      %v1200 = vadd.f32 %v902, %v963
      %v1201 = vadd.f32 %v903, %v967
      %v1202 = vadd.f32 %v904, %v971
      %v1203 = vadd.f32 %v905, %v975
      %v1204 = vadd.f32 %v906, %v979
      %v1205 = vadd.f32 %v907, %v983
      %v1206 = vadd.f32 %v908, %v987
      %v1207 = vadd.f32 %v909, %v991
      %v1208 = vadd.f32 %v910, %v963
      %v1209 = vadd.f32 %v911, %v967
      %v1210 = vadd.f32 %v912, %v971
      %v1211 = vadd.f32 %v913, %v975
      %v1212 = vadd.f32 %v914, %v979
      %v1213 = vadd.f32 %v915, %v983
      %v1214 = vadd.f32 %v916, %v987
      %v1215 = vadd.f32 %v917, %v991
      %v1216 = vadd.f32 %v918, %v963
      %v1217 = vadd.f32 %v919, %v967
      %v1218 = vadd.f32 %v920, %v971
      %v1219 = vadd.f32 %v921, %v975
      %v1220 = vadd.f32 %v922, %v979
      %v1221 = vadd.f32 %v923, %v983
      %v1222 = vadd.f32 %v924, %v987
      %v1223 = vadd.f32 %v925, %v991
      %v1224 = vadd.f32 %v926, %v963
      %v1225 = vadd.f32 %v927, %v967
      %v1226 = vadd.f32 %v928, %v971
      %v1227 = vadd.f32 %v929, %v975
      %v1228 = vadd.f32 %v930, %v979
      %v1229 = vadd.f32 %v931, %v983
      %v1230 = vadd.f32 %v932, %v987
      %v1231 = vadd.f32 %v933, %v991
      %v1232 = vadd.f32 %v934, %v963
      %v1233 = vadd.f32 %v935, %v967
      %v1234 = vadd.f32 %v936, %v971
      %v1235 = vadd.f32 %v937, %v975
      %v1236 = vadd.f32 %v938, %v979
      %v1237 = vadd.f32 %v939, %v983
      %v1238 = vadd.f32 %v940, %v987
      %v1239 = vadd.f32 %v941, %v991
      %v1240 = vadd.f32 %v942, %v963
      %v1241 = vadd.f32 %v943, %v967
      %v1242 = vadd.f32 %v944, %v971
      %v1243 = vadd.f32 %v945, %v975
      %v1244 = vadd.f32 %v946, %v979
      %v1245 = vadd.f32 %v947, %v983
      %v1246 = vadd.f32 %v948, %v987
      %v1247 = vadd.f32 %v949, %v991
      %v1248 = vadd.f32 %v950, %v963
      %v1249 = vadd.f32 %v951, %v967
      %v1250 = vadd.f32 %v952, %v971
      %v1251 = vadd.f32 %v953, %v975
      %v1252 = vadd.f32 %v954, %v979
      %v1253 = vadd.f32 %v955, %v983
      %v1254 = vadd.f32 %v956, %v987
      %v1255 = vadd.f32 %v957, %v991
      %v1256 = vmax.f32 %v1000, 0.0
      %v1257 = vmax.f32 %v1001, 0.0
      %v1258 = vmax.f32 %v1002, 0.0
      %v1259 = vmax.f32 %v1003, 0.0
      %v1260 = vmax.f32 %v1004, 0.0
      %v1261 = vmax.f32 %v1005, 0.0
      %v1262 = vmax.f32 %v1006, 0.0
      %v1263 = vmax.f32 %v1007, 0.0
      %v1264 = vmax.f32 %v1008, 0.0
      %v1265 = vmax.f32 %v1009, 0.0
      %v1266 = vmax.f32 %v1010, 0.0
      %v1267 = vmax.f32 %v1011, 0.0
      %v1268 = vmax.f32 %v1012, 0.0
      %v1269 = vmax.f32 %v1013, 0.0
      %v1270 = vmax.f32 %v1014, 0.0
      %v1271 = vmax.f32 %v1015, 0.0
      %v1272 = vmax.f32 %v1016, 0.0
      %v1273 = vmax.f32 %v1017, 0.0
      %v1274 = vmax.f32 %v1018, 0.0
      %v1275 = vmax.f32 %v1019, 0.0
      %v1276 = vmax.f32 %v1020, 0.0
      %v1277 = vmax.f32 %v1021, 0.0
      %v1278 = vmax.f32 %v1022, 0.0
      %v1279 = vmax.f32 %v1023, 0.0
      %v1280 = vmax.f32 %v1024, 0.0
      %v1281 = vmax.f32 %v1025, 0.0
      %v1282 = vmax.f32 %v1026, 0.0
      %v1283 = vmax.f32 %v1027, 0.0
      %v1284 = vmax.f32 %v1028, 0.0
      %v1285 = vmax.f32 %v1029, 0.0
      %v1286 = vmax.f32 %v1030, 0.0
      %v1287 = vmax.f32 %v1031, 0.0
      %v1288 = vmax.f32 %v1032, 0.0
      %v1289 = vmax.f32 %v1033, 0.0
      %v1290 = vmax.f32 %v1034, 0.0
      %v1291 = vmax.f32 %v1035, 0.0
      %v1292 = vmax.f32 %v1036, 0.0
      %v1293 = vmax.f32 %v1037, 0.0
      %v1294 = vmax.f32 %v1038, 0.0
      %v1295 = vmax.f32 %v1039, 0.0
      %v1296 = vmax.f32 %v1040, 0.0
      %v1297 = vmax.f32 %v1041, 0.0
      %v1298 = vmax.f32 %v1042, 0.0
      %v1299 = vmax.f32 %v1043, 0.0
      %v1300 = vmax.f32 %v1044, 0.0
      %v1301 = vmax.f32 %v1045, 0.0
      %v1302 = vmax.f32 %v1046, 0.0
      %v1303 = vmax.f32 %v1047, 0.0
      %v1304 = vmax.f32 %v1048, 0.0
      %v1305 = vmax.f32 %v1049, 0.0
      %v1306 = vmax.f32 %v1050, 0.0
      %v1307 = vmax.f32 %v1051, 0.0
      %v1308 = vmax.f32 %v1052, 0.0
      %v1309 = vmax.f32 %v1053, 0.0
      %v1310 = vmax.f32 %v1054, 0.0
      %v1311 = vmax.f32 %v1055, 0.0
      %v1312 = vmax.f32 %v1056, 0.0
      %v1313 = vmax.f32 %v1057, 0.0
      %v1314 = vmax.f32 %v1058, 0.0
      %v1315 = vmax.f32 %v1059, 0.0
      %v1316 = vmax.f32 %v1060, 0.0
      %v1317 = vmax.f32 %v1061, 0.0
      %v1318 = vmax.f32 %v1062, 0.0
      %v1319 = vmax.f32 %v1063, 0.0
      %v1320 = vmax.f32 %v1064, 0.0
      %v1321 = vmax.f32 %v1065, 0.0
      %v1322 = vmax.f32 %v1066, 0.0
      %v1323 = vmax.f32 %v1067, 0.0
      %v1324 = vmax.f32 %v1068, 0.0
      %v1325 = vmax.f32 %v1069, 0.0
      %v1326 = vmax.f32 %v1070, 0.0
      %v1327 = vmax.f32 %v1071, 0.0
      %v1328 = vmax.f32 %v1072, 0.0
      %v1329 = vmax.f32 %v1073, 0.0
      %v1330 = vmax.f32 %v1074, 0.0
      %v1331 = vmax.f32 %v1075, 0.0
      %v1332 = vmax.f32 %v1076, 0.0
      %v1333 = vmax.f32 %v1077, 0.0
      %v1334 = vmax.f32 %v1078, 0.0
      %v1335 = vmax.f32 %v1079, 0.0
      %v1336 = vmax.f32 %v1080, 0.0
      %v1337 = vmax.f32 %v1081, 0.0
      %v1338 = vmax.f32 %v1082, 0.0
      %v1339 = vmax.f32 %v1083, 0.0
      %v1340 = vmax.f32 %v1084, 0.0
      %v1341 = vmax.f32 %v1085, 0.0
      %v1342 = vmax.f32 %v1086, 0.0
      %v1343 = vmax.f32 %v1087, 0.0
      %v1344 = vmax.f32 %v1088, 0.0
      %v1345 = vmax.f32 %v1089, 0.0
      %v1346 = vmax.f32 %v1090, 0.0
      %v1347 = vmax.f32 %v1091, 0.0
      %v1348 = vmax.f32 %v1092, 0.0
      %v1349 = vmax.f32 %v1093, 0.0
      %v1350 = vmax.f32 %v1094, 0.0
      %v1351 = vmax.f32 %v1095, 0.0
      %v1352 = vmax.f32 %v1096, 0.0
      %v1353 = vmax.f32 %v1097, 0.0
      %v1354 = vmax.f32 %v1098, 0.0
      %v1355 = vmax.f32 %v1099, 0.0
      %v1356 = vmax.f32 %v1100, 0.0
      %v1357 = vmax.f32 %v1101, 0.0
      %v1358 = vmax.f32 %v1102, 0.0
      %v1359 = vmax.f32 %v1103, 0.0
      %v1360 = vmax.f32 %v1104, 0.0
      %v1361 = vmax.f32 %v1105, 0.0
      %v1362 = vmax.f32 %v1106, 0.0
      %v1363 = vmax.f32 %v1107, 0.0
      %v1364 = vmax.f32 %v1108, 0.0
      %v1365 = vmax.f32 %v1109, 0.0
      %v1366 = vmax.f32 %v1110, 0.0
      %v1367 = vmax.f32 %v1111, 0.0
      %v1368 = vmax.f32 %v1112, 0.0
      %v1369 = vmax.f32 %v1113, 0.0
      %v1370 = vmax.f32 %v1114, 0.0
      %v1371 = vmax.f32 %v1115, 0.0
      %v1372 = vmax.f32 %v1116, 0.0
      %v1373 = vmax.f32 %v1117, 0.0
      %v1374 = vmax.f32 %v1118, 0.0
      %v1375 = vmax.f32 %v1119, 0.0
      %v1376 = vmax.f32 %v1120, 0.0
      %v1377 = vmax.f32 %v1121, 0.0
      %v1378 = vmax.f32 %v1122, 0.0
      %v1379 = vmax.f32 %v1123, 0.0
      %v1380 = vmax.f32 %v1124, 0.0
      %v1381 = vmax.f32 %v1125, 0.0
      %v1382 = vmax.f32 %v1126, 0.0
      %v1383 = vmax.f32 %v1127, 0.0
      %v1384 = vmax.f32 %v1128, 0.0
      %v1385 = vmax.f32 %v1129, 0.0
      %v1386 = vmax.f32 %v1130, 0.0
      %v1387 = vmax.f32 %v1131, 0.0
      %v1388 = vmax.f32 %v1132, 0.0
      %v1389 = vmax.f32 %v1133, 0.0
      %v1390 = vmax.f32 %v1134, 0.0
      %v1391 = vmax.f32 %v1135, 0.0
      %v1392 = vmax.f32 %v1136, 0.0
      %v1393 = vmax.f32 %v1137, 0.0
      %v1394 = vmax.f32 %v1138, 0.0
      %v1395 = vmax.f32 %v1139, 0.0
      %v1396 = vmax.f32 %v1140, 0.0
      %v1397 = vmax.f32 %v1141, 0.0
      %v1398 = vmax.f32 %v1142, 0.0
      %v1399 = vmax.f32 %v1143, 0.0
      %v1400 = vmax.f32 %v1144, 0.0
      %v1401 = vmax.f32 %v1145, 0.0
      %v1402 = vmax.f32 %v1146, 0.0
      %v1403 = vmax.f32 %v1147, 0.0
      %v1404 = vmax.f32 %v1148, 0.0
      %v1405 = vmax.f32 %v1149, 0.0
      %v1406 = vmax.f32 %v1150, 0.0
      %v1407 = vmax.f32 %v1151, 0.0
      %v1408 = vmax.f32 %v1152, 0.0
      %v1409 = vmax.f32 %v1153, 0.0
      %v1410 = vmax.f32 %v1154, 0.0
      %v1411 = vmax.f32 %v1155, 0.0
      %v1412 = vmax.f32 %v1156, 0.0
      %v1413 = vmax.f32 %v1157, 0.0
      %v1414 = vmax.f32 %v1158, 0.0
      %v1415 = vmax.f32 %v1159, 0.0
      %v1416 = vmax.f32 %v1160, 0.0
      %v1417 = vmax.f32 %v1161, 0.0
      %v1418 = vmax.f32 %v1162, 0.0
      %v1419 = vmax.f32 %v1163, 0.0
      %v1420 = vmax.f32 %v1164, 0.0
      %v1421 = vmax.f32 %v1165, 0.0
      %v1422 = vmax.f32 %v1166, 0.0
      %v1423 = vmax.f32 %v1167, 0.0
      %v1424 = vmax.f32 %v1168, 0.0
      %v1425 = vmax.f32 %v1169, 0.0
      %v1426 = vmax.f32 %v1170, 0.0
      %v1427 = vmax.f32 %v1171, 0.0
      %v1428 = vmax.f32 %v1172, 0.0
      %v1429 = vmax.f32 %v1173, 0.0
      %v1430 = vmax.f32 %v1174, 0.0
      %v1431 = vmax.f32 %v1175, 0.0
      %v1432 = vmax.f32 %v1176, 0.0
      %v1433 = vmax.f32 %v1177, 0.0
      %v1434 = vmax.f32 %v1178, 0.0
      %v1435 = vmax.f32 %v1179, 0.0
      %v1436 = vmax.f32 %v1180, 0.0
      %v1437 = vmax.f32 %v1181, 0.0
      %v1438 = vmax.f32 %v1182, 0.0
      %v1439 = vmax.f32 %v1183, 0.0
      %v1440 = vmax.f32 %v1184, 0.0
      %v1441 = vmax.f32 %v1185, 0.0
      %v1442 = vmax.f32 %v1186, 0.0
      %v1443 = vmax.f32 %v1187, 0.0
      %v1444 = vmax.f32 %v1188, 0.0
      %v1445 = vmax.f32 %v1189, 0.0
      %v1446 = vmax.f32 %v1190, 0.0
      %v1447 = vmax.f32 %v1191, 0.0
      %v1448 = vmax.f32 %v1192, 0.0
      %v1449 = vmax.f32 %v1193, 0.0
      %v1450 = vmax.f32 %v1194, 0.0
      %v1451 = vmax.f32 %v1195, 0.0
      %v1452 = vmax.f32 %v1196, 0.0
      %v1453 = vmax.f32 %v1197, 0.0
      %v1454 = vmax.f32 %v1198, 0.0
      %v1455 = vmax.f32 %v1199, 0.0
      %v1456 = vmax.f32 %v1200, 0.0
      %v1457 = vmax.f32 %v1201, 0.0
      %v1458 = vmax.f32 %v1202, 0.0
      %v1459 = vmax.f32 %v1203, 0.0
      %v1460 = vmax.f32 %v1204, 0.0
      %v1461 = vmax.f32 %v1205, 0.0
      %v1462 = vmax.f32 %v1206, 0.0
      %v1463 = vmax.f32 %v1207, 0.0
      %v1464 = vmax.f32 %v1208, 0.0
      %v1465 = vmax.f32 %v1209, 0.0
      %v1466 = vmax.f32 %v1210, 0.0
      %v1467 = vmax.f32 %v1211, 0.0
      %v1468 = vmax.f32 %v1212, 0.0
      %v1469 = vmax.f32 %v1213, 0.0
      %v1470 = vmax.f32 %v1214, 0.0
      %v1471 = vmax.f32 %v1215, 0.0
      %v1472 = vmax.f32 %v1216, 0.0
      %v1473 = vmax.f32 %v1217, 0.0
      %v1474 = vmax.f32 %v1218, 0.0
      %v1475 = vmax.f32 %v1219, 0.0
      %v1476 = vmax.f32 %v1220, 0.0
      %v1477 = vmax.f32 %v1221, 0.0
      %v1478 = vmax.f32 %v1222, 0.0
      %v1479 = vmax.f32 %v1223, 0.0
      %v1480 = vmax.f32 %v1224, 0.0
      %v1481 = vmax.f32 %v1225, 0.0
      %v1482 = vmax.f32 %v1226, 0.0
      %v1483 = vmax.f32 %v1227, 0.0
      %v1484 = vmax.f32 %v1228, 0.0
      %v1485 = vmax.f32 %v1229, 0.0
      %v1486 = vmax.f32 %v1230, 0.0
      %v1487 = vmax.f32 %v1231, 0.0
      %v1488 = vmax.f32 %v1232, 0.0
      %v1489 = vmax.f32 %v1233, 0.0
      %v1490 = vmax.f32 %v1234, 0.0
      %v1491 = vmax.f32 %v1235, 0.0
      %v1492 = vmax.f32 %v1236, 0.0
      %v1493 = vmax.f32 %v1237, 0.0
      %v1494 = vmax.f32 %v1238, 0.0
      %v1495 = vmax.f32 %v1239, 0.0
      %v1496 = vmax.f32 %v1240, 0.0
      %v1497 = vmax.f32 %v1241, 0.0
      %v1498 = vmax.f32 %v1242, 0.0
      %v1499 = vmax.f32 %v1243, 0.0
      %v1500 = vmax.f32 %v1244, 0.0
      %v1501 = vmax.f32 %v1245, 0.0
      %v1502 = vmax.f32 %v1246, 0.0
      %v1503 = vmax.f32 %v1247, 0.0
      %v1504 = vmax.f32 %v1248, 0.0
      %v1505 = vmax.f32 %v1249, 0.0
      %v1506 = vmax.f32 %v1250, 0.0
      %v1507 = vmax.f32 %v1251, 0.0
      %v1508 = vmax.f32 %v1252, 0.0
      %v1509 = vmax.f32 %v1253, 0.0
      %v1510 = vmax.f32 %v1254, 0.0
      %v1511 = vmax.f32 %v1255, 0.0
      %s1512 = smul.u32 %s18, 256
      %v1513 = vlaneseq
      %v1514 = vshrl.u32 %v1513, 7
      %v1515 = vadd.s32 %v1514, 8
      %v1516 = vadd.s32 %v1514, 16
      %v1517 = vadd.s32 %v1514, 24
      %v1518 = vadd.s32 %v1514, 32
      %v1519 = vadd.s32 %v1514, 40
      %v1520 = vadd.s32 %v1514, 48
      %v1521 = vadd.s32 %v1514, 56
      %v1522 = vadd.s32 %v1514, 64
      %v1523 = vadd.s32 %v1514, 72
      %v1524 = vadd.s32 %v1514, 80
      %v1525 = vadd.s32 %v1514, 88
      %v1526 = vadd.s32 %v1514, 96
      %v1527 = vadd.s32 %v1514, 104
      %v1528 = vadd.s32 %v1514, 112
      %v1529 = vadd.s32 %v1514, 120
      %v1530 = vadd.s32 %v1514, 128
      %v1531 = vadd.s32 %v1514, 136
      %v1532 = vadd.s32 %v1514, 144
      %v1533 = vadd.s32 %v1514, 152
      %v1534 = vadd.s32 %v1514, 160
      %v1535 = vadd.s32 %v1514, 168
      %v1536 = vadd.s32 %v1514, 176
      %v1537 = vadd.s32 %v1514, 184
      %v1538 = vadd.s32 %v1514, 192
      %v1539 = vadd.s32 %v1514, 200
      %v1540 = vadd.s32 %v1514, 208
      %v1541 = vadd.s32 %v1514, 216
      %v1542 = vadd.s32 %v1514, 224
      %v1543 = vadd.s32 %v1514, 232
      %v1544 = vadd.s32 %v1514, 240
      %v1545 = vadd.s32 %v1514, 248
      %v1546 = vstv %s1512
      %v1547 = vadd.s32 %v1546, %v1514
      %v1548 = vadd.s32 %v1546, %v1515
      %v1549 = vadd.s32 %v1546, %v1516
      %v1550 = vadd.s32 %v1546, %v1517
      %v1551 = vadd.s32 %v1546, %v1518
      %v1552 = vadd.s32 %v1546, %v1519
      %v1553 = vadd.s32 %v1546, %v1520
      %v1554 = vadd.s32 %v1546, %v1521
      %v1555 = vadd.s32 %v1546, %v1522
      %v1556 = vadd.s32 %v1546, %v1523
      %v1557 = vadd.s32 %v1546, %v1524
      %v1558 = vadd.s32 %v1546, %v1525
      %v1559 = vadd.s32 %v1546, %v1526
      %v1560 = vadd.s32 %v1546, %v1527
      %v1561 = vadd.s32 %v1546, %v1528
      %v1562 = vadd.s32 %v1546, %v1529
      %v1563 = vadd.s32 %v1546, %v1530
      %v1564 = vadd.s32 %v1546, %v1531
      %v1565 = vadd.s32 %v1546, %v1532
      %v1566 = vadd.s32 %v1546, %v1533
      %v1567 = vadd.s32 %v1546, %v1534
      %v1568 = vadd.s32 %v1546, %v1535
      %v1569 = vadd.s32 %v1546, %v1536
      %v1570 = vadd.s32 %v1546, %v1537
      %v1571 = vadd.s32 %v1546, %v1538
      %v1572 = vadd.s32 %v1546, %v1539
      %v1573 = vadd.s32 %v1546, %v1540
      %v1574 = vadd.s32 %v1546, %v1541
      %v1575 = vadd.s32 %v1546, %v1542
      %v1576 = vadd.s32 %v1546, %v1543
      %v1577 = vadd.s32 %v1546, %v1544
      %v1578 = vadd.s32 %v1546, %v1545
      %vm1579 = vcmp.lt.s32.totalorder %v1547, 288
      %vm1580 = vcmp.lt.s32.totalorder %v1548, 288
      %vm1581 = vcmp.lt.s32.totalorder %v1549, 288
      %vm1582 = vcmp.lt.s32.totalorder %v1550, 288
      %vm1583 = vcmp.lt.s32.totalorder %v1551, 288
      %vm1584 = vcmp.lt.s32.totalorder %v1552, 288
      %vm1585 = vcmp.lt.s32.totalorder %v1553, 288
      %vm1586 = vcmp.lt.s32.totalorder %v1554, 288
      %vm1587 = vcmp.lt.s32.totalorder %v1555, 288
      %vm1588 = vcmp.lt.s32.totalorder %v1556, 288
      %vm1589 = vcmp.lt.s32.totalorder %v1557, 288
      %vm1590 = vcmp.lt.s32.totalorder %v1558, 288
      %vm1591 = vcmp.lt.s32.totalorder %v1559, 288
      %vm1592 = vcmp.lt.s32.totalorder %v1560, 288
      %vm1593 = vcmp.lt.s32.totalorder %v1561, 288
      %vm1594 = vcmp.lt.s32.totalorder %v1562, 288
      %vm1595 = vcmp.lt.s32.totalorder %v1563, 288
      %vm1596 = vcmp.lt.s32.totalorder %v1564, 288
      %vm1597 = vcmp.lt.s32.totalorder %v1565, 288
      %vm1598 = vcmp.lt.s32.totalorder %v1566, 288
      %vm1599 = vcmp.lt.s32.totalorder %v1567, 288
      %vm1600 = vcmp.lt.s32.totalorder %v1568, 288
      %vm1601 = vcmp.lt.s32.totalorder %v1569, 288
      %vm1602 = vcmp.lt.s32.totalorder %v1570, 288
      %vm1603 = vcmp.lt.s32.totalorder %v1571, 288
      %vm1604 = vcmp.lt.s32.totalorder %v1572, 288
      %vm1605 = vcmp.lt.s32.totalorder %v1573, 288
      %vm1606 = vcmp.lt.s32.totalorder %v1574, 288
      %vm1607 = vcmp.lt.s32.totalorder %v1575, 288
      %vm1608 = vcmp.lt.s32.totalorder %v1576, 288
      %vm1609 = vcmp.lt.s32.totalorder %v1577, 288
      %vm1610 = vcmp.lt.s32.totalorder %v1578, 288
      %v1611 = vsel %vm1579, 1, 0
      %v1612 = vsel %vm1580, 1, 0
      %v1613 = vsel %vm1581, 1, 0
      %v1614 = vsel %vm1582, 1, 0
      %v1615 = vsel %vm1583, 1, 0
      %v1616 = vsel %vm1584, 1, 0
      %v1617 = vsel %vm1585, 1, 0
      %v1618 = vsel %vm1586, 1, 0
      %v1619 = vsel %vm1587, 1, 0
      %v1620 = vsel %vm1588, 1, 0
      %v1621 = vsel %vm1589, 1, 0
      %v1622 = vsel %vm1590, 1, 0
      %v1623 = vsel %vm1591, 1, 0
      %v1624 = vsel %vm1592, 1, 0
      %v1625 = vsel %vm1593, 1, 0
      %v1626 = vsel %vm1594, 1, 0
      %v1627 = vsel %vm1595, 1, 0
      %v1628 = vsel %vm1596, 1, 0
      %v1629 = vsel %vm1597, 1, 0
      %v1630 = vsel %vm1598, 1, 0
      %v1631 = vsel %vm1599, 1, 0
      %v1632 = vsel %vm1600, 1, 0
      %v1633 = vsel %vm1601, 1, 0
      %v1634 = vsel %vm1602, 1, 0
      %v1635 = vsel %vm1603, 1, 0
      %v1636 = vsel %vm1604, 1, 0
      %v1637 = vsel %vm1605, 1, 0
      %v1638 = vsel %vm1606, 1, 0
      %v1639 = vsel %vm1607, 1, 0
      %v1640 = vsel %vm1608, 1, 0
      %v1641 = vsel %vm1609, 1, 0
      %v1642 = vsel %vm1610, 1, 0
      %vm1643 = vcmp.eq.s32.totalorder %v1611, 1
      %vm1644 = vcmp.eq.s32.totalorder %v1612, 1
      %vm1645 = vcmp.eq.s32.totalorder %v1613, 1
      %vm1646 = vcmp.eq.s32.totalorder %v1614, 1
      %vm1647 = vcmp.eq.s32.totalorder %v1615, 1
      %vm1648 = vcmp.eq.s32.totalorder %v1616, 1
      %vm1649 = vcmp.eq.s32.totalorder %v1617, 1
      %vm1650 = vcmp.eq.s32.totalorder %v1618, 1
      %vm1651 = vcmp.eq.s32.totalorder %v1619, 1
      %vm1652 = vcmp.eq.s32.totalorder %v1620, 1
      %vm1653 = vcmp.eq.s32.totalorder %v1621, 1
      %vm1654 = vcmp.eq.s32.totalorder %v1622, 1
      %vm1655 = vcmp.eq.s32.totalorder %v1623, 1
      %vm1656 = vcmp.eq.s32.totalorder %v1624, 1
      %vm1657 = vcmp.eq.s32.totalorder %v1625, 1
      %vm1658 = vcmp.eq.s32.totalorder %v1626, 1
      %vm1659 = vcmp.eq.s32.totalorder %v1627, 1
      %vm1660 = vcmp.eq.s32.totalorder %v1628, 1
      %vm1661 = vcmp.eq.s32.totalorder %v1629, 1
      %vm1662 = vcmp.eq.s32.totalorder %v1630, 1
      %vm1663 = vcmp.eq.s32.totalorder %v1631, 1
      %vm1664 = vcmp.eq.s32.totalorder %v1632, 1
      %vm1665 = vcmp.eq.s32.totalorder %v1633, 1
      %vm1666 = vcmp.eq.s32.totalorder %v1634, 1
      %vm1667 = vcmp.eq.s32.totalorder %v1635, 1
      %vm1668 = vcmp.eq.s32.totalorder %v1636, 1
      %vm1669 = vcmp.eq.s32.totalorder %v1637, 1
      %vm1670 = vcmp.eq.s32.totalorder %v1638, 1
      %vm1671 = vcmp.eq.s32.totalorder %v1639, 1
      %vm1672 = vcmp.eq.s32.totalorder %v1640, 1
      %vm1673 = vcmp.eq.s32.totalorder %v1641, 1
      %vm1674 = vcmp.eq.s32.totalorder %v1642, 1
      %v1675 = vsel %vm1643, %v1256, 0.0
      %v1676 = vsel %vm1643, %v1257, 0.0
      %v1677 = vsel %vm1643, %v1258, 0.0
      %v1678 = vsel %vm1643, %v1259, 0.0
      %v1679 = vsel %vm1643, %v1260, 0.0
      %v1680 = vsel %vm1643, %v1261, 0.0
      %v1681 = vsel %vm1643, %v1262, 0.0
      %v1682 = vsel %vm1643, %v1263, 0.0
      %v1683 = vsel %vm1644, %v1264, 0.0
      %v1684 = vsel %vm1644, %v1265, 0.0
      %v1685 = vsel %vm1644, %v1266, 0.0
      %v1686 = vsel %vm1644, %v1267, 0.0
      %v1687 = vsel %vm1644, %v1268, 0.0
      %v1688 = vsel %vm1644, %v1269, 0.0
      %v1689 = vsel %vm1644, %v1270, 0.0
      %v1690 = vsel %vm1644, %v1271, 0.0
      %v1691 = vsel %vm1645, %v1272, 0.0
      %v1692 = vsel %vm1645, %v1273, 0.0
      %v1693 = vsel %vm1645, %v1274, 0.0
      %v1694 = vsel %vm1645, %v1275, 0.0
      %v1695 = vsel %vm1645, %v1276, 0.0
      %v1696 = vsel %vm1645, %v1277, 0.0
      %v1697 = vsel %vm1645, %v1278, 0.0
      %v1698 = vsel %vm1645, %v1279, 0.0
      %v1699 = vsel %vm1646, %v1280, 0.0
      %v1700 = vsel %vm1646, %v1281, 0.0
      %v1701 = vsel %vm1646, %v1282, 0.0
      %v1702 = vsel %vm1646, %v1283, 0.0
      %v1703 = vsel %vm1646, %v1284, 0.0
      %v1704 = vsel %vm1646, %v1285, 0.0
      %v1705 = vsel %vm1646, %v1286, 0.0
      %v1706 = vsel %vm1646, %v1287, 0.0
      %v1707 = vsel %vm1647, %v1288, 0.0
      %v1708 = vsel %vm1647, %v1289, 0.0
      %v1709 = vsel %vm1647, %v1290, 0.0
      %v1710 = vsel %vm1647, %v1291, 0.0
      %v1711 = vsel %vm1647, %v1292, 0.0
      %v1712 = vsel %vm1647, %v1293, 0.0
      %v1713 = vsel %vm1647, %v1294, 0.0
      %v1714 = vsel %vm1647, %v1295, 0.0
      %v1715 = vsel %vm1648, %v1296, 0.0
      %v1716 = vsel %vm1648, %v1297, 0.0
      %v1717 = vsel %vm1648, %v1298, 0.0
      %v1718 = vsel %vm1648, %v1299, 0.0
      %v1719 = vsel %vm1648, %v1300, 0.0
      %v1720 = vsel %vm1648, %v1301, 0.0
      %v1721 = vsel %vm1648, %v1302, 0.0
      %v1722 = vsel %vm1648, %v1303, 0.0
      %v1723 = vsel %vm1649, %v1304, 0.0
      %v1724 = vsel %vm1649, %v1305, 0.0
      %v1725 = vsel %vm1649, %v1306, 0.0
      %v1726 = vsel %vm1649, %v1307, 0.0
      %v1727 = vsel %vm1649, %v1308, 0.0
      %v1728 = vsel %vm1649, %v1309, 0.0
      %v1729 = vsel %vm1649, %v1310, 0.0
      %v1730 = vsel %vm1649, %v1311, 0.0
      %v1731 = vsel %vm1650, %v1312, 0.0
      %v1732 = vsel %vm1650, %v1313, 0.0
      %v1733 = vsel %vm1650, %v1314, 0.0
      %v1734 = vsel %vm1650, %v1315, 0.0
      %v1735 = vsel %vm1650, %v1316, 0.0
      %v1736 = vsel %vm1650, %v1317, 0.0
      %v1737 = vsel %vm1650, %v1318, 0.0
      %v1738 = vsel %vm1650, %v1319, 0.0
      %v1739 = vsel %vm1651, %v1320, 0.0
      %v1740 = vsel %vm1651, %v1321, 0.0
      %v1741 = vsel %vm1651, %v1322, 0.0
      %v1742 = vsel %vm1651, %v1323, 0.0
      %v1743 = vsel %vm1651, %v1324, 0.0
      %v1744 = vsel %vm1651, %v1325, 0.0
      %v1745 = vsel %vm1651, %v1326, 0.0
      %v1746 = vsel %vm1651, %v1327, 0.0
      %v1747 = vsel %vm1652, %v1328, 0.0
      %v1748 = vsel %vm1652, %v1329, 0.0
      %v1749 = vsel %vm1652, %v1330, 0.0
      %v1750 = vsel %vm1652, %v1331, 0.0
      %v1751 = vsel %vm1652, %v1332, 0.0
      %v1752 = vsel %vm1652, %v1333, 0.0
      %v1753 = vsel %vm1652, %v1334, 0.0
      %v1754 = vsel %vm1652, %v1335, 0.0
      %v1755 = vsel %vm1653, %v1336, 0.0
      %v1756 = vsel %vm1653, %v1337, 0.0
      %v1757 = vsel %vm1653, %v1338, 0.0
      %v1758 = vsel %vm1653, %v1339, 0.0
      %v1759 = vsel %vm1653, %v1340, 0.0
      %v1760 = vsel %vm1653, %v1341, 0.0
      %v1761 = vsel %vm1653, %v1342, 0.0
      %v1762 = vsel %vm1653, %v1343, 0.0
      %v1763 = vsel %vm1654, %v1344, 0.0
      %v1764 = vsel %vm1654, %v1345, 0.0
      %v1765 = vsel %vm1654, %v1346, 0.0
      %v1766 = vsel %vm1654, %v1347, 0.0
      %v1767 = vsel %vm1654, %v1348, 0.0
      %v1768 = vsel %vm1654, %v1349, 0.0
      %v1769 = vsel %vm1654, %v1350, 0.0
      %v1770 = vsel %vm1654, %v1351, 0.0
      %v1771 = vsel %vm1655, %v1352, 0.0
      %v1772 = vsel %vm1655, %v1353, 0.0
      %v1773 = vsel %vm1655, %v1354, 0.0
      %v1774 = vsel %vm1655, %v1355, 0.0
      %v1775 = vsel %vm1655, %v1356, 0.0
      %v1776 = vsel %vm1655, %v1357, 0.0
      %v1777 = vsel %vm1655, %v1358, 0.0
      %v1778 = vsel %vm1655, %v1359, 0.0
      %v1779 = vsel %vm1656, %v1360, 0.0
      %v1780 = vsel %vm1656, %v1361, 0.0
      %v1781 = vsel %vm1656, %v1362, 0.0
      %v1782 = vsel %vm1656, %v1363, 0.0
      %v1783 = vsel %vm1656, %v1364, 0.0
      %v1784 = vsel %vm1656, %v1365, 0.0
      %v1785 = vsel %vm1656, %v1366, 0.0
      %v1786 = vsel %vm1656, %v1367, 0.0
      %v1787 = vsel %vm1657, %v1368, 0.0
      %v1788 = vsel %vm1657, %v1369, 0.0
      %v1789 = vsel %vm1657, %v1370, 0.0
      %v1790 = vsel %vm1657, %v1371, 0.0
      %v1791 = vsel %vm1657, %v1372, 0.0
      %v1792 = vsel %vm1657, %v1373, 0.0
      %v1793 = vsel %vm1657, %v1374, 0.0
      %v1794 = vsel %vm1657, %v1375, 0.0
      %v1795 = vsel %vm1658, %v1376, 0.0
      %v1796 = vsel %vm1658, %v1377, 0.0
      %v1797 = vsel %vm1658, %v1378, 0.0
      %v1798 = vsel %vm1658, %v1379, 0.0
      %v1799 = vsel %vm1658, %v1380, 0.0
      %v1800 = vsel %vm1658, %v1381, 0.0
      %v1801 = vsel %vm1658, %v1382, 0.0
      %v1802 = vsel %vm1658, %v1383, 0.0
      %v1803 = vsel %vm1659, %v1384, 0.0
      %v1804 = vsel %vm1659, %v1385, 0.0
      %v1805 = vsel %vm1659, %v1386, 0.0
      %v1806 = vsel %vm1659, %v1387, 0.0
      %v1807 = vsel %vm1659, %v1388, 0.0
      %v1808 = vsel %vm1659, %v1389, 0.0
      %v1809 = vsel %vm1659, %v1390, 0.0
      %v1810 = vsel %vm1659, %v1391, 0.0
      %v1811 = vsel %vm1660, %v1392, 0.0
      %v1812 = vsel %vm1660, %v1393, 0.0
      %v1813 = vsel %vm1660, %v1394, 0.0
      %v1814 = vsel %vm1660, %v1395, 0.0
      %v1815 = vsel %vm1660, %v1396, 0.0
      %v1816 = vsel %vm1660, %v1397, 0.0
      %v1817 = vsel %vm1660, %v1398, 0.0
      %v1818 = vsel %vm1660, %v1399, 0.0
      %v1819 = vsel %vm1661, %v1400, 0.0
      %v1820 = vsel %vm1661, %v1401, 0.0
      %v1821 = vsel %vm1661, %v1402, 0.0
      %v1822 = vsel %vm1661, %v1403, 0.0
      %v1823 = vsel %vm1661, %v1404, 0.0
      %v1824 = vsel %vm1661, %v1405, 0.0
      %v1825 = vsel %vm1661, %v1406, 0.0
      %v1826 = vsel %vm1661, %v1407, 0.0
      %v1827 = vsel %vm1662, %v1408, 0.0
      %v1828 = vsel %vm1662, %v1409, 0.0
      %v1829 = vsel %vm1662, %v1410, 0.0
      %v1830 = vsel %vm1662, %v1411, 0.0
      %v1831 = vsel %vm1662, %v1412, 0.0
      %v1832 = vsel %vm1662, %v1413, 0.0
      %v1833 = vsel %vm1662, %v1414, 0.0
      %v1834 = vsel %vm1662, %v1415, 0.0
      %v1835 = vsel %vm1663, %v1416, 0.0
      %v1836 = vsel %vm1663, %v1417, 0.0
      %v1837 = vsel %vm1663, %v1418, 0.0
      %v1838 = vsel %vm1663, %v1419, 0.0
      %v1839 = vsel %vm1663, %v1420, 0.0
      %v1840 = vsel %vm1663, %v1421, 0.0
      %v1841 = vsel %vm1663, %v1422, 0.0
      %v1842 = vsel %vm1663, %v1423, 0.0
      %v1843 = vsel %vm1664, %v1424, 0.0
      %v1844 = vsel %vm1664, %v1425, 0.0
      %v1845 = vsel %vm1664, %v1426, 0.0
      %v1846 = vsel %vm1664, %v1427, 0.0
      %v1847 = vsel %vm1664, %v1428, 0.0
      %v1848 = vsel %vm1664, %v1429, 0.0
      %v1849 = vsel %vm1664, %v1430, 0.0
      %v1850 = vsel %vm1664, %v1431, 0.0
      %v1851 = vsel %vm1665, %v1432, 0.0
      %v1852 = vsel %vm1665, %v1433, 0.0
      %v1853 = vsel %vm1665, %v1434, 0.0
      %v1854 = vsel %vm1665, %v1435, 0.0
      %v1855 = vsel %vm1665, %v1436, 0.0
      %v1856 = vsel %vm1665, %v1437, 0.0
      %v1857 = vsel %vm1665, %v1438, 0.0
      %v1858 = vsel %vm1665, %v1439, 0.0
      %v1859 = vsel %vm1666, %v1440, 0.0
      %v1860 = vsel %vm1666, %v1441, 0.0
      %v1861 = vsel %vm1666, %v1442, 0.0
      %v1862 = vsel %vm1666, %v1443, 0.0
      %v1863 = vsel %vm1666, %v1444, 0.0
      %v1864 = vsel %vm1666, %v1445, 0.0
      %v1865 = vsel %vm1666, %v1446, 0.0
      %v1866 = vsel %vm1666, %v1447, 0.0
      %v1867 = vsel %vm1667, %v1448, 0.0
      %v1868 = vsel %vm1667, %v1449, 0.0
      %v1869 = vsel %vm1667, %v1450, 0.0
      %v1870 = vsel %vm1667, %v1451, 0.0
      %v1871 = vsel %vm1667, %v1452, 0.0
      %v1872 = vsel %vm1667, %v1453, 0.0
      %v1873 = vsel %vm1667, %v1454, 0.0
      %v1874 = vsel %vm1667, %v1455, 0.0
      %v1875 = vsel %vm1668, %v1456, 0.0
      %v1876 = vsel %vm1668, %v1457, 0.0
      %v1877 = vsel %vm1668, %v1458, 0.0
      %v1878 = vsel %vm1668, %v1459, 0.0
      %v1879 = vsel %vm1668, %v1460, 0.0
      %v1880 = vsel %vm1668, %v1461, 0.0
      %v1881 = vsel %vm1668, %v1462, 0.0
      %v1882 = vsel %vm1668, %v1463, 0.0
      %v1883 = vsel %vm1669, %v1464, 0.0
      %v1884 = vsel %vm1669, %v1465, 0.0
      %v1885 = vsel %vm1669, %v1466, 0.0
      %v1886 = vsel %vm1669, %v1467, 0.0
      %v1887 = vsel %vm1669, %v1468, 0.0
      %v1888 = vsel %vm1669, %v1469, 0.0
      %v1889 = vsel %vm1669, %v1470, 0.0
      %v1890 = vsel %vm1669, %v1471, 0.0
      %v1891 = vsel %vm1670, %v1472, 0.0
      %v1892 = vsel %vm1670, %v1473, 0.0
      %v1893 = vsel %vm1670, %v1474, 0.0
      %v1894 = vsel %vm1670, %v1475, 0.0
      %v1895 = vsel %vm1670, %v1476, 0.0
      %v1896 = vsel %vm1670, %v1477, 0.0
      %v1897 = vsel %vm1670, %v1478, 0.0
      %v1898 = vsel %vm1670, %v1479, 0.0
      %v1899 = vsel %vm1671, %v1480, 0.0
      %v1900 = vsel %vm1671, %v1481, 0.0
      %v1901 = vsel %vm1671, %v1482, 0.0
      %v1902 = vsel %vm1671, %v1483, 0.0
      %v1903 = vsel %vm1671, %v1484, 0.0
      %v1904 = vsel %vm1671, %v1485, 0.0
      %v1905 = vsel %vm1671, %v1486, 0.0
      %v1906 = vsel %vm1671, %v1487, 0.0
      %v1907 = vsel %vm1672, %v1488, 0.0
      %v1908 = vsel %vm1672, %v1489, 0.0
      %v1909 = vsel %vm1672, %v1490, 0.0
      %v1910 = vsel %vm1672, %v1491, 0.0
      %v1911 = vsel %vm1672, %v1492, 0.0
      %v1912 = vsel %vm1672, %v1493, 0.0
      %v1913 = vsel %vm1672, %v1494, 0.0
      %v1914 = vsel %vm1672, %v1495, 0.0
      %v1915 = vsel %vm1673, %v1496, 0.0
      %v1916 = vsel %vm1673, %v1497, 0.0
      %v1917 = vsel %vm1673, %v1498, 0.0
      %v1918 = vsel %vm1673, %v1499, 0.0
      %v1919 = vsel %vm1673, %v1500, 0.0
      %v1920 = vsel %vm1673, %v1501, 0.0
      %v1921 = vsel %vm1673, %v1502, 0.0
      %v1922 = vsel %vm1673, %v1503, 0.0
      %v1923 = vsel %vm1674, %v1504, 0.0
      %v1924 = vsel %vm1674, %v1505, 0.0
      %v1925 = vsel %vm1674, %v1506, 0.0
      %v1926 = vsel %vm1674, %v1507, 0.0
      %v1927 = vsel %vm1674, %v1508, 0.0
      %v1928 = vsel %vm1674, %v1509, 0.0
      %v1929 = vsel %vm1674, %v1510, 0.0
      %v1930 = vsel %vm1674, %v1511, 0.0
      %v1931 = vpack.c.bf16 %v1683, %v1675
      %v1932 = vpack.c.bf16 %v1684, %v1676
      %v1933 = vpack.c.bf16 %v1685, %v1677
      %v1934 = vpack.c.bf16 %v1686, %v1678
      %v1935 = vpack.c.bf16 %v1687, %v1679
      %v1936 = vpack.c.bf16 %v1688, %v1680
      %v1937 = vpack.c.bf16 %v1689, %v1681
      %v1938 = vpack.c.bf16 %v1690, %v1682
      %v1939 = vpack.c.bf16 %v1699, %v1691
      %v1940 = vpack.c.bf16 %v1700, %v1692
      %v1941 = vpack.c.bf16 %v1701, %v1693
      %v1942 = vpack.c.bf16 %v1702, %v1694
      %v1943 = vpack.c.bf16 %v1703, %v1695
      %v1944 = vpack.c.bf16 %v1704, %v1696
      %v1945 = vpack.c.bf16 %v1705, %v1697
      %v1946 = vpack.c.bf16 %v1706, %v1698
      %v1947 = vpack.c.bf16 %v1715, %v1707
      %v1948 = vpack.c.bf16 %v1716, %v1708
      %v1949 = vpack.c.bf16 %v1717, %v1709
      %v1950 = vpack.c.bf16 %v1718, %v1710
      %v1951 = vpack.c.bf16 %v1719, %v1711
      %v1952 = vpack.c.bf16 %v1720, %v1712
      %v1953 = vpack.c.bf16 %v1721, %v1713
      %v1954 = vpack.c.bf16 %v1722, %v1714
      %v1955 = vpack.c.bf16 %v1731, %v1723
      %v1956 = vpack.c.bf16 %v1732, %v1724
      %v1957 = vpack.c.bf16 %v1733, %v1725
      %v1958 = vpack.c.bf16 %v1734, %v1726
      %v1959 = vpack.c.bf16 %v1735, %v1727
      %v1960 = vpack.c.bf16 %v1736, %v1728
      %v1961 = vpack.c.bf16 %v1737, %v1729
      %v1962 = vpack.c.bf16 %v1738, %v1730
      %v1963 = vpack.c.bf16 %v1747, %v1739
      %v1964 = vpack.c.bf16 %v1748, %v1740
      %v1965 = vpack.c.bf16 %v1749, %v1741
      %v1966 = vpack.c.bf16 %v1750, %v1742
      %v1967 = vpack.c.bf16 %v1751, %v1743
      %v1968 = vpack.c.bf16 %v1752, %v1744
      %v1969 = vpack.c.bf16 %v1753, %v1745
      %v1970 = vpack.c.bf16 %v1754, %v1746
      %v1971 = vpack.c.bf16 %v1763, %v1755
      %v1972 = vpack.c.bf16 %v1764, %v1756
      %v1973 = vpack.c.bf16 %v1765, %v1757
      %v1974 = vpack.c.bf16 %v1766, %v1758
      %v1975 = vpack.c.bf16 %v1767, %v1759
      %v1976 = vpack.c.bf16 %v1768, %v1760
      %v1977 = vpack.c.bf16 %v1769, %v1761
      %v1978 = vpack.c.bf16 %v1770, %v1762
      %v1979 = vpack.c.bf16 %v1779, %v1771
      %v1980 = vpack.c.bf16 %v1780, %v1772
      %v1981 = vpack.c.bf16 %v1781, %v1773
      %v1982 = vpack.c.bf16 %v1782, %v1774
      %v1983 = vpack.c.bf16 %v1783, %v1775
      %v1984 = vpack.c.bf16 %v1784, %v1776
      %v1985 = vpack.c.bf16 %v1785, %v1777
      %v1986 = vpack.c.bf16 %v1786, %v1778
      %v1987 = vpack.c.bf16 %v1795, %v1787
      %v1988 = vpack.c.bf16 %v1796, %v1788
      %v1989 = vpack.c.bf16 %v1797, %v1789
      %v1990 = vpack.c.bf16 %v1798, %v1790
      %v1991 = vpack.c.bf16 %v1799, %v1791
      %v1992 = vpack.c.bf16 %v1800, %v1792
      %v1993 = vpack.c.bf16 %v1801, %v1793
      %v1994 = vpack.c.bf16 %v1802, %v1794
      %v1995 = vpack.c.bf16 %v1811, %v1803
      %v1996 = vpack.c.bf16 %v1812, %v1804
      %v1997 = vpack.c.bf16 %v1813, %v1805
      %v1998 = vpack.c.bf16 %v1814, %v1806
      %v1999 = vpack.c.bf16 %v1815, %v1807
      %v2000 = vpack.c.bf16 %v1816, %v1808
      %v2001 = vpack.c.bf16 %v1817, %v1809
      %v2002 = vpack.c.bf16 %v1818, %v1810
      %v2003 = vpack.c.bf16 %v1827, %v1819
      %v2004 = vpack.c.bf16 %v1828, %v1820
      %v2005 = vpack.c.bf16 %v1829, %v1821
      %v2006 = vpack.c.bf16 %v1830, %v1822
      %v2007 = vpack.c.bf16 %v1831, %v1823
      %v2008 = vpack.c.bf16 %v1832, %v1824
      %v2009 = vpack.c.bf16 %v1833, %v1825
      %v2010 = vpack.c.bf16 %v1834, %v1826
      %v2011 = vpack.c.bf16 %v1843, %v1835
      %v2012 = vpack.c.bf16 %v1844, %v1836
      %v2013 = vpack.c.bf16 %v1845, %v1837
      %v2014 = vpack.c.bf16 %v1846, %v1838
      %v2015 = vpack.c.bf16 %v1847, %v1839
      %v2016 = vpack.c.bf16 %v1848, %v1840
      %v2017 = vpack.c.bf16 %v1849, %v1841
      %v2018 = vpack.c.bf16 %v1850, %v1842
      %v2019 = vpack.c.bf16 %v1859, %v1851
      %v2020 = vpack.c.bf16 %v1860, %v1852
      %v2021 = vpack.c.bf16 %v1861, %v1853
      %v2022 = vpack.c.bf16 %v1862, %v1854
      %v2023 = vpack.c.bf16 %v1863, %v1855
      %v2024 = vpack.c.bf16 %v1864, %v1856
      %v2025 = vpack.c.bf16 %v1865, %v1857
      %v2026 = vpack.c.bf16 %v1866, %v1858
      %v2027 = vpack.c.bf16 %v1875, %v1867
      %v2028 = vpack.c.bf16 %v1876, %v1868
      %v2029 = vpack.c.bf16 %v1877, %v1869
      %v2030 = vpack.c.bf16 %v1878, %v1870
      %v2031 = vpack.c.bf16 %v1879, %v1871
      %v2032 = vpack.c.bf16 %v1880, %v1872
      %v2033 = vpack.c.bf16 %v1881, %v1873
      %v2034 = vpack.c.bf16 %v1882, %v1874
      %v2035 = vpack.c.bf16 %v1891, %v1883
      %v2036 = vpack.c.bf16 %v1892, %v1884
      %v2037 = vpack.c.bf16 %v1893, %v1885
      %v2038 = vpack.c.bf16 %v1894, %v1886
      %v2039 = vpack.c.bf16 %v1895, %v1887
      %v2040 = vpack.c.bf16 %v1896, %v1888
      %v2041 = vpack.c.bf16 %v1897, %v1889
      %v2042 = vpack.c.bf16 %v1898, %v1890
      %v2043 = vpack.c.bf16 %v1907, %v1899
      %v2044 = vpack.c.bf16 %v1908, %v1900
      %v2045 = vpack.c.bf16 %v1909, %v1901
      %v2046 = vpack.c.bf16 %v1910, %v1902
      %v2047 = vpack.c.bf16 %v1911, %v1903
      %v2048 = vpack.c.bf16 %v1912, %v1904
      %v2049 = vpack.c.bf16 %v1913, %v1905
      %v2050 = vpack.c.bf16 %v1914, %v1906
      %v2051 = vpack.c.bf16 %v1923, %v1915
      %v2052 = vpack.c.bf16 %v1924, %v1916
      %v2053 = vpack.c.bf16 %v1925, %v1917
      %v2054 = vpack.c.bf16 %v1926, %v1918
      %v2055 = vpack.c.bf16 %v1927, %v1919
      %v2056 = vpack.c.bf16 %v1928, %v1920
      %v2057 = vpack.c.bf16 %v1929, %v1921
      %v2058 = vpack.c.bf16 %v1930, %v1922
      %v2059 = vld [vmem:[%s3] sm:$0xf]
      %v2060 = vld [vmem:[%s3 + $0x4] sm:$0xf]
      %v2061 = vld [vmem:[%s3 + $0x8] sm:$0xf]
      %v2062 = vld [vmem:[%s3 + $0xc] sm:$0xf]
      %v2063 = vld [vmem:[%s3 + $0x10] sm:$0xf]
      %v2064 = vld [vmem:[%s3 + $0x14] sm:$0xf]
      %v2065 = vld [vmem:[%s3 + $0x18] sm:$0xf]
      %v2066 = vld [vmem:[%s3 + $0x1c] sm:$0xf]
      %v2067 = vld [vmem:[%s3 + $0x20] sm:$0xf]
      %v2068 = vld [vmem:[%s3 + $0x24] sm:$0xf]
      %v2069 = vld [vmem:[%s3 + $0x28] sm:$0xf]
      %v2070 = vld [vmem:[%s3 + $0x2c] sm:$0xf]
      %v2071 = vld [vmem:[%s3 + $0x30] sm:$0xf]
      %v2072 = vld [vmem:[%s3 + $0x34] sm:$0xf]
      %v2073 = vld [vmem:[%s3 + $0x38] sm:$0xf]
      %v2074 = vld [vmem:[%s3 + $0x3c] sm:$0xf]
      %v2075 = vld [vmem:[%s3 + $0x40] sm:$0xf]
      %v2076 = vld [vmem:[%s3 + $0x44] sm:$0xf]
      %v2077 = vld [vmem:[%s3 + $0x48] sm:$0xf]
      %v2078 = vld [vmem:[%s3 + $0x4c] sm:$0xf]
      %v2079 = vld [vmem:[%s3 + $0x50] sm:$0xf]
      %v2080 = vld [vmem:[%s3 + $0x54] sm:$0xf]
      %v2081 = vld [vmem:[%s3 + $0x58] sm:$0xf]
      %v2082 = vld [vmem:[%s3 + $0x5c] sm:$0xf]
      %v2083 = vld [vmem:[%s3 + $0x60] sm:$0xf]
      %v2084 = vld [vmem:[%s3 + $0x64] sm:$0xf]
      %v2085 = vld [vmem:[%s3 + $0x68] sm:$0xf]
      %v2086 = vld [vmem:[%s3 + $0x6c] sm:$0xf]
      %v2087 = vld [vmem:[%s3 + $0x70] sm:$0xf]
      %v2088 = vld [vmem:[%s3 + $0x74] sm:$0xf]
      %v2089 = vld [vmem:[%s3 + $0x78] sm:$0xf]
      %v2090 = vld [vmem:[%s3 + $0x7c] sm:$0xf]
      %v2091 = vld [vmem:[%s3 + $0x80] sm:$0xf]
      %v2092 = vld [vmem:[%s3 + $0x84] sm:$0xf]
      %v2093 = vld [vmem:[%s3 + $0x88] sm:$0xf]
      %v2094 = vld [vmem:[%s3 + $0x8c] sm:$0xf]
      %v2095 = vld [vmem:[%s3 + $0x90] sm:$0xf]
      %v2096 = vld [vmem:[%s3 + $0x94] sm:$0xf]
      %v2097 = vld [vmem:[%s3 + $0x98] sm:$0xf]
      %v2098 = vld [vmem:[%s3 + $0x9c] sm:$0xf]
      %v2099 = vld [vmem:[%s3 + $0xa0] sm:$0xf]
      %v2100 = vld [vmem:[%s3 + $0xa4] sm:$0xf]
      %v2101 = vld [vmem:[%s3 + $0xa8] sm:$0xf]
      %v2102 = vld [vmem:[%s3 + $0xac] sm:$0xf]
      %v2103 = vld [vmem:[%s3 + $0xb0] sm:$0xf]
      %v2104 = vld [vmem:[%s3 + $0xb4] sm:$0xf]
      %v2105 = vld [vmem:[%s3 + $0xb8] sm:$0xf]
      %v2106 = vld [vmem:[%s3 + $0xbc] sm:$0xf]
      %v2107 = vld [vmem:[%s3 + $0xc0] sm:$0xf]
      %v2108 = vld [vmem:[%s3 + $0xc4] sm:$0xf]
      %v2109 = vld [vmem:[%s3 + $0xc8] sm:$0xf]
      %v2110 = vld [vmem:[%s3 + $0xcc] sm:$0xf]
      %v2111 = vld [vmem:[%s3 + $0xd0] sm:$0xf]
      %v2112 = vld [vmem:[%s3 + $0xd4] sm:$0xf]
      %v2113 = vld [vmem:[%s3 + $0xd8] sm:$0xf]
      %v2114 = vld [vmem:[%s3 + $0xdc] sm:$0xf]
      %v2115 = vld [vmem:[%s3 + $0xe0] sm:$0xf]
      %v2116 = vld [vmem:[%s3 + $0xe4] sm:$0xf]
      %v2117 = vld [vmem:[%s3 + $0xe8] sm:$0xf]
      %v2118 = vld [vmem:[%s3 + $0xec] sm:$0xf]
      %v2119 = vld [vmem:[%s3 + $0xf0] sm:$0xf]
      %v2120 = vld [vmem:[%s3 + $0xf4] sm:$0xf]
      %v2121 = vld [vmem:[%s3 + $0xf8] sm:$0xf]
      %v2122 = vld [vmem:[%s3 + $0xfc] sm:$0xf]
      %v2123 = vld [vmem:[%s3 + $0x100] sm:$0xf]
      %v2124 = vld [vmem:[%s3 + $0x104] sm:$0xf]
      %v2125 = vld [vmem:[%s3 + $0x108] sm:$0xf]
      %v2126 = vld [vmem:[%s3 + $0x10c] sm:$0xf]
      %v2127 = vld [vmem:[%s3 + $0x110] sm:$0xf]
      %v2128 = vld [vmem:[%s3 + $0x114] sm:$0xf]
      %v2129 = vld [vmem:[%s3 + $0x118] sm:$0xf]
      %v2130 = vld [vmem:[%s3 + $0x11c] sm:$0xf]
      %v2131 = vld [vmem:[%s3 + $0x120] sm:$0xf]
      %v2132 = vld [vmem:[%s3 + $0x124] sm:$0xf]
      %v2133 = vld [vmem:[%s3 + $0x128] sm:$0xf]
      %v2134 = vld [vmem:[%s3 + $0x12c] sm:$0xf]
      %v2135 = vld [vmem:[%s3 + $0x130] sm:$0xf]
      %v2136 = vld [vmem:[%s3 + $0x134] sm:$0xf]
      %v2137 = vld [vmem:[%s3 + $0x138] sm:$0xf]
      %v2138 = vld [vmem:[%s3 + $0x13c] sm:$0xf]
      %v2139 = vld [vmem:[%s3 + $0x140] sm:$0xf]
      %v2140 = vld [vmem:[%s3 + $0x144] sm:$0xf]
      %v2141 = vld [vmem:[%s3 + $0x148] sm:$0xf]
      %v2142 = vld [vmem:[%s3 + $0x14c] sm:$0xf]
      %v2143 = vld [vmem:[%s3 + $0x150] sm:$0xf]
      %v2144 = vld [vmem:[%s3 + $0x154] sm:$0xf]
      %v2145 = vld [vmem:[%s3 + $0x158] sm:$0xf]
      %v2146 = vld [vmem:[%s3 + $0x15c] sm:$0xf]
      %v2147 = vld [vmem:[%s3 + $0x160] sm:$0xf]
      %v2148 = vld [vmem:[%s3 + $0x164] sm:$0xf]
      %v2149 = vld [vmem:[%s3 + $0x168] sm:$0xf]
      %v2150 = vld [vmem:[%s3 + $0x16c] sm:$0xf]
      %v2151 = vld [vmem:[%s3 + $0x170] sm:$0xf]
      %v2152 = vld [vmem:[%s3 + $0x174] sm:$0xf]
      %v2153 = vld [vmem:[%s3 + $0x178] sm:$0xf]
      %v2154 = vld [vmem:[%s3 + $0x17c] sm:$0xf]
      %v2155 = vld [vmem:[%s3 + $0x180] sm:$0xf]
      %v2156 = vld [vmem:[%s3 + $0x184] sm:$0xf]
      %v2157 = vld [vmem:[%s3 + $0x188] sm:$0xf]
      %v2158 = vld [vmem:[%s3 + $0x18c] sm:$0xf]
      %v2159 = vld [vmem:[%s3 + $0x190] sm:$0xf]
      %v2160 = vld [vmem:[%s3 + $0x194] sm:$0xf]
      %v2161 = vld [vmem:[%s3 + $0x198] sm:$0xf]
      %v2162 = vld [vmem:[%s3 + $0x19c] sm:$0xf]
      %v2163 = vld [vmem:[%s3 + $0x1a0] sm:$0xf]
      %v2164 = vld [vmem:[%s3 + $0x1a4] sm:$0xf]
      %v2165 = vld [vmem:[%s3 + $0x1a8] sm:$0xf]
      %v2166 = vld [vmem:[%s3 + $0x1ac] sm:$0xf]
      %v2167 = vld [vmem:[%s3 + $0x1b0] sm:$0xf]
      %v2168 = vld [vmem:[%s3 + $0x1b4] sm:$0xf]
      %v2169 = vld [vmem:[%s3 + $0x1b8] sm:$0xf]
      %v2170 = vld [vmem:[%s3 + $0x1bc] sm:$0xf]
      %v2171 = vld [vmem:[%s3 + $0x1c0] sm:$0xf]
      %v2172 = vld [vmem:[%s3 + $0x1c4] sm:$0xf]
      %v2173 = vld [vmem:[%s3 + $0x1c8] sm:$0xf]
      %v2174 = vld [vmem:[%s3 + $0x1cc] sm:$0xf]
      %v2175 = vld [vmem:[%s3 + $0x1d0] sm:$0xf]
      %v2176 = vld [vmem:[%s3 + $0x1d4] sm:$0xf]
      %v2177 = vld [vmem:[%s3 + $0x1d8] sm:$0xf]
      %v2178 = vld [vmem:[%s3 + $0x1dc] sm:$0xf]
      %v2179 = vld [vmem:[%s3 + $0x1e0] sm:$0xf]
      %v2180 = vld [vmem:[%s3 + $0x1e4] sm:$0xf]
      %v2181 = vld [vmem:[%s3 + $0x1e8] sm:$0xf]
      %v2182 = vld [vmem:[%s3 + $0x1ec] sm:$0xf]
      %v2183 = vld [vmem:[%s3 + $0x1f0] sm:$0xf]
      %v2184 = vld [vmem:[%s3 + $0x1f4] sm:$0xf]
      %v2185 = vld [vmem:[%s3 + $0x1f8] sm:$0xf]
      %v2186 = vld [vmem:[%s3 + $0x1fc] sm:$0xf]
      %v2315 = vunpack.c.l.b16 %v2059
      %v2316 = vunpack.c.l.b16 %v2060
      %v2317 = vunpack.c.l.b16 %v2061
      %v2318 = vunpack.c.l.b16 %v2062
      %v2319 = vunpack.c.l.b16 %v2063
      %v2320 = vunpack.c.l.b16 %v2064
      %v2321 = vunpack.c.l.b16 %v2065
      %v2322 = vunpack.c.l.b16 %v2066
      %v2323 = vunpack.c.l.b16 %v2067
      %v2324 = vunpack.c.l.b16 %v2068
      %v2325 = vunpack.c.l.b16 %v2069
      %v2326 = vunpack.c.l.b16 %v2070
      %v2327 = vunpack.c.l.b16 %v2071
      %v2328 = vunpack.c.l.b16 %v2072
      %v2329 = vunpack.c.l.b16 %v2073
      %v2330 = vunpack.c.l.b16 %v2074
      %v2331 = vunpack.c.l.b16 %v2075
      %v2332 = vunpack.c.l.b16 %v2076
      %v2333 = vunpack.c.l.b16 %v2077
      %v2334 = vunpack.c.l.b16 %v2078
      %v2335 = vunpack.c.l.b16 %v2079
      %v2336 = vunpack.c.l.b16 %v2080
      %v2337 = vunpack.c.l.b16 %v2081
      %v2338 = vunpack.c.l.b16 %v2082
      %v2339 = vunpack.c.l.b16 %v2083
      %v2340 = vunpack.c.l.b16 %v2084
      %v2341 = vunpack.c.l.b16 %v2085
      %v2342 = vunpack.c.l.b16 %v2086
      %v2343 = vunpack.c.l.b16 %v2087
      %v2344 = vunpack.c.l.b16 %v2088
      %v2345 = vunpack.c.l.b16 %v2089
      %v2346 = vunpack.c.l.b16 %v2090
      %v2347 = vunpack.c.l.b16 %v2091
      %v2348 = vunpack.c.l.b16 %v2092
      %v2349 = vunpack.c.l.b16 %v2093
      %v2350 = vunpack.c.l.b16 %v2094
      %v2351 = vunpack.c.l.b16 %v2095
      %v2352 = vunpack.c.l.b16 %v2096
      %v2353 = vunpack.c.l.b16 %v2097
      %v2354 = vunpack.c.l.b16 %v2098
      %v2355 = vunpack.c.l.b16 %v2099
      %v2356 = vunpack.c.l.b16 %v2100
      %v2357 = vunpack.c.l.b16 %v2101
      %v2358 = vunpack.c.l.b16 %v2102
      %v2359 = vunpack.c.l.b16 %v2103
      %v2360 = vunpack.c.l.b16 %v2104
      %v2361 = vunpack.c.l.b16 %v2105
      %v2362 = vunpack.c.l.b16 %v2106
      %v2363 = vunpack.c.l.b16 %v2107
      %v2364 = vunpack.c.l.b16 %v2108
      %v2365 = vunpack.c.l.b16 %v2109
      %v2366 = vunpack.c.l.b16 %v2110
      %v2367 = vunpack.c.l.b16 %v2111
      %v2368 = vunpack.c.l.b16 %v2112
      %v2369 = vunpack.c.l.b16 %v2113
      %v2370 = vunpack.c.l.b16 %v2114
      %v2371 = vunpack.c.l.b16 %v2115
      %v2372 = vunpack.c.l.b16 %v2116
      %v2373 = vunpack.c.l.b16 %v2117
      %v2374 = vunpack.c.l.b16 %v2118
      %v2375 = vunpack.c.l.b16 %v2119
      %v2376 = vunpack.c.l.b16 %v2120
      %v2377 = vunpack.c.l.b16 %v2121
      %v2378 = vunpack.c.l.b16 %v2122
      %v2379 = vunpack.c.l.b16 %v2123
      %v2380 = vunpack.c.l.b16 %v2124
      %v2381 = vunpack.c.l.b16 %v2125
      %v2382 = vunpack.c.l.b16 %v2126
      %v2383 = vunpack.c.l.b16 %v2127
      %v2384 = vunpack.c.l.b16 %v2128
      %v2385 = vunpack.c.l.b16 %v2129
      %v2386 = vunpack.c.l.b16 %v2130
      %v2387 = vunpack.c.l.b16 %v2131
      %v2388 = vunpack.c.l.b16 %v2132
      %v2389 = vunpack.c.l.b16 %v2133
      %v2390 = vunpack.c.l.b16 %v2134
      %v2391 = vunpack.c.l.b16 %v2135
      %v2392 = vunpack.c.l.b16 %v2136
      %v2393 = vunpack.c.l.b16 %v2137
      %v2394 = vunpack.c.l.b16 %v2138
      %v2395 = vunpack.c.l.b16 %v2139
      %v2396 = vunpack.c.l.b16 %v2140
      %v2397 = vunpack.c.l.b16 %v2141
      %v2398 = vunpack.c.l.b16 %v2142
      %v2399 = vunpack.c.l.b16 %v2143
      %v2400 = vunpack.c.l.b16 %v2144
      %v2401 = vunpack.c.l.b16 %v2145
      %v2402 = vunpack.c.l.b16 %v2146
      %v2403 = vunpack.c.l.b16 %v2147
      %v2404 = vunpack.c.l.b16 %v2148
      %v2405 = vunpack.c.l.b16 %v2149
      %v2406 = vunpack.c.l.b16 %v2150
      %v2407 = vunpack.c.l.b16 %v2151
      %v2408 = vunpack.c.l.b16 %v2152
      %v2409 = vunpack.c.l.b16 %v2153
      %v2410 = vunpack.c.l.b16 %v2154
      %v2411 = vunpack.c.l.b16 %v2155
      %v2412 = vunpack.c.l.b16 %v2156
      %v2413 = vunpack.c.l.b16 %v2157
      %v2414 = vunpack.c.l.b16 %v2158
      %v2415 = vunpack.c.l.b16 %v2159
      %v2416 = vunpack.c.l.b16 %v2160
      %v2417 = vunpack.c.l.b16 %v2161
      %v2418 = vunpack.c.l.b16 %v2162
      %v2419 = vunpack.c.l.b16 %v2163
      %v2420 = vunpack.c.l.b16 %v2164
      %v2421 = vunpack.c.l.b16 %v2165
      %v2422 = vunpack.c.l.b16 %v2166
      %v2423 = vunpack.c.l.b16 %v2167
      %v2424 = vunpack.c.l.b16 %v2168
      %v2425 = vunpack.c.l.b16 %v2169
      %v2426 = vunpack.c.l.b16 %v2170
      %v2427 = vunpack.c.l.b16 %v2171
      %v2428 = vunpack.c.l.b16 %v2172
      %v2429 = vunpack.c.l.b16 %v2173
      %v2430 = vunpack.c.l.b16 %v2174
      %v2431 = vunpack.c.l.b16 %v2175
      %v2432 = vunpack.c.l.b16 %v2176
      %v2433 = vunpack.c.l.b16 %v2177
      %v2434 = vunpack.c.l.b16 %v2178
      %v2435 = vunpack.c.l.b16 %v2179
      %v2436 = vunpack.c.l.b16 %v2180
      %v2437 = vunpack.c.l.b16 %v2181
      %v2438 = vunpack.c.l.b16 %v2182
      %v2439 = vunpack.c.l.b16 %v2183
      %v2440 = vunpack.c.l.b16 %v2184
      %v2441 = vunpack.c.l.b16 %v2185
      %v2442 = vunpack.c.l.b16 %v2186
      %v2443 = vpack.c.b16 %v2316, %v2315
      %v2444 = vpack.c.b16 %v2318, %v2317
      %v2445 = vpack.c.b16 %v2320, %v2319
      %v2446 = vpack.c.b16 %v2322, %v2321
      %v2447 = vpack.c.b16 %v2324, %v2323
      %v2448 = vpack.c.b16 %v2326, %v2325
      %v2449 = vpack.c.b16 %v2328, %v2327
      %v2450 = vpack.c.b16 %v2330, %v2329
      %v2451 = vpack.c.b16 %v2332, %v2331
      %v2452 = vpack.c.b16 %v2334, %v2333
      %v2453 = vpack.c.b16 %v2336, %v2335
      %v2454 = vpack.c.b16 %v2338, %v2337
      %v2455 = vpack.c.b16 %v2340, %v2339
      %v2456 = vpack.c.b16 %v2342, %v2341
      %v2457 = vpack.c.b16 %v2344, %v2343
      %v2458 = vpack.c.b16 %v2346, %v2345
      %v2459 = vpack.c.b16 %v2348, %v2347
      %v2460 = vpack.c.b16 %v2350, %v2349
      %v2461 = vpack.c.b16 %v2352, %v2351
      %v2462 = vpack.c.b16 %v2354, %v2353
      %v2463 = vpack.c.b16 %v2356, %v2355
      %v2464 = vpack.c.b16 %v2358, %v2357
      %v2465 = vpack.c.b16 %v2360, %v2359
      %v2466 = vpack.c.b16 %v2362, %v2361
      %v2467 = vpack.c.b16 %v2364, %v2363
      %v2468 = vpack.c.b16 %v2366, %v2365
      %v2469 = vpack.c.b16 %v2368, %v2367
      %v2470 = vpack.c.b16 %v2370, %v2369
      %v2471 = vpack.c.b16 %v2372, %v2371
      %v2472 = vpack.c.b16 %v2374, %v2373
      %v2473 = vpack.c.b16 %v2376, %v2375
      %v2474 = vpack.c.b16 %v2378, %v2377
      %v2475 = vpack.c.b16 %v2380, %v2379
      %v2476 = vpack.c.b16 %v2382, %v2381
      %v2477 = vpack.c.b16 %v2384, %v2383
      %v2478 = vpack.c.b16 %v2386, %v2385
      %v2479 = vpack.c.b16 %v2388, %v2387
      %v2480 = vpack.c.b16 %v2390, %v2389
      %v2481 = vpack.c.b16 %v2392, %v2391
      %v2482 = vpack.c.b16 %v2394, %v2393
      %v2483 = vpack.c.b16 %v2396, %v2395
      %v2484 = vpack.c.b16 %v2398, %v2397
      %v2485 = vpack.c.b16 %v2400, %v2399
      %v2486 = vpack.c.b16 %v2402, %v2401
      %v2487 = vpack.c.b16 %v2404, %v2403
      %v2488 = vpack.c.b16 %v2406, %v2405
      %v2489 = vpack.c.b16 %v2408, %v2407
      %v2490 = vpack.c.b16 %v2410, %v2409
      %v2491 = vpack.c.b16 %v2412, %v2411
      %v2492 = vpack.c.b16 %v2414, %v2413
      %v2493 = vpack.c.b16 %v2416, %v2415
      %v2494 = vpack.c.b16 %v2418, %v2417
      %v2495 = vpack.c.b16 %v2420, %v2419
      %v2496 = vpack.c.b16 %v2422, %v2421
      %v2497 = vpack.c.b16 %v2424, %v2423
      %v2498 = vpack.c.b16 %v2426, %v2425
      %v2499 = vpack.c.b16 %v2428, %v2427
      %v2500 = vpack.c.b16 %v2430, %v2429
      %v2501 = vpack.c.b16 %v2432, %v2431
      %v2502 = vpack.c.b16 %v2434, %v2433
      %v2503 = vpack.c.b16 %v2436, %v2435
      %v2504 = vpack.c.b16 %v2438, %v2437
      %v2505 = vpack.c.b16 %v2440, %v2439
      %v2506 = vpack.c.b16 %v2442, %v2441
      %2571 = vmatprep.subr.bf16.mxu0 0
      %2572 = vmatpush1.bf16.msra.mxu0 %v2443
      %2573 = vmatprep.subr.bf16.mxu0 0
      %2574 = vmatpush1.bf16.msra.mxu0 %v2444
      %2575 = vmatprep.subr.bf16.mxu0 0
      %2576 = vmatpush1.bf16.msra.mxu0 %v2445
      %2577 = vmatprep.subr.bf16.mxu0 0
      %2578 = vmatpush1.bf16.msra.mxu0 %v2446
      %2579 = vmatprep.subr.bf16.mxu0 0
      %2580 = vmatpush1.bf16.msra.mxu0 %v2447
      %2581 = vmatprep.subr.bf16.mxu0 0
      %2582 = vmatpush1.bf16.msra.mxu0 %v2448
      %2583 = vmatprep.subr.bf16.mxu0 0
      %2584 = vmatpush1.bf16.msra.mxu0 %v2449
      %2585 = vmatprep.subr.bf16.mxu0 0
      %2586 = vmatpush1.bf16.msra.mxu0 %v2450
      %2587 = vmatprep.subr.bf16.mxu0 0
      %2588 = vmatpush1.bf16.msra.mxu0 %v2451
      %2589 = vmatprep.subr.bf16.mxu0 0
      %2590 = vmatpush1.bf16.msra.mxu0 %v2452
      %2591 = vmatprep.subr.bf16.mxu0 0
      %2592 = vmatpush1.bf16.msra.mxu0 %v2453
      %2593 = vmatprep.subr.bf16.mxu0 0
      %2594 = vmatpush1.bf16.msra.mxu0 %v2454
      %2595 = vmatprep.subr.bf16.mxu0 0
      %2596 = vmatpush1.bf16.msra.mxu0 %v2455
      %2597 = vmatprep.subr.bf16.mxu0 0
      %2598 = vmatpush1.bf16.msra.mxu0 %v2456
      %2599 = vmatprep.subr.bf16.mxu0 0
      %2600 = vmatpush1.bf16.msra.mxu0 %v2457
      %2601 = vmatprep.subr.bf16.mxu0 0
      %2602 = vmatpush1.bf16.msra.mxu0 %v2458
      %2603 = vmatprep.mubr.bf16.mxu0 %v1932
      %2604 = vmatmul.mubr.bf16.gmra.mrb[0].mxu0 %v1931
      %v2605 = vpop.f32.mrb[0].mxu0
      %v2606 = vadd.f32 0.0, %v2605
      %v2607 = vpop.f32.mrb[0].mxu0
      %v2608 = vpop.f32.mrb[0].mxu0
      %v2609 = vadd.f32 0.0, %v2608
      %v2610 = vpop.f32.mrb[0].mxu0
      %2611 = vmatprep.mubr.bf16.mxu0 %v1940
      %2612 = vmatmul.mubr.bf16.gmra.mrb[0].mxu0 %v1939
      %v2613 = vpop.f32.mrb[0].mxu0
      %v2614 = vadd.f32 0.0, %v2613
      %v2615 = vpop.f32.mrb[0].mxu0
      %v2616 = vpop.f32.mrb[0].mxu0
      %v2617 = vadd.f32 0.0, %v2616
      %v2618 = vpop.f32.mrb[0].mxu0
      %2619 = vmatprep.mubr.bf16.mxu0 %v1948
      %2620 = vmatmul.mubr.bf16.gmra.mrb[0].mxu0 %v1947
      %v2621 = vpop.f32.mrb[0].mxu0
      %v2622 = vadd.f32 0.0, %v2621
      %v2623 = vpop.f32.mrb[0].mxu0
      %v2624 = vpop.f32.mrb[0].mxu0
      %v2625 = vadd.f32 0.0, %v2624
      %v2626 = vpop.f32.mrb[0].mxu0
      %2627 = vmatprep.mubr.bf16.mxu0 %v1956
      %2628 = vmatmul.mubr.bf16.gmra.mrb[0].mxu0 %v1955
      %v2629 = vpop.f32.mrb[0].mxu0
      %v2630 = vadd.f32 0.0, %v2629
      %v2631 = vpop.f32.mrb[0].mxu0
      %v2632 = vpop.f32.mrb[0].mxu0
      %v2633 = vadd.f32 0.0, %v2632
      %v2634 = vpop.f32.mrb[0].mxu0
      %2635 = vmatprep.mubr.bf16.mxu0 %v1964
      %2636 = vmatmul.mubr.bf16.gmra.mrb[0].mxu0 %v1963
      %v2637 = vpop.f32.mrb[0].mxu0
      %v2638 = vadd.f32 0.0, %v2637
      %v2639 = vpop.f32.mrb[0].mxu0
      %v2640 = vpop.f32.mrb[0].mxu0
      %v2641 = vadd.f32 0.0, %v2640
      %v2642 = vpop.f32.mrb[0].mxu0
      %2643 = vmatprep.mubr.bf16.mxu0 %v1972
      %2644 = vmatmul.mubr.bf16.gmra.mrb[0].mxu0 %v1971
      %v2645 = vpop.f32.mrb[0].mxu0
      %v2646 = vadd.f32 0.0, %v2645
      %v2647 = vpop.f32.mrb[0].mxu0
      %v2648 = vpop.f32.mrb[0].mxu0
      %v2649 = vadd.f32 0.0, %v2648
      %v2650 = vpop.f32.mrb[0].mxu0
      %2651 = vmatprep.mubr.bf16.mxu0 %v1980
      %2652 = vmatmul.mubr.bf16.gmra.mrb[0].mxu0 %v1979
      %v2653 = vpop.f32.mrb[0].mxu0
      %v2654 = vadd.f32 0.0, %v2653
      %v2655 = vpop.f32.mrb[0].mxu0
      %v2656 = vpop.f32.mrb[0].mxu0
      %v2657 = vadd.f32 0.0, %v2656
      %v2658 = vpop.f32.mrb[0].mxu0
      %2659 = vmatprep.mubr.bf16.mxu0 %v1988
      %2660 = vmatmul.mubr.bf16.gmra.mrb[0].mxu0 %v1987
      %v2661 = vpop.f32.mrb[0].mxu0
      %v2662 = vadd.f32 0.0, %v2661
      %v2663 = vpop.f32.mrb[0].mxu0
      %v2664 = vpop.f32.mrb[0].mxu0
      %v2665 = vadd.f32 0.0, %v2664
      %v2666 = vpop.f32.mrb[0].mxu0
      %2667 = vmatprep.mubr.bf16.mxu0 %v1996
      %2668 = vmatmul.mubr.bf16.gmra.mrb[0].mxu0 %v1995
      %v2669 = vpop.f32.mrb[0].mxu0
      %v2670 = vadd.f32 0.0, %v2669
      %v2671 = vpop.f32.mrb[0].mxu0
      %v2672 = vpop.f32.mrb[0].mxu0
      %v2673 = vadd.f32 0.0, %v2672
      %v2674 = vpop.f32.mrb[0].mxu0
      %2675 = vmatprep.mubr.bf16.mxu0 %v2004
      %2676 = vmatmul.mubr.bf16.gmra.mrb[0].mxu0 %v2003
      %v2677 = vpop.f32.mrb[0].mxu0
      %v2678 = vadd.f32 0.0, %v2677
      %v2679 = vpop.f32.mrb[0].mxu0
      %v2680 = vpop.f32.mrb[0].mxu0
      %v2681 = vadd.f32 0.0, %v2680
      %v2682 = vpop.f32.mrb[0].mxu0
      %2683 = vmatprep.mubr.bf16.mxu0 %v2012
      %2684 = vmatmul.mubr.bf16.gmra.mrb[0].mxu0 %v2011
      %v2685 = vpop.f32.mrb[0].mxu0
      %v2686 = vadd.f32 0.0, %v2685
      %v2687 = vpop.f32.mrb[0].mxu0
      %v2688 = vpop.f32.mrb[0].mxu0
      %v2689 = vadd.f32 0.0, %v2688
      %v2690 = vpop.f32.mrb[0].mxu0
      %2691 = vmatprep.mubr.bf16.mxu0 %v2020
      %2692 = vmatmul.mubr.bf16.gmra.mrb[0].mxu0 %v2019
      %v2693 = vpop.f32.mrb[0].mxu0
      %v2694 = vadd.f32 0.0, %v2693
      %v2695 = vpop.f32.mrb[0].mxu0
      %v2696 = vpop.f32.mrb[0].mxu0
      %v2697 = vadd.f32 0.0, %v2696
      %v2698 = vpop.f32.mrb[0].mxu0
      %2699 = vmatprep.mubr.bf16.mxu0 %v2028
      %2700 = vmatmul.mubr.bf16.gmra.mrb[0].mxu0 %v2027
      %v2701 = vpop.f32.mrb[0].mxu0
      %v2702 = vadd.f32 0.0, %v2701
      %v2703 = vpop.f32.mrb[0].mxu0
      %v2704 = vpop.f32.mrb[0].mxu0
      %v2705 = vadd.f32 0.0, %v2704
      %v2706 = vpop.f32.mrb[0].mxu0
      %2707 = vmatprep.mubr.bf16.mxu0 %v2036
      %2708 = vmatmul.mubr.bf16.gmra.mrb[0].mxu0 %v2035
      %v2709 = vpop.f32.mrb[0].mxu0
      %v2710 = vadd.f32 0.0, %v2709
      %v2711 = vpop.f32.mrb[0].mxu0
      %v2712 = vpop.f32.mrb[0].mxu0
      %v2713 = vadd.f32 0.0, %v2712
      %v2714 = vpop.f32.mrb[0].mxu0
      %2715 = vmatprep.mubr.bf16.mxu0 %v2044
      %2716 = vmatmul.mubr.bf16.gmra.mrb[0].mxu0 %v2043
      %v2717 = vpop.f32.mrb[0].mxu0
      %v2718 = vadd.f32 0.0, %v2717
      %v2719 = vpop.f32.mrb[0].mxu0
      %v2720 = vpop.f32.mrb[0].mxu0
      %v2721 = vadd.f32 0.0, %v2720
      %v2722 = vpop.f32.mrb[0].mxu0
      %2723 = vmatprep.mubr.bf16.mxu0 %v2052
      %2724 = vmatmul.mubr.bf16.gmra.mrb[0].mxu0 %v2051
      %v2725 = vpop.f32.mrb[0].mxu0
      %v2726 = vadd.f32 0.0, %v2725
      %v2727 = vpop.f32.mrb[0].mxu0
      %v2728 = vpop.f32.mrb[0].mxu0
      %v2729 = vadd.f32 0.0, %v2728
      %v2730 = vpop.f32.mrb[0].mxu0
      %2731 = vdwg.mxu0
      %2732 = vmatprep.subr.bf16.mxu0 0
      %2733 = vmatpush1.bf16.msra.mxu0 %v2459
      %2734 = vmatprep.subr.bf16.mxu0 0
      %2735 = vmatpush1.bf16.msra.mxu0 %v2460
      %2736 = vmatprep.subr.bf16.mxu0 0
      %2737 = vmatpush1.bf16.msra.mxu0 %v2461
      %2738 = vmatprep.subr.bf16.mxu0 0
      %2739 = vmatpush1.bf16.msra.mxu0 %v2462
      %2740 = vmatprep.subr.bf16.mxu0 0
      %2741 = vmatpush1.bf16.msra.mxu0 %v2463
      %2742 = vmatprep.subr.bf16.mxu0 0
      %2743 = vmatpush1.bf16.msra.mxu0 %v2464
      %2744 = vmatprep.subr.bf16.mxu0 0
      %2745 = vmatpush1.bf16.msra.mxu0 %v2465
      %2746 = vmatprep.subr.bf16.mxu0 0
      %2747 = vmatpush1.bf16.msra.mxu0 %v2466
      %2748 = vmatprep.subr.bf16.mxu0 0
      %2749 = vmatpush1.bf16.msra.mxu0 %v2467
      %2750 = vmatprep.subr.bf16.mxu0 0
      %2751 = vmatpush1.bf16.msra.mxu0 %v2468
      %2752 = vmatprep.subr.bf16.mxu0 0
      %2753 = vmatpush1.bf16.msra.mxu0 %v2469
      %2754 = vmatprep.subr.bf16.mxu0 0
      %2755 = vmatpush1.bf16.msra.mxu0 %v2470
      %2756 = vmatprep.subr.bf16.mxu0 0
      %2757 = vmatpush1.bf16.msra.mxu0 %v2471
      %2758 = vmatprep.subr.bf16.mxu0 0
      %2759 = vmatpush1.bf16.msra.mxu0 %v2472
      %2760 = vmatprep.subr.bf16.mxu0 0
      %2761 = vmatpush1.bf16.msra.mxu0 %v2473
      %2762 = vmatprep.subr.bf16.mxu0 0
      %2763 = vmatpush1.bf16.msra.mxu0 %v2474
      %2764 = vmatprep.mubr.bf16.mxu0 %v1934
      %2765 = vmatmul.mubr.bf16.gmra.mrb[0].mxu0 %v1933
      %v2766 = vpop.f32.mrb[0].mxu0
      %v2767 = vadd.f32 %v2606, %v2766
      %v2768 = vpop.f32.mrb[0].mxu0
      %v2769 = vpop.f32.mrb[0].mxu0
      %v2770 = vadd.f32 %v2609, %v2769
      %v2771 = vpop.f32.mrb[0].mxu0
      %2772 = vmatprep.mubr.bf16.mxu0 %v1942
      %2773 = vmatmul.mubr.bf16.gmra.mrb[0].mxu0 %v1941
      %v2774 = vpop.f32.mrb[0].mxu0
      %v2775 = vadd.f32 %v2614, %v2774
      %v2776 = vpop.f32.mrb[0].mxu0
      %v2777 = vpop.f32.mrb[0].mxu0
      %v2778 = vadd.f32 %v2617, %v2777
      %v2779 = vpop.f32.mrb[0].mxu0
      %2780 = vmatprep.mubr.bf16.mxu0 %v1950
      %2781 = vmatmul.mubr.bf16.gmra.mrb[0].mxu0 %v1949
      %v2782 = vpop.f32.mrb[0].mxu0
      %v2783 = vadd.f32 %v2622, %v2782
      %v2784 = vpop.f32.mrb[0].mxu0
      %v2785 = vpop.f32.mrb[0].mxu0
      %v2786 = vadd.f32 %v2625, %v2785
      %v2787 = vpop.f32.mrb[0].mxu0
      %2788 = vmatprep.mubr.bf16.mxu0 %v1958
      %2789 = vmatmul.mubr.bf16.gmra.mrb[0].mxu0 %v1957
      %v2790 = vpop.f32.mrb[0].mxu0
      %v2791 = vadd.f32 %v2630, %v2790
      %v2792 = vpop.f32.mrb[0].mxu0
      %v2793 = vpop.f32.mrb[0].mxu0
      %v2794 = vadd.f32 %v2633, %v2793
      %v2795 = vpop.f32.mrb[0].mxu0
      %2796 = vmatprep.mubr.bf16.mxu0 %v1966
      %2797 = vmatmul.mubr.bf16.gmra.mrb[0].mxu0 %v1965
      %v2798 = vpop.f32.mrb[0].mxu0
      %v2799 = vadd.f32 %v2638, %v2798
      %v2800 = vpop.f32.mrb[0].mxu0
      %v2801 = vpop.f32.mrb[0].mxu0
      %v2802 = vadd.f32 %v2641, %v2801
      %v2803 = vpop.f32.mrb[0].mxu0
      %2804 = vmatprep.mubr.bf16.mxu0 %v1974
      %2805 = vmatmul.mubr.bf16.gmra.mrb[0].mxu0 %v1973
      %v2806 = vpop.f32.mrb[0].mxu0
      %v2807 = vadd.f32 %v2646, %v2806
      %v2808 = vpop.f32.mrb[0].mxu0
      %v2809 = vpop.f32.mrb[0].mxu0
      %v2810 = vadd.f32 %v2649, %v2809
      %v2811 = vpop.f32.mrb[0].mxu0
      %2812 = vmatprep.mubr.bf16.mxu0 %v1982
      %2813 = vmatmul.mubr.bf16.gmra.mrb[0].mxu0 %v1981
      %v2814 = vpop.f32.mrb[0].mxu0
      %v2815 = vadd.f32 %v2654, %v2814
      %v2816 = vpop.f32.mrb[0].mxu0
      %v2817 = vpop.f32.mrb[0].mxu0
      %v2818 = vadd.f32 %v2657, %v2817
      %v2819 = vpop.f32.mrb[0].mxu0
      %2820 = vmatprep.mubr.bf16.mxu0 %v1990
      %2821 = vmatmul.mubr.bf16.gmra.mrb[0].mxu0 %v1989
      %v2822 = vpop.f32.mrb[0].mxu0
      %v2823 = vadd.f32 %v2662, %v2822
      %v2824 = vpop.f32.mrb[0].mxu0
      %v2825 = vpop.f32.mrb[0].mxu0
      %v2826 = vadd.f32 %v2665, %v2825
      %v2827 = vpop.f32.mrb[0].mxu0
      %2828 = vmatprep.mubr.bf16.mxu0 %v1998
      %2829 = vmatmul.mubr.bf16.gmra.mrb[0].mxu0 %v1997
      %v2830 = vpop.f32.mrb[0].mxu0
      %v2831 = vadd.f32 %v2670, %v2830
      %v2832 = vpop.f32.mrb[0].mxu0
      %v2833 = vpop.f32.mrb[0].mxu0
      %v2834 = vadd.f32 %v2673, %v2833
      %v2835 = vpop.f32.mrb[0].mxu0
      %2836 = vmatprep.mubr.bf16.mxu0 %v2006
      %2837 = vmatmul.mubr.bf16.gmra.mrb[0].mxu0 %v2005
      %v2838 = vpop.f32.mrb[0].mxu0
      %v2839 = vadd.f32 %v2678, %v2838
      %v2840 = vpop.f32.mrb[0].mxu0
      %v2841 = vpop.f32.mrb[0].mxu0
      %v2842 = vadd.f32 %v2681, %v2841
      %v2843 = vpop.f32.mrb[0].mxu0
      %2844 = vmatprep.mubr.bf16.mxu0 %v2014
      %2845 = vmatmul.mubr.bf16.gmra.mrb[0].mxu0 %v2013
      %v2846 = vpop.f32.mrb[0].mxu0
      %v2847 = vadd.f32 %v2686, %v2846
      %v2848 = vpop.f32.mrb[0].mxu0
      %v2849 = vpop.f32.mrb[0].mxu0
      %v2850 = vadd.f32 %v2689, %v2849
      %v2851 = vpop.f32.mrb[0].mxu0
      %2852 = vmatprep.mubr.bf16.mxu0 %v2022
      %2853 = vmatmul.mubr.bf16.gmra.mrb[0].mxu0 %v2021
      %v2854 = vpop.f32.mrb[0].mxu0
      %v2855 = vadd.f32 %v2694, %v2854
      %v2856 = vpop.f32.mrb[0].mxu0
      %v2857 = vpop.f32.mrb[0].mxu0
      %v2858 = vadd.f32 %v2697, %v2857
      %v2859 = vpop.f32.mrb[0].mxu0
      %2860 = vmatprep.mubr.bf16.mxu0 %v2030
      %2861 = vmatmul.mubr.bf16.gmra.mrb[0].mxu0 %v2029
      %v2862 = vpop.f32.mrb[0].mxu0
      %v2863 = vadd.f32 %v2702, %v2862
      %v2864 = vpop.f32.mrb[0].mxu0
      %v2865 = vpop.f32.mrb[0].mxu0
      %v2866 = vadd.f32 %v2705, %v2865
      %v2867 = vpop.f32.mrb[0].mxu0
      %2868 = vmatprep.mubr.bf16.mxu0 %v2038
      %2869 = vmatmul.mubr.bf16.gmra.mrb[0].mxu0 %v2037
      %v2870 = vpop.f32.mrb[0].mxu0
      %v2871 = vadd.f32 %v2710, %v2870
      %v2872 = vpop.f32.mrb[0].mxu0
      %v2873 = vpop.f32.mrb[0].mxu0
      %v2874 = vadd.f32 %v2713, %v2873
      %v2875 = vpop.f32.mrb[0].mxu0
      %2876 = vmatprep.mubr.bf16.mxu0 %v2046
      %2877 = vmatmul.mubr.bf16.gmra.mrb[0].mxu0 %v2045
      %v2878 = vpop.f32.mrb[0].mxu0
      %v2879 = vadd.f32 %v2718, %v2878
      %v2880 = vpop.f32.mrb[0].mxu0
      %v2881 = vpop.f32.mrb[0].mxu0
      %v2882 = vadd.f32 %v2721, %v2881
      %v2883 = vpop.f32.mrb[0].mxu0
      %2884 = vmatprep.mubr.bf16.mxu0 %v2054
      %2885 = vmatmul.mubr.bf16.gmra.mrb[0].mxu0 %v2053
      %v2886 = vpop.f32.mrb[0].mxu0
      %v2887 = vadd.f32 %v2726, %v2886
      %v2888 = vpop.f32.mrb[0].mxu0
      %v2889 = vpop.f32.mrb[0].mxu0
      %v2890 = vadd.f32 %v2729, %v2889
      %v2891 = vpop.f32.mrb[0].mxu0
      %2892 = vdwg.mxu0
      %2893 = vmatprep.subr.bf16.mxu0 0
      %2894 = vmatpush1.bf16.msra.mxu0 %v2475
      %2895 = vmatprep.subr.bf16.mxu0 0
      %2896 = vmatpush1.bf16.msra.mxu0 %v2476
      %2897 = vmatprep.subr.bf16.mxu0 0
      %2898 = vmatpush1.bf16.msra.mxu0 %v2477
      %2899 = vmatprep.subr.bf16.mxu0 0
      %2900 = vmatpush1.bf16.msra.mxu0 %v2478
      %2901 = vmatprep.subr.bf16.mxu0 0
      %2902 = vmatpush1.bf16.msra.mxu0 %v2479
      %2903 = vmatprep.subr.bf16.mxu0 0
      %2904 = vmatpush1.bf16.msra.mxu0 %v2480
      %2905 = vmatprep.subr.bf16.mxu0 0
      %2906 = vmatpush1.bf16.msra.mxu0 %v2481
      %2907 = vmatprep.subr.bf16.mxu0 0
      %2908 = vmatpush1.bf16.msra.mxu0 %v2482
      %2909 = vmatprep.subr.bf16.mxu0 0
      %2910 = vmatpush1.bf16.msra.mxu0 %v2483
      %2911 = vmatprep.subr.bf16.mxu0 0
      %2912 = vmatpush1.bf16.msra.mxu0 %v2484
      %2913 = vmatprep.subr.bf16.mxu0 0
      %2914 = vmatpush1.bf16.msra.mxu0 %v2485
      %2915 = vmatprep.subr.bf16.mxu0 0
      %2916 = vmatpush1.bf16.msra.mxu0 %v2486
      %2917 = vmatprep.subr.bf16.mxu0 0
      %2918 = vmatpush1.bf16.msra.mxu0 %v2487
      %2919 = vmatprep.subr.bf16.mxu0 0
      %2920 = vmatpush1.bf16.msra.mxu0 %v2488
      %2921 = vmatprep.subr.bf16.mxu0 0
      %2922 = vmatpush1.bf16.msra.mxu0 %v2489
      %2923 = vmatprep.subr.bf16.mxu0 0
      %2924 = vmatpush1.bf16.msra.mxu0 %v2490
      %2925 = vmatprep.mubr.bf16.mxu0 %v1936
      %2926 = vmatmul.mubr.bf16.gmra.mrb[0].mxu0 %v1935
      %v2927 = vpop.f32.mrb[0].mxu0
      %v2928 = vadd.f32 %v2767, %v2927
      %v2929 = vpop.f32.mrb[0].mxu0
      %v2930 = vpop.f32.mrb[0].mxu0
      %v2931 = vadd.f32 %v2770, %v2930
      %v2932 = vpop.f32.mrb[0].mxu0
      %2933 = vmatprep.mubr.bf16.mxu0 %v1944
      %2934 = vmatmul.mubr.bf16.gmra.mrb[0].mxu0 %v1943
      %v2935 = vpop.f32.mrb[0].mxu0
      %v2936 = vadd.f32 %v2775, %v2935
      %v2937 = vpop.f32.mrb[0].mxu0
      %v2938 = vpop.f32.mrb[0].mxu0
      %v2939 = vadd.f32 %v2778, %v2938
      %v2940 = vpop.f32.mrb[0].mxu0
      %2941 = vmatprep.mubr.bf16.mxu0 %v1952
      %2942 = vmatmul.mubr.bf16.gmra.mrb[0].mxu0 %v1951
      %v2943 = vpop.f32.mrb[0].mxu0
      %v2944 = vadd.f32 %v2783, %v2943
      %v2945 = vpop.f32.mrb[0].mxu0
      %v2946 = vpop.f32.mrb[0].mxu0
      %v2947 = vadd.f32 %v2786, %v2946
      %v2948 = vpop.f32.mrb[0].mxu0
      %2949 = vmatprep.mubr.bf16.mxu0 %v1960
      %2950 = vmatmul.mubr.bf16.gmra.mrb[0].mxu0 %v1959
      %v2951 = vpop.f32.mrb[0].mxu0
      %v2952 = vadd.f32 %v2791, %v2951
      %v2953 = vpop.f32.mrb[0].mxu0
      %v2954 = vpop.f32.mrb[0].mxu0
      %v2955 = vadd.f32 %v2794, %v2954
      %v2956 = vpop.f32.mrb[0].mxu0
      %2957 = vmatprep.mubr.bf16.mxu0 %v1968
      %2958 = vmatmul.mubr.bf16.gmra.mrb[0].mxu0 %v1967
      %v2959 = vpop.f32.mrb[0].mxu0
      %v2960 = vadd.f32 %v2799, %v2959
      %v2961 = vpop.f32.mrb[0].mxu0
      %v2962 = vpop.f32.mrb[0].mxu0
      %v2963 = vadd.f32 %v2802, %v2962
      %v2964 = vpop.f32.mrb[0].mxu0
      %2965 = vmatprep.mubr.bf16.mxu0 %v1976
      %2966 = vmatmul.mubr.bf16.gmra.mrb[0].mxu0 %v1975
      %v2967 = vpop.f32.mrb[0].mxu0
      %v2968 = vadd.f32 %v2807, %v2967
      %v2969 = vpop.f32.mrb[0].mxu0
      %v2970 = vpop.f32.mrb[0].mxu0
      %v2971 = vadd.f32 %v2810, %v2970
      %v2972 = vpop.f32.mrb[0].mxu0
      %2973 = vmatprep.mubr.bf16.mxu0 %v1984
      %2974 = vmatmul.mubr.bf16.gmra.mrb[0].mxu0 %v1983
      %v2975 = vpop.f32.mrb[0].mxu0
      %v2976 = vadd.f32 %v2815, %v2975
      %v2977 = vpop.f32.mrb[0].mxu0
      %v2978 = vpop.f32.mrb[0].mxu0
      %v2979 = vadd.f32 %v2818, %v2978
      %v2980 = vpop.f32.mrb[0].mxu0
      %2981 = vmatprep.mubr.bf16.mxu0 %v1992
      %2982 = vmatmul.mubr.bf16.gmra.mrb[0].mxu0 %v1991
      %v2983 = vpop.f32.mrb[0].mxu0
      %v2984 = vadd.f32 %v2823, %v2983
      %v2985 = vpop.f32.mrb[0].mxu0
      %v2986 = vpop.f32.mrb[0].mxu0
      %v2987 = vadd.f32 %v2826, %v2986
      %v2988 = vpop.f32.mrb[0].mxu0
      %2989 = vmatprep.mubr.bf16.mxu0 %v2000
      %2990 = vmatmul.mubr.bf16.gmra.mrb[0].mxu0 %v1999
      %v2991 = vpop.f32.mrb[0].mxu0
      %v2992 = vadd.f32 %v2831, %v2991
      %v2993 = vpop.f32.mrb[0].mxu0
      %v2994 = vpop.f32.mrb[0].mxu0
      %v2995 = vadd.f32 %v2834, %v2994
      %v2996 = vpop.f32.mrb[0].mxu0
      %2997 = vmatprep.mubr.bf16.mxu0 %v2008
      %2998 = vmatmul.mubr.bf16.gmra.mrb[0].mxu0 %v2007
      %v2999 = vpop.f32.mrb[0].mxu0
      %v3000 = vadd.f32 %v2839, %v2999
      %v3001 = vpop.f32.mrb[0].mxu0
      %v3002 = vpop.f32.mrb[0].mxu0
      %v3003 = vadd.f32 %v2842, %v3002
      %v3004 = vpop.f32.mrb[0].mxu0
      %3005 = vmatprep.mubr.bf16.mxu0 %v2016
      %3006 = vmatmul.mubr.bf16.gmra.mrb[0].mxu0 %v2015
      %v3007 = vpop.f32.mrb[0].mxu0
      %v3008 = vadd.f32 %v2847, %v3007
      %v3009 = vpop.f32.mrb[0].mxu0
      %v3010 = vpop.f32.mrb[0].mxu0
      %v3011 = vadd.f32 %v2850, %v3010
      %v3012 = vpop.f32.mrb[0].mxu0
      %3013 = vmatprep.mubr.bf16.mxu0 %v2024
      %3014 = vmatmul.mubr.bf16.gmra.mrb[0].mxu0 %v2023
      %v3015 = vpop.f32.mrb[0].mxu0
      %v3016 = vadd.f32 %v2855, %v3015
      %v3017 = vpop.f32.mrb[0].mxu0
      %v3018 = vpop.f32.mrb[0].mxu0
      %v3019 = vadd.f32 %v2858, %v3018
      %v3020 = vpop.f32.mrb[0].mxu0
      %3021 = vmatprep.mubr.bf16.mxu0 %v2032
      %3022 = vmatmul.mubr.bf16.gmra.mrb[0].mxu0 %v2031
      %v3023 = vpop.f32.mrb[0].mxu0
      %v3024 = vadd.f32 %v2863, %v3023
      %v3025 = vpop.f32.mrb[0].mxu0
      %v3026 = vpop.f32.mrb[0].mxu0
      %v3027 = vadd.f32 %v2866, %v3026
      %v3028 = vpop.f32.mrb[0].mxu0
      %3029 = vmatprep.mubr.bf16.mxu0 %v2040
      %3030 = vmatmul.mubr.bf16.gmra.mrb[0].mxu0 %v2039
      %v3031 = vpop.f32.mrb[0].mxu0
      %v3032 = vadd.f32 %v2871, %v3031
      %v3033 = vpop.f32.mrb[0].mxu0
      %v3034 = vpop.f32.mrb[0].mxu0
      %v3035 = vadd.f32 %v2874, %v3034
      %v3036 = vpop.f32.mrb[0].mxu0
      %3037 = vmatprep.mubr.bf16.mxu0 %v2048
      %3038 = vmatmul.mubr.bf16.gmra.mrb[0].mxu0 %v2047
      %v3039 = vpop.f32.mrb[0].mxu0
      %v3040 = vadd.f32 %v2879, %v3039
      %v3041 = vpop.f32.mrb[0].mxu0
      %v3042 = vpop.f32.mrb[0].mxu0
      %v3043 = vadd.f32 %v2882, %v3042
      %v3044 = vpop.f32.mrb[0].mxu0
      %3045 = vmatprep.mubr.bf16.mxu0 %v2056
      %3046 = vmatmul.mubr.bf16.gmra.mrb[0].mxu0 %v2055
      %v3047 = vpop.f32.mrb[0].mxu0
      %v3048 = vadd.f32 %v2887, %v3047
      %v3049 = vpop.f32.mrb[0].mxu0
      %v3050 = vpop.f32.mrb[0].mxu0
      %v3051 = vadd.f32 %v2890, %v3050
      %v3052 = vpop.f32.mrb[0].mxu0
      %3053 = vdwg.mxu0
      %3054 = vmatprep.subr.bf16.mxu0 0
      %3055 = vmatpush1.bf16.msra.mxu0 %v2491
      %3056 = vmatprep.subr.bf16.mxu0 0
      %3057 = vmatpush1.bf16.msra.mxu0 %v2492
      %3058 = vmatprep.subr.bf16.mxu0 0
      %3059 = vmatpush1.bf16.msra.mxu0 %v2493
      %3060 = vmatprep.subr.bf16.mxu0 0
      %3061 = vmatpush1.bf16.msra.mxu0 %v2494
      %3062 = vmatprep.subr.bf16.mxu0 0
      %3063 = vmatpush1.bf16.msra.mxu0 %v2495
      %3064 = vmatprep.subr.bf16.mxu0 0
      %3065 = vmatpush1.bf16.msra.mxu0 %v2496
      %3066 = vmatprep.subr.bf16.mxu0 0
      %3067 = vmatpush1.bf16.msra.mxu0 %v2497
      %3068 = vmatprep.subr.bf16.mxu0 0
      %3069 = vmatpush1.bf16.msra.mxu0 %v2498
      %3070 = vmatprep.subr.bf16.mxu0 0
      %3071 = vmatpush1.bf16.msra.mxu0 %v2499
      %3072 = vmatprep.subr.bf16.mxu0 0
      %3073 = vmatpush1.bf16.msra.mxu0 %v2500
      %3074 = vmatprep.subr.bf16.mxu0 0
      %3075 = vmatpush1.bf16.msra.mxu0 %v2501
      %3076 = vmatprep.subr.bf16.mxu0 0
      %3077 = vmatpush1.bf16.msra.mxu0 %v2502
      %3078 = vmatprep.subr.bf16.mxu0 0
      %3079 = vmatpush1.bf16.msra.mxu0 %v2503
      %3080 = vmatprep.subr.bf16.mxu0 0
      %3081 = vmatpush1.bf16.msra.mxu0 %v2504
      %3082 = vmatprep.subr.bf16.mxu0 0
      %3083 = vmatpush1.bf16.msra.mxu0 %v2505
      %3084 = vmatprep.subr.bf16.mxu0 0
      %3085 = vmatpush1.bf16.msra.mxu0 %v2506
      %3086 = vmatprep.mubr.bf16.mxu0 %v1938
      %3087 = vmatmul.mubr.bf16.gmra.mrb[0].mxu0 %v1937
      %v3088 = vpop.f32.mrb[0].mxu0
      %v3089 = vadd.f32 %v2928, %v3088
      %v3090 = vpop.f32.mrb[0].mxu0
      %v3091 = vpop.f32.mrb[0].mxu0
      %v3092 = vadd.f32 %v2931, %v3091
      %v3093 = vpop.f32.mrb[0].mxu0
      %3094 = vmatprep.mubr.bf16.mxu0 %v1946
      %3095 = vmatmul.mubr.bf16.gmra.mrb[0].mxu0 %v1945
      %v3096 = vpop.f32.mrb[0].mxu0
      %v3097 = vadd.f32 %v2936, %v3096
      %v3098 = vpop.f32.mrb[0].mxu0
      %v3099 = vpop.f32.mrb[0].mxu0
      %v3100 = vadd.f32 %v2939, %v3099
      %v3101 = vpop.f32.mrb[0].mxu0
      %3102 = vmatprep.mubr.bf16.mxu0 %v1954
      %3103 = vmatmul.mubr.bf16.gmra.mrb[0].mxu0 %v1953
      %v3104 = vpop.f32.mrb[0].mxu0
      %v3105 = vadd.f32 %v2944, %v3104
      %v3106 = vpop.f32.mrb[0].mxu0
      %v3107 = vpop.f32.mrb[0].mxu0
      %v3108 = vadd.f32 %v2947, %v3107
      %v3109 = vpop.f32.mrb[0].mxu0
      %3110 = vmatprep.mubr.bf16.mxu0 %v1962
      %3111 = vmatmul.mubr.bf16.gmra.mrb[0].mxu0 %v1961
      %v3112 = vpop.f32.mrb[0].mxu0
      %v3113 = vadd.f32 %v2952, %v3112
      %v3114 = vpop.f32.mrb[0].mxu0
      %v3115 = vpop.f32.mrb[0].mxu0
      %v3116 = vadd.f32 %v2955, %v3115
      %v3117 = vpop.f32.mrb[0].mxu0
      %3118 = vmatprep.mubr.bf16.mxu0 %v1970
      %3119 = vmatmul.mubr.bf16.gmra.mrb[0].mxu0 %v1969
      %v3120 = vpop.f32.mrb[0].mxu0
      %v3121 = vadd.f32 %v2960, %v3120
      %v3122 = vpop.f32.mrb[0].mxu0
      %v3123 = vpop.f32.mrb[0].mxu0
      %v3124 = vadd.f32 %v2963, %v3123
      %v3125 = vpop.f32.mrb[0].mxu0
      %3126 = vmatprep.mubr.bf16.mxu0 %v1978
      %3127 = vmatmul.mubr.bf16.gmra.mrb[0].mxu0 %v1977
      %v3128 = vpop.f32.mrb[0].mxu0
      %v3129 = vadd.f32 %v2968, %v3128
      %v3130 = vpop.f32.mrb[0].mxu0
      %v3131 = vpop.f32.mrb[0].mxu0
      %v3132 = vadd.f32 %v2971, %v3131
      %v3133 = vpop.f32.mrb[0].mxu0
      %3134 = vmatprep.mubr.bf16.mxu0 %v1986
      %3135 = vmatmul.mubr.bf16.gmra.mrb[0].mxu0 %v1985
      %v3136 = vpop.f32.mrb[0].mxu0
      %v3137 = vadd.f32 %v2976, %v3136
      %v3138 = vpop.f32.mrb[0].mxu0
      %v3139 = vpop.f32.mrb[0].mxu0
      %v3140 = vadd.f32 %v2979, %v3139
      %v3141 = vpop.f32.mrb[0].mxu0
      %3142 = vmatprep.mubr.bf16.mxu0 %v1994
      %3143 = vmatmul.mubr.bf16.gmra.mrb[0].mxu0 %v1993
      %v3144 = vpop.f32.mrb[0].mxu0
      %v3145 = vadd.f32 %v2984, %v3144
      %v3146 = vpop.f32.mrb[0].mxu0
      %v3147 = vpop.f32.mrb[0].mxu0
      %v3148 = vadd.f32 %v2987, %v3147
      %v3149 = vpop.f32.mrb[0].mxu0
      %3150 = vmatprep.mubr.bf16.mxu0 %v2002
      %3151 = vmatmul.mubr.bf16.gmra.mrb[0].mxu0 %v2001
      %v3152 = vpop.f32.mrb[0].mxu0
      %v3153 = vadd.f32 %v2992, %v3152
      %v3154 = vpop.f32.mrb[0].mxu0
      %v3155 = vpop.f32.mrb[0].mxu0
      %v3156 = vadd.f32 %v2995, %v3155
      %v3157 = vpop.f32.mrb[0].mxu0
      %3158 = vmatprep.mubr.bf16.mxu0 %v2010
      %3159 = vmatmul.mubr.bf16.gmra.mrb[0].mxu0 %v2009
      %v3160 = vpop.f32.mrb[0].mxu0
      %v3161 = vadd.f32 %v3000, %v3160
      %v3162 = vpop.f32.mrb[0].mxu0
      %v3163 = vpop.f32.mrb[0].mxu0
      %v3164 = vadd.f32 %v3003, %v3163
      %v3165 = vpop.f32.mrb[0].mxu0
      %3166 = vmatprep.mubr.bf16.mxu0 %v2018
      %3167 = vmatmul.mubr.bf16.gmra.mrb[0].mxu0 %v2017
      %v3168 = vpop.f32.mrb[0].mxu0
      %v3169 = vadd.f32 %v3008, %v3168
      %v3170 = vpop.f32.mrb[0].mxu0
      %v3171 = vpop.f32.mrb[0].mxu0
      %v3172 = vadd.f32 %v3011, %v3171
      %v3173 = vpop.f32.mrb[0].mxu0
      %3174 = vmatprep.mubr.bf16.mxu0 %v2026
      %3175 = vmatmul.mubr.bf16.gmra.mrb[0].mxu0 %v2025
      %v3176 = vpop.f32.mrb[0].mxu0
      %v3177 = vadd.f32 %v3016, %v3176
      %v3178 = vpop.f32.mrb[0].mxu0
      %v3179 = vpop.f32.mrb[0].mxu0
      %v3180 = vadd.f32 %v3019, %v3179
      %v3181 = vpop.f32.mrb[0].mxu0
      %3182 = vmatprep.mubr.bf16.mxu0 %v2034
      %3183 = vmatmul.mubr.bf16.gmra.mrb[0].mxu0 %v2033
      %v3184 = vpop.f32.mrb[0].mxu0
      %v3185 = vadd.f32 %v3024, %v3184
      %v3186 = vpop.f32.mrb[0].mxu0
      %v3187 = vpop.f32.mrb[0].mxu0
      %v3188 = vadd.f32 %v3027, %v3187
      %v3189 = vpop.f32.mrb[0].mxu0
      %3190 = vmatprep.mubr.bf16.mxu0 %v2042
      %3191 = vmatmul.mubr.bf16.gmra.mrb[0].mxu0 %v2041
      %v3192 = vpop.f32.mrb[0].mxu0
      %v3193 = vadd.f32 %v3032, %v3192
      %v3194 = vpop.f32.mrb[0].mxu0
      %v3195 = vpop.f32.mrb[0].mxu0
      %v3196 = vadd.f32 %v3035, %v3195
      %v3197 = vpop.f32.mrb[0].mxu0
      %3198 = vmatprep.mubr.bf16.mxu0 %v2050
      %3199 = vmatmul.mubr.bf16.gmra.mrb[0].mxu0 %v2049
      %v3200 = vpop.f32.mrb[0].mxu0
      %v3201 = vadd.f32 %v3040, %v3200
      %v3202 = vpop.f32.mrb[0].mxu0
      %v3203 = vpop.f32.mrb[0].mxu0
      %v3204 = vadd.f32 %v3043, %v3203
      %v3205 = vpop.f32.mrb[0].mxu0
      %3206 = vmatprep.mubr.bf16.mxu0 %v2058
      %3207 = vmatmul.mubr.bf16.gmra.mrb[0].mxu0 %v2057
      %v3208 = vpop.f32.mrb[0].mxu0
      %v3209 = vadd.f32 %v3048, %v3208
      %v3210 = vpop.f32.mrb[0].mxu0
      %v3211 = vpop.f32.mrb[0].mxu0
      %v3212 = vadd.f32 %v3051, %v3211
      %v3213 = vpop.f32.mrb[0].mxu0
      %3214 = vdwg.mxu0
      %v3215 = vadd.f32 %v3089, %v3092
      %v3216 = vadd.f32 %v3215, %v3097
      %v3217 = vadd.f32 %v3216, %v3100
      %v3218 = vadd.f32 %v3217, %v3105
      %v3219 = vadd.f32 %v3218, %v3108
      %v3220 = vadd.f32 %v3219, %v3113
      %v3221 = vadd.f32 %v3220, %v3116
      %v3222 = vadd.f32 %v3221, %v3121
      %v3223 = vadd.f32 %v3222, %v3124
      %v3224 = vadd.f32 %v3223, %v3129
      %v3225 = vadd.f32 %v3224, %v3132
      %v3226 = vadd.f32 %v3225, %v3137
      %v3227 = vadd.f32 %v3226, %v3140
      %v3228 = vadd.f32 %v3227, %v3145
      %v3229 = vadd.f32 %v3228, %v3148
      %v3230 = vadd.f32 %v3229, %v3153
      %v3231 = vadd.f32 %v3230, %v3156
      %v3232 = vadd.f32 %v3231, %v3161
      %v3233 = vadd.f32 %v3232, %v3164
      %v3234 = vadd.f32 %v3233, %v3169
      %v3235 = vadd.f32 %v3234, %v3172
      %v3236 = vadd.f32 %v3235, %v3177
      %v3237 = vadd.f32 %v3236, %v3180
      %v3238 = vadd.f32 %v3237, %v3185
      %v3239 = vadd.f32 %v3238, %v3188
      %v3240 = vadd.f32 %v3239, %v3193
      %v3241 = vadd.f32 %v3240, %v3196
      %v3242 = vadd.f32 %v3241, %v3201
      %v3243 = vadd.f32 %v3242, %v3204
      %v3244 = vadd.f32 %v3243, %v3209
      %v3245 = vadd.f32 %v3244, %v3212
      %v3246 = vrot.slane %v3245, 4
      %v3247 = vadd.f32 %v3245, %v3246
      %v3248 = vrot.slane %v3247, 2
      %v3249 = vadd.f32 %v3247, %v3248
      %v3250 = vrot.slane %v3249, 1
      %v3251 = vadd.f32 %v3249, %v3250
      %3252 = vst [vmem:[%s271] sm:$0x1] %v3251
      %v3253 = vmul.f32 %v3089, %v3089
      %v3254 = vmul.f32 %v3092, %v3092
      %v3255 = vmul.f32 %v3097, %v3097
      %v3256 = vmul.f32 %v3100, %v3100
      %v3257 = vmul.f32 %v3105, %v3105
      %v3258 = vmul.f32 %v3108, %v3108
      %v3259 = vmul.f32 %v3113, %v3113
      %v3260 = vmul.f32 %v3116, %v3116
      %v3261 = vmul.f32 %v3121, %v3121
      %v3262 = vmul.f32 %v3124, %v3124
      %v3263 = vmul.f32 %v3129, %v3129
      %v3264 = vmul.f32 %v3132, %v3132
      %v3265 = vmul.f32 %v3137, %v3137
      %v3266 = vmul.f32 %v3140, %v3140
      %v3267 = vmul.f32 %v3145, %v3145
      %v3268 = vmul.f32 %v3148, %v3148
      %v3269 = vmul.f32 %v3153, %v3153
      %v3270 = vmul.f32 %v3156, %v3156
      %v3271 = vmul.f32 %v3161, %v3161
      %v3272 = vmul.f32 %v3164, %v3164
      %v3273 = vmul.f32 %v3169, %v3169
      %v3274 = vmul.f32 %v3172, %v3172
      %v3275 = vmul.f32 %v3177, %v3177
      %v3276 = vmul.f32 %v3180, %v3180
      %v3277 = vmul.f32 %v3185, %v3185
      %v3278 = vmul.f32 %v3188, %v3188
      %v3279 = vmul.f32 %v3193, %v3193
      %v3280 = vmul.f32 %v3196, %v3196
      %v3281 = vmul.f32 %v3201, %v3201
      %v3282 = vmul.f32 %v3204, %v3204
      %v3283 = vmul.f32 %v3209, %v3209
      %v3284 = vmul.f32 %v3212, %v3212
      %v3285 = vadd.f32 %v3253, %v3254
      %v3286 = vadd.f32 %v3285, %v3255
      %v3287 = vadd.f32 %v3286, %v3256
      %v3288 = vadd.f32 %v3287, %v3257
      %v3289 = vadd.f32 %v3288, %v3258
      %v3290 = vadd.f32 %v3289, %v3259
      %v3291 = vadd.f32 %v3290, %v3260
      %v3292 = vadd.f32 %v3291, %v3261
      %v3293 = vadd.f32 %v3292, %v3262
      %v3294 = vadd.f32 %v3293, %v3263
      %v3295 = vadd.f32 %v3294, %v3264
      %v3296 = vadd.f32 %v3295, %v3265
      %v3297 = vadd.f32 %v3296, %v3266
      %v3298 = vadd.f32 %v3297, %v3267
      %v3299 = vadd.f32 %v3298, %v3268
      %v3300 = vadd.f32 %v3299, %v3269
      %v3301 = vadd.f32 %v3300, %v3270
      %v3302 = vadd.f32 %v3301, %v3271
      %v3303 = vadd.f32 %v3302, %v3272
      %v3304 = vadd.f32 %v3303, %v3273
      %v3305 = vadd.f32 %v3304, %v3274
      %v3306 = vadd.f32 %v3305, %v3275
      %v3307 = vadd.f32 %v3306, %v3276
      %v3308 = vadd.f32 %v3307, %v3277
      %v3309 = vadd.f32 %v3308, %v3278
      %v3310 = vadd.f32 %v3309, %v3279
      %v3311 = vadd.f32 %v3310, %v3280
      %v3312 = vadd.f32 %v3311, %v3281
      %v3313 = vadd.f32 %v3312, %v3282
      %v3314 = vadd.f32 %v3313, %v3283
      %v3315 = vadd.f32 %v3314, %v3284
      %v3316 = vrot.slane %v3315, 4
      %v3317 = vadd.f32 %v3315, %v3316
      %v3318 = vrot.slane %v3317, 2
      %v3319 = vadd.f32 %v3317, %v3318
      %v3320 = vrot.slane %v3319, 1
      %v3321 = vadd.f32 %v3319, %v3320
      %3322 = vst [vmem:[%s274] sm:$0x1] %v3321
      %v3323 = vpack.c.bf16 %v3092, %v3089
      %v3324 = vpack.c.bf16 %v3100, %v3097
      %v3325 = vpack.c.bf16 %v3108, %v3105
      %v3326 = vpack.c.bf16 %v3116, %v3113
      %v3327 = vpack.c.bf16 %v3124, %v3121
      %v3328 = vpack.c.bf16 %v3132, %v3129
      %v3329 = vpack.c.bf16 %v3140, %v3137
      %v3330 = vpack.c.bf16 %v3148, %v3145
      %v3331 = vpack.c.bf16 %v3156, %v3153
      %v3332 = vpack.c.bf16 %v3164, %v3161
      %v3333 = vpack.c.bf16 %v3172, %v3169
      %v3334 = vpack.c.bf16 %v3180, %v3177
      %v3335 = vpack.c.bf16 %v3188, %v3185
      %v3336 = vpack.c.bf16 %v3196, %v3193
      %v3337 = vpack.c.bf16 %v3204, %v3201
      %v3338 = vpack.c.bf16 %v3212, %v3209
      %v3355 = vunpack.c.l.b16 %v3323
      %v3356 = vunpack.c.h.b16 %v3323
      %v3357 = vunpack.c.l.b16 %v3324
      %v3358 = vunpack.c.h.b16 %v3324
      %v3359 = vunpack.c.l.b16 %v3325
      %v3360 = vunpack.c.h.b16 %v3325
      %v3361 = vunpack.c.l.b16 %v3326
      %v3362 = vunpack.c.h.b16 %v3326
      %v3363 = vunpack.c.l.b16 %v3327
      %v3364 = vunpack.c.h.b16 %v3327
      %v3365 = vunpack.c.l.b16 %v3328
      %v3366 = vunpack.c.h.b16 %v3328
      %v3367 = vunpack.c.l.b16 %v3329
      %v3368 = vunpack.c.h.b16 %v3329
      %v3369 = vunpack.c.l.b16 %v3330
      %v3370 = vunpack.c.h.b16 %v3330
      %v3371 = vunpack.c.l.b16 %v3331
      %v3372 = vunpack.c.h.b16 %v3331
      %v3373 = vunpack.c.l.b16 %v3332
      %v3374 = vunpack.c.h.b16 %v3332
      %v3375 = vunpack.c.l.b16 %v3333
      %v3376 = vunpack.c.h.b16 %v3333
      %v3377 = vunpack.c.l.b16 %v3334
      %v3378 = vunpack.c.h.b16 %v3334
      %v3379 = vunpack.c.l.b16 %v3335
      %v3380 = vunpack.c.h.b16 %v3335
      %v3381 = vunpack.c.l.b16 %v3336
      %v3382 = vunpack.c.h.b16 %v3336
      %v3383 = vunpack.c.l.b16 %v3337
      %v3384 = vunpack.c.h.b16 %v3337
      %v3385 = vunpack.c.l.b16 %v3338
      %v3386 = vunpack.c.h.b16 %v3338
      %v3387 = vpack.c.b16 %v3355, %v3355
      %v3388 = vpack.c.b16 %v3356, %v3356
      %v3389 = vpack.c.b16 %v3357, %v3357
      %v3390 = vpack.c.b16 %v3358, %v3358
      %v3391 = vpack.c.b16 %v3359, %v3359
      %v3392 = vpack.c.b16 %v3360, %v3360
      %v3393 = vpack.c.b16 %v3361, %v3361
      %v3394 = vpack.c.b16 %v3362, %v3362
      %v3395 = vpack.c.b16 %v3363, %v3363
      %v3396 = vpack.c.b16 %v3364, %v3364
      %v3397 = vpack.c.b16 %v3365, %v3365
      %v3398 = vpack.c.b16 %v3366, %v3366
      %v3399 = vpack.c.b16 %v3367, %v3367
      %v3400 = vpack.c.b16 %v3368, %v3368
      %v3401 = vpack.c.b16 %v3369, %v3369
      %v3402 = vpack.c.b16 %v3370, %v3370
      %v3403 = vpack.c.b16 %v3371, %v3371
      %v3404 = vpack.c.b16 %v3372, %v3372
      %v3405 = vpack.c.b16 %v3373, %v3373
      %v3406 = vpack.c.b16 %v3374, %v3374
      %v3407 = vpack.c.b16 %v3375, %v3375
      %v3408 = vpack.c.b16 %v3376, %v3376
      %v3409 = vpack.c.b16 %v3377, %v3377
      %v3410 = vpack.c.b16 %v3378, %v3378
      %v3411 = vpack.c.b16 %v3379, %v3379
      %v3412 = vpack.c.b16 %v3380, %v3380
      %v3413 = vpack.c.b16 %v3381, %v3381
      %v3414 = vpack.c.b16 %v3382, %v3382
      %v3415 = vpack.c.b16 %v3383, %v3383
      %v3416 = vpack.c.b16 %v3384, %v3384
      %v3417 = vpack.c.b16 %v3385, %v3385
      %v3418 = vpack.c.b16 %v3386, %v3386
      %3451 = vst [vmem:[%s267] sm:$0xf] %v3387
      %3452 = vst [vmem:[%s267 + $0x4] sm:$0xf] %v3388
      %3453 = vst [vmem:[%s267 + $0x8] sm:$0xf] %v3389
      %3454 = vst [vmem:[%s267 + $0xc] sm:$0xf] %v3390
      %3455 = vst [vmem:[%s267 + $0x10] sm:$0xf] %v3391
      %3456 = vst [vmem:[%s267 + $0x14] sm:$0xf] %v3392
      %3457 = vst [vmem:[%s267 + $0x18] sm:$0xf] %v3393
      %3458 = vst [vmem:[%s267 + $0x1c] sm:$0xf] %v3394
      %3459 = vst [vmem:[%s267 + $0x20] sm:$0xf] %v3395
      %3460 = vst [vmem:[%s267 + $0x24] sm:$0xf] %v3396
      %3461 = vst [vmem:[%s267 + $0x28] sm:$0xf] %v3397
      %3462 = vst [vmem:[%s267 + $0x2c] sm:$0xf] %v3398
      %3463 = vst [vmem:[%s267 + $0x30] sm:$0xf] %v3399
      %3464 = vst [vmem:[%s267 + $0x34] sm:$0xf] %v3400
      %3465 = vst [vmem:[%s267 + $0x38] sm:$0xf] %v3401
      %3466 = vst [vmem:[%s267 + $0x3c] sm:$0xf] %v3402
      %3467 = vst [vmem:[%s267 + $0x40] sm:$0xf] %v3403
      %3468 = vst [vmem:[%s267 + $0x44] sm:$0xf] %v3404
      %3469 = vst [vmem:[%s267 + $0x48] sm:$0xf] %v3405
      %3470 = vst [vmem:[%s267 + $0x4c] sm:$0xf] %v3406
      %3471 = vst [vmem:[%s267 + $0x50] sm:$0xf] %v3407
      %3472 = vst [vmem:[%s267 + $0x54] sm:$0xf] %v3408
      %3473 = vst [vmem:[%s267 + $0x58] sm:$0xf] %v3409
      %3474 = vst [vmem:[%s267 + $0x5c] sm:$0xf] %v3410
      %3475 = vst [vmem:[%s267 + $0x60] sm:$0xf] %v3411
      %3476 = vst [vmem:[%s267 + $0x64] sm:$0xf] %v3412
      %3477 = vst [vmem:[%s267 + $0x68] sm:$0xf] %v3413
      %3478 = vst [vmem:[%s267 + $0x6c] sm:$0xf] %v3414
      %3479 = vst [vmem:[%s267 + $0x70] sm:$0xf] %v3415
      %3480 = vst [vmem:[%s267 + $0x74] sm:$0xf] %v3416
      %3481 = vst [vmem:[%s267 + $0x78] sm:$0xf] %v3417
      %3482 = vst [vmem:[%s267 + $0x7c] sm:$0xf] %v3418
      %s3483 = smul.u32 32, %s18
      %p3484 = scmp.lt.s32.totalorder %s3483, 63
      %s3485 = scalar_select %p3484, %s3483, 63
      %s3486 = smul.addr %s3485, 4
      %s3487 = scalar_lea.vmem %s4, %s3486
      %p3488 = scmp.lt.s32.totalorder %s18, 1
      %s3489 = scalar_select %p3488, %s18, 1
      %s3490 = scalar_lea.vmem %s5, %s3489
      %p3491 = scmp.lt.s32.totalorder %s18, 1
      %s3492 = scalar_select %p3491, %s18, 1
      %s3493 = scalar_lea.vmem %s6, %s3492
      // Predicated region
      $region37: #{aspp_forward.4} parent=35 // pred_check
        %p3494 = pneg %p125
      $region38: #{aspp_forward.4} parent=35 // pred_check_branch
        %3496 = sbr.rel (%p3494) target = $region40
      $region39: #{aspp_forward.4} parent=35 // pred_region
        %s3497 = smul.u32 32, %s18
      $region40: #{aspp_forward.4} parent=35 // pred_fallthru
        _
      // Predicated region
      $region41: #{aspp_forward.4} parent=35 // pred_check
        %p3498 = pneg %p151
      $region42: #{aspp_forward.4} parent=35 // pred_check_branch
        %3500 = sbr.rel (%p3498) target = $region44
      $region43: #{aspp_forward.4} parent=35 // pred_region
        _
      $region44: #{aspp_forward.4} parent=35 // pred_fallthru
        _
      // Predicated region
      $region45: #{aspp_forward.4} parent=35 // pred_check
        %p3501 = pneg %p177
      $region46: #{aspp_forward.4} parent=35 // pred_check_branch
        %3503 = sbr.rel (%p3501) target = $region48
      $region47: #{aspp_forward.4} parent=35 // pred_region
        _
      $region48: #{aspp_forward.4} parent=35 // pred_fallthru
        _
    $region36: #{aspp_forward.4} parent=5 // pred_fallthru
      _
    %p3504 = scmp.le.s32.totalorder 2, %s13
    // Predicated region
    $region49: #{aspp_forward.4} parent=5 // pred_check
      %p3505 = pneg %p3504
    $region50: #{aspp_forward.4} parent=5 // pred_check_branch
      %3507 = sbr.rel (%p3505) target = $region52
    $region51: #{aspp_forward.4} parent=5 // pred_region
      %s3508 = ssub.s32 %s13, 2
      // Predicated region
      $region53: #{aspp_forward.4} parent=51 // pred_check
        %p3509 = pneg %p131
      $region54: #{aspp_forward.4} parent=51 // pred_check_branch
        %3511 = sbr.rel (%p3509) target = $region56
      $region55: #{aspp_forward.4} parent=51 // pred_region
        %s3512 = smul.u32 32, %s19
        %p3513 = scmp.lt.s32.totalorder %s3512, 63
        %s3514 = scalar_select %p3513, %s3512, 63
        %s3515 = smul.addr %s3514, 4
        %s3516 = scalar_lea.vmem %s4, %s3515
      $region56: #{aspp_forward.4} parent=51 // pred_fallthru
        _
      // Predicated region
      $region57: #{aspp_forward.4} parent=51 // pred_check
        %p3517 = pneg %p157
      $region58: #{aspp_forward.4} parent=51 // pred_check_branch
        %3519 = sbr.rel (%p3517) target = $region60
      $region59: #{aspp_forward.4} parent=51 // pred_region
        %p3520 = scmp.lt.s32.totalorder %s19, 1
        %s3521 = scalar_select %p3520, %s19, 1
        %s3522 = scalar_lea.vmem %s5, %s3521
      $region60: #{aspp_forward.4} parent=51 // pred_fallthru
        _
      // Predicated region
      $region61: #{aspp_forward.4} parent=51 // pred_check
        %p3523 = pneg %p183
      $region62: #{aspp_forward.4} parent=51 // pred_check_branch
        %3525 = sbr.rel (%p3523) target = $region64
      $region63: #{aspp_forward.4} parent=51 // pred_region
        %p3526 = scmp.lt.s32.totalorder %s19, 1
        %s3527 = scalar_select %p3526, %s19, 1
        %s3528 = scalar_lea.vmem %s6, %s3527
      $region64: #{aspp_forward.4} parent=51 // pred_fallthru
        _
    $region52: #{aspp_forward.4} parent=5 // pred_fallthru
      _
  $region6: #{aspp_forward.4} parent=0 // loop_footer
    %s17 = sadd.s32 1, %s13
  $region7: #{aspp_forward.4} parent=0 // loop_footer_branch
    %12 = sbr.rel target = $region3
  $region8: #{aspp_forward.4} parent=0 // loop_exit
    _

// kernel: aspp_forward.5
$region0: #{aspp_forward.5}
  #allocation0 [shape = 'u32[]', space=smem, size = 0x4, offset = 0x4, fixed_abs, tag = 'smem constant byte address 0x4 - core index']
  #allocation1 [shape = 'u32[144,128]{1,0:T(1,128)}', space=vmem, size = 0x12000, scoped, tag = 'internal scratch']
  %s0 = inlined_call_operand.vmem [shape: bf16[512,128], index: 0, kind: input, shape index: {}]
  %s1 = inlined_call_operand.vmem [shape: f32[1,128], index: 1, kind: input, shape index: {}]
  %s2 = inlined_call_operand.vmem [shape: f32[1,128], index: 2, kind: input, shape index: {}]
  %s3 = inlined_call_operand.vmem [shape: f32[512,128], index: 3, kind: output, shape index: {}]
  %s4 = sld [smem:[#allocation0]]
  $region45: #{aspp_forward.5} parent=0
    _
  %s6 = ssub.s32 1, %s4
  %s7 = scalar_select 0, %s6, %s4
  loop: start=0, step=1, limit=4
  $region2: #{aspp_forward.5} parent=0 // loop_pre_header
    _
  $region3: #{aspp_forward.5} parent=0 // loop_header
    %s9 = sphi 0, %s13
    %p10 = scmp.ge.s32.totalorder %s9, 4
    %s19 = sphi 0, %s21
    %s22 = sphi 0, %s19
    %s23 = sphi 0, %s22
    %s39 = sphi 0, %s23
    %s43 = sphi 0, %s43
    %s45 = sphi 0, %s43
    %s46 = sphi 0, %s45
    %s60 = sphi 0, %s46
    %s64 = sphi 0, %s64
    %s66 = sphi 0, %s64
    %s67 = sphi 0, %s66
    %s81 = sphi 0, %s67
    %s87 = sphi 0, %s89
    %s90 = sphi 0, %s87
    %s91 = sphi 0, %s90
    %s107 = sphi 0, %s91
  $region4: #{aspp_forward.5} parent=0 // loop_header_branch
    %12 = sbr.rel (%p10) target = $region8
  $region5: #{aspp_forward.5} parent=0 // loop_body
    %s14 = ssub.s32 %s9, 1
    %s15 = ssub.s32 %s9, 2
    %s16 = sadd.s32 %s9, 1
    %s17 = ssub.s32 %s9, %s16
    %p18 = scmp.eq.s32.totalorder %s17, 0
    %s20 = sadd.s32 %s19, 1
    %s21 = scalar_select %p18, %s19, %s20
    %p24 = pneg %p18
    %p25 = scmp.eq.s32.totalorder %s9, 1
    %p26 = por %p24, %p25
    %p27 = scmp.ne.s32.totalorder %s19, %s22
    %p28 = scmp.eq.s32.totalorder %s9, 0
    %p29 = por %p27, %p28
    %p30 = scmp.ne.s32.totalorder %s19, %s22
    %p31 = scmp.eq.s32.totalorder %s14, 1
    %p32 = por %p30, %p31
    %p33 = scmp.ne.s32.totalorder %s22, %s23
    %p34 = scmp.eq.s32.totalorder %s14, 0
    %p35 = por %p33, %p34
    %p36 = scmp.ne.s32.totalorder %s22, %s23
    %p37 = scmp.eq.s32.totalorder %s15, 1
    %p38 = por %p36, %p37
    %p40 = scmp.ne.s32.totalorder %s23, %s39
    %p41 = scmp.eq.s32.totalorder %s15, 0
    %p42 = por %p40, %p41
    %s44 = sadd.s32 %s43, 1
    %p47 = scmp.eq.s32.totalorder %s9, 1
    %p48 = scmp.ne.s32.totalorder %s43, %s45
    %p49 = scmp.eq.s32.totalorder %s9, 0
    %p50 = por %p48, %p49
    %p51 = scmp.ne.s32.totalorder %s43, %s45
    %p52 = scmp.eq.s32.totalorder %s14, 1
    %p53 = por %p51, %p52
    %p54 = scmp.ne.s32.totalorder %s45, %s46
    %p55 = scmp.eq.s32.totalorder %s14, 0
    %p56 = por %p54, %p55
    %p57 = scmp.ne.s32.totalorder %s45, %s46
    %p58 = scmp.eq.s32.totalorder %s15, 1
    %p59 = por %p57, %p58
    %p61 = scmp.ne.s32.totalorder %s46, %s60
    %p62 = scmp.eq.s32.totalorder %s15, 0
    %p63 = por %p61, %p62
    %s65 = sadd.s32 %s64, 1
    %p68 = scmp.eq.s32.totalorder %s9, 1
    %p69 = scmp.ne.s32.totalorder %s64, %s66
    %p70 = scmp.eq.s32.totalorder %s9, 0
    %p71 = por %p69, %p70
    %p72 = scmp.ne.s32.totalorder %s64, %s66
    %p73 = scmp.eq.s32.totalorder %s14, 1
    %p74 = por %p72, %p73
    %p75 = scmp.ne.s32.totalorder %s66, %s67
    %p76 = scmp.eq.s32.totalorder %s14, 0
    %p77 = por %p75, %p76
    %p78 = scmp.ne.s32.totalorder %s66, %s67
    %p79 = scmp.eq.s32.totalorder %s15, 1
    %p80 = por %p78, %p79
    %p82 = scmp.ne.s32.totalorder %s67, %s81
    %p83 = scmp.eq.s32.totalorder %s15, 0
    %p84 = por %p82, %p83
    %s85 = ssub.s32 %s9, %s16
    %p86 = scmp.eq.s32.totalorder %s85, 0
    %s88 = sadd.s32 %s87, 1
    %s89 = scalar_select %p86, %s87, %s88
    %p92 = pneg %p86
    %p93 = scmp.eq.s32.totalorder %s9, 1
    %p94 = por %p92, %p93
    %p95 = scmp.ne.s32.totalorder %s87, %s90
    %p96 = scmp.eq.s32.totalorder %s9, 0
    %p97 = por %p95, %p96
    %p98 = scmp.ne.s32.totalorder %s87, %s90
    %p99 = scmp.eq.s32.totalorder %s14, 1
    %p100 = por %p98, %p99
    %p101 = scmp.ne.s32.totalorder %s90, %s91
    %p102 = scmp.eq.s32.totalorder %s14, 0
    %p103 = por %p101, %p102
    %p104 = scmp.ne.s32.totalorder %s90, %s91
    %p105 = scmp.eq.s32.totalorder %s15, 1
    %p106 = por %p104, %p105
    %p108 = scmp.ne.s32.totalorder %s91, %s107
    %p109 = scmp.eq.s32.totalorder %s15, 0
    %p110 = por %p108, %p109
    %p111 = scmp.le.s32.totalorder 1, %s9
    %p112 = scmp.lt.s32.totalorder %s9, 3
    %p113 = pnand %p111, %p112
    %p114 = pneg %p113
    // Predicated region
    $region9: #{aspp_forward.5} parent=5 // pred_check
      _
    $region10: #{aspp_forward.5} parent=5 // pred_check_branch
      %116 = sbr.rel (%p113) target = $region12
    $region11: #{aspp_forward.5} parent=5 // pred_region
      %s117 = ssub.s32 %s9, 1
      // Predicated region
      $region13: #{aspp_forward.5} parent=11 // pred_check
        %p118 = pneg %p56
      $region14: #{aspp_forward.5} parent=11 // pred_check_branch
        %120 = sbr.rel (%p118) target = $region16
      $region15: #{aspp_forward.5} parent=11 // pred_region
        _
      $region16: #{aspp_forward.5} parent=11 // pred_fallthru
        _
      // Predicated region
      $region17: #{aspp_forward.5} parent=11 // pred_check
        %p121 = pneg %p77
      $region18: #{aspp_forward.5} parent=11 // pred_check_branch
        %123 = sbr.rel (%p121) target = $region20
      $region19: #{aspp_forward.5} parent=11 // pred_region
        _
      $region20: #{aspp_forward.5} parent=11 // pred_fallthru
        _
    $region12: #{aspp_forward.5} parent=5 // pred_fallthru
      _
    %p124 = scmp.lt.s32.totalorder %s9, 2
    // Predicated region
    $region21: #{aspp_forward.5} parent=5 // pred_check
      %p125 = pneg %p124
    $region22: #{aspp_forward.5} parent=5 // pred_check_branch
      %127 = sbr.rel (%p125) target = $region24
    $region23: #{aspp_forward.5} parent=5 // pred_region
      // Predicated region
      $region25: #{aspp_forward.5} parent=23 // pred_check
        %p128 = pneg %p29
      $region26: #{aspp_forward.5} parent=23 // pred_check_branch
        %130 = sbr.rel (%p128) target = $region28
      $region27: #{aspp_forward.5} parent=23 // pred_region
        %s131 = smul.u32 32, %s9
        %p132 = scmp.lt.s32.totalorder %s131, 63
        %s133 = scalar_select %p132, %s131, 63
        %s134 = smul.addr %s133, 4
        %s135 = scalar_lea.vmem %s0, %s134
        %s136 = smul.u32 32, %s9
      $region28: #{aspp_forward.5} parent=23 // pred_fallthru
        _
    $region24: #{aspp_forward.5} parent=5 // pred_fallthru
      _
    %p137 = scmp.le.s32.totalorder 1, %s9
    %p138 = scmp.lt.s32.totalorder %s9, 3
    %p139 = pnand %p137, %p138
    %p140 = pneg %p139
    // Predicated region
    $region29: #{aspp_forward.5} parent=5 // pred_check
      _
    $region30: #{aspp_forward.5} parent=5 // pred_check_branch
      %142 = sbr.rel (%p139) target = $region32
    $region31: #{aspp_forward.5} parent=5 // pred_region
      %s143 = ssub.s32 %s9, 1
      %s144 = smul.u32 32, %s14
      %p145 = scmp.lt.s32.totalorder %s144, 63
      %s146 = scalar_select %p145, %s144, 63
      %s147 = smul.addr %s146, 4
      %s148 = scalar_lea.vmem %s0, %s147
      %p149 = pneg %p35
      %p150 = pneg %p32
      %p151 = pneg %p56
      %p152 = pneg %p53
      %p153 = pneg %p77
      %p154 = pneg %p74
      %p155 = pneg %p103
      %p156 = pneg %p100
      %s157 = smul.u32 32, %s14
      %p158 = scmp.lt.s32.totalorder %s157, 63
      %s159 = scalar_select %p158, %s157, 63
      %s160 = smul.addr %s159, 8
      %s161 = scalar_lea.vmem %s3, %s160
      %s162 = smul.u32 32, %s14
      %p163 = scmp.lt.s32.totalorder %s162, 63
      %s164 = scalar_select %p163, %s162, 63
      %s165 = smul.addr %s164, 4
      %s166 = scalar_lea.vmem %s0, %s165
      %s167 = smul.u32 32, %s14
      %s168 = smul.u32 32, %s14
      %p169 = scmp.lt.s32.totalorder %s168, 63
      %s170 = scalar_select %p169, %s168, 63
      %s171 = smul.addr %s170, 8
      %s172 = scalar_lea.vmem %s3, %s171
      %s173 = smul.u32 32, %s14
      %v174 = vld [vmem:[%s166] sm:$0xf]
      %v175 = vld [vmem:[%s166 + $0x4] sm:$0xf]
      %v176 = vld [vmem:[%s166 + $0x8] sm:$0xf]
      %v177 = vld [vmem:[%s166 + $0xc] sm:$0xf]
      %v178 = vld [vmem:[%s166 + $0x10] sm:$0xf]
      %v179 = vld [vmem:[%s166 + $0x14] sm:$0xf]
      %v180 = vld [vmem:[%s166 + $0x18] sm:$0xf]
      %v181 = vld [vmem:[%s166 + $0x1c] sm:$0xf]
      %v182 = vld [vmem:[%s166 + $0x20] sm:$0xf]
      %v183 = vld [vmem:[%s166 + $0x24] sm:$0xf]
      %v184 = vld [vmem:[%s166 + $0x28] sm:$0xf]
      %v185 = vld [vmem:[%s166 + $0x2c] sm:$0xf]
      %v186 = vld [vmem:[%s166 + $0x30] sm:$0xf]
      %v187 = vld [vmem:[%s166 + $0x34] sm:$0xf]
      %v188 = vld [vmem:[%s166 + $0x38] sm:$0xf]
      %v189 = vld [vmem:[%s166 + $0x3c] sm:$0xf]
      %v190 = vld [vmem:[%s166 + $0x40] sm:$0xf]
      %v191 = vld [vmem:[%s166 + $0x44] sm:$0xf]
      %v192 = vld [vmem:[%s166 + $0x48] sm:$0xf]
      %v193 = vld [vmem:[%s166 + $0x4c] sm:$0xf]
      %v194 = vld [vmem:[%s166 + $0x50] sm:$0xf]
      %v195 = vld [vmem:[%s166 + $0x54] sm:$0xf]
      %v196 = vld [vmem:[%s166 + $0x58] sm:$0xf]
      %v197 = vld [vmem:[%s166 + $0x5c] sm:$0xf]
      %v198 = vld [vmem:[%s166 + $0x60] sm:$0xf]
      %v199 = vld [vmem:[%s166 + $0x64] sm:$0xf]
      %v200 = vld [vmem:[%s166 + $0x68] sm:$0xf]
      %v201 = vld [vmem:[%s166 + $0x6c] sm:$0xf]
      %v202 = vld [vmem:[%s166 + $0x70] sm:$0xf]
      %v203 = vld [vmem:[%s166 + $0x74] sm:$0xf]
      %v204 = vld [vmem:[%s166 + $0x78] sm:$0xf]
      %v205 = vld [vmem:[%s166 + $0x7c] sm:$0xf]
      %v206 = vunpack.c.l.bf16 %v174
      %v207 = vunpack.c.l.bf16 %v175
      %v208 = vunpack.c.l.bf16 %v176
      %v209 = vunpack.c.l.bf16 %v177
      %v210 = vunpack.c.l.bf16 %v178
      %v211 = vunpack.c.l.bf16 %v179
      %v212 = vunpack.c.l.bf16 %v180
      %v213 = vunpack.c.l.bf16 %v181
      %v214 = vunpack.c.l.bf16 %v182
      %v215 = vunpack.c.l.bf16 %v183
      %v216 = vunpack.c.l.bf16 %v184
      %v217 = vunpack.c.l.bf16 %v185
      %v218 = vunpack.c.l.bf16 %v186
      %v219 = vunpack.c.l.bf16 %v187
      %v220 = vunpack.c.l.bf16 %v188
      %v221 = vunpack.c.l.bf16 %v189
      %v222 = vunpack.c.l.bf16 %v190
      %v223 = vunpack.c.l.bf16 %v191
      %v224 = vunpack.c.l.bf16 %v192
      %v225 = vunpack.c.l.bf16 %v193
      %v226 = vunpack.c.l.bf16 %v194
      %v227 = vunpack.c.l.bf16 %v195
      %v228 = vunpack.c.l.bf16 %v196
      %v229 = vunpack.c.l.bf16 %v197
      %v230 = vunpack.c.l.bf16 %v198
      %v231 = vunpack.c.l.bf16 %v199
      %v232 = vunpack.c.l.bf16 %v200
      %v233 = vunpack.c.l.bf16 %v201
      %v234 = vunpack.c.l.bf16 %v202
      %v235 = vunpack.c.l.bf16 %v203
      %v236 = vunpack.c.l.bf16 %v204
      %v237 = vunpack.c.l.bf16 %v205
      %v238 = vld [vmem:[%s1] sm:$0x1]
      %v240 = vlaneseq
      %v241 = vshrl.u32 %v240, 7
      %v242 = vsub.s32 0, %v241
      %v243 = vrot.slane %v238, %v242
      %v245 = vmul.f32 %v206, %v243
      %v246 = vmul.f32 %v207, %v243
      %v247 = vmul.f32 %v208, %v243
      %v248 = vmul.f32 %v209, %v243
      %v249 = vmul.f32 %v210, %v243
      %v250 = vmul.f32 %v211, %v243
      %v251 = vmul.f32 %v212, %v243
      %v252 = vmul.f32 %v213, %v243
      %v253 = vmul.f32 %v214, %v243
      %v254 = vmul.f32 %v215, %v243
      %v255 = vmul.f32 %v216, %v243
      %v256 = vmul.f32 %v217, %v243
      %v257 = vmul.f32 %v218, %v243
      %v258 = vmul.f32 %v219, %v243
      %v259 = vmul.f32 %v220, %v243
      %v260 = vmul.f32 %v221, %v243
      %v261 = vmul.f32 %v222, %v243
      %v262 = vmul.f32 %v223, %v243
      %v263 = vmul.f32 %v224, %v243
      %v264 = vmul.f32 %v225, %v243
      %v265 = vmul.f32 %v226, %v243
      %v266 = vmul.f32 %v227, %v243
      %v267 = vmul.f32 %v228, %v243
      %v268 = vmul.f32 %v229, %v243
      %v269 = vmul.f32 %v230, %v243
      %v270 = vmul.f32 %v231, %v243
      %v271 = vmul.f32 %v232, %v243
      %v272 = vmul.f32 %v233, %v243
      %v273 = vmul.f32 %v234, %v243
      %v274 = vmul.f32 %v235, %v243
      %v275 = vmul.f32 %v236, %v243
      %v276 = vmul.f32 %v237, %v243
      %v277 = vld [vmem:[%s2] sm:$0x1]
      %v279 = vlaneseq
      %v280 = vshrl.u32 %v279, 7
      %v281 = vsub.s32 0, %v280
      %v282 = vrot.slane %v277, %v281
      %v284 = vadd.f32 %v245, %v282
      %v285 = vadd.f32 %v246, %v282
      %v286 = vadd.f32 %v247, %v282
      %v287 = vadd.f32 %v248, %v282
      %v288 = vadd.f32 %v249, %v282
      %v289 = vadd.f32 %v250, %v282
      %v290 = vadd.f32 %v251, %v282
      %v291 = vadd.f32 %v252, %v282
      %v292 = vadd.f32 %v253, %v282
      %v293 = vadd.f32 %v254, %v282
      %v294 = vadd.f32 %v255, %v282
      %v295 = vadd.f32 %v256, %v282
      %v296 = vadd.f32 %v257, %v282
      %v297 = vadd.f32 %v258, %v282
      %v298 = vadd.f32 %v259, %v282
      %v299 = vadd.f32 %v260, %v282
      %v300 = vadd.f32 %v261, %v282
      %v301 = vadd.f32 %v262, %v282
      %v302 = vadd.f32 %v263, %v282
      %v303 = vadd.f32 %v264, %v282
      %v304 = vadd.f32 %v265, %v282
      %v305 = vadd.f32 %v266, %v282
      %v306 = vadd.f32 %v267, %v282
      %v307 = vadd.f32 %v268, %v282
      %v308 = vadd.f32 %v269, %v282
      %v309 = vadd.f32 %v270, %v282
      %v310 = vadd.f32 %v271, %v282
      %v311 = vadd.f32 %v272, %v282
      %v312 = vadd.f32 %v273, %v282
      %v313 = vadd.f32 %v274, %v282
      %v314 = vadd.f32 %v275, %v282
      %v315 = vadd.f32 %v276, %v282
      %v316 = vmax.f32 %v284, 0.0
      %v317 = vmax.f32 %v285, 0.0
      %v318 = vmax.f32 %v286, 0.0
      %v319 = vmax.f32 %v287, 0.0
      %v320 = vmax.f32 %v288, 0.0
      %v321 = vmax.f32 %v289, 0.0
      %v322 = vmax.f32 %v290, 0.0
      %v323 = vmax.f32 %v291, 0.0
      %v324 = vmax.f32 %v292, 0.0
      %v325 = vmax.f32 %v293, 0.0
      %v326 = vmax.f32 %v294, 0.0
      %v327 = vmax.f32 %v295, 0.0
      %v328 = vmax.f32 %v296, 0.0
      %v329 = vmax.f32 %v297, 0.0
      %v330 = vmax.f32 %v298, 0.0
      %v331 = vmax.f32 %v299, 0.0
      %v332 = vmax.f32 %v300, 0.0
      %v333 = vmax.f32 %v301, 0.0
      %v334 = vmax.f32 %v302, 0.0
      %v335 = vmax.f32 %v303, 0.0
      %v336 = vmax.f32 %v304, 0.0
      %v337 = vmax.f32 %v305, 0.0
      %v338 = vmax.f32 %v306, 0.0
      %v339 = vmax.f32 %v307, 0.0
      %v340 = vmax.f32 %v308, 0.0
      %v341 = vmax.f32 %v309, 0.0
      %v342 = vmax.f32 %v310, 0.0
      %v343 = vmax.f32 %v311, 0.0
      %v344 = vmax.f32 %v312, 0.0
      %v345 = vmax.f32 %v313, 0.0
      %v346 = vmax.f32 %v314, 0.0
      %v347 = vmax.f32 %v315, 0.0
      %348 = vst [vmem:[%s172] sm:$0xff] %v316
      %349 = vst [vmem:[%s172 + $0x8] sm:$0xff] %v317
      %350 = vst [vmem:[%s172 + $0x10] sm:$0xff] %v318
      %351 = vst [vmem:[%s172 + $0x18] sm:$0xff] %v319
      %352 = vst [vmem:[%s172 + $0x20] sm:$0xff] %v320
      %353 = vst [vmem:[%s172 + $0x28] sm:$0xff] %v321
      %354 = vst [vmem:[%s172 + $0x30] sm:$0xff] %v322
      %355 = vst [vmem:[%s172 + $0x38] sm:$0xff] %v323
      %356 = vst [vmem:[%s172 + $0x40] sm:$0xff] %v324
      %357 = vst [vmem:[%s172 + $0x48] sm:$0xff] %v325
      %358 = vst [vmem:[%s172 + $0x50] sm:$0xff] %v326
      %359 = vst [vmem:[%s172 + $0x58] sm:$0xff] %v327
      %360 = vst [vmem:[%s172 + $0x60] sm:$0xff] %v328
      %361 = vst [vmem:[%s172 + $0x68] sm:$0xff] %v329
      %362 = vst [vmem:[%s172 + $0x70] sm:$0xff] %v330
      %363 = vst [vmem:[%s172 + $0x78] sm:$0xff] %v331
      %364 = vst [vmem:[%s172 + $0x80] sm:$0xff] %v332
      %365 = vst [vmem:[%s172 + $0x88] sm:$0xff] %v333
      %366 = vst [vmem:[%s172 + $0x90] sm:$0xff] %v334
      %367 = vst [vmem:[%s172 + $0x98] sm:$0xff] %v335
      %368 = vst [vmem:[%s172 + $0xa0] sm:$0xff] %v336
      %369 = vst [vmem:[%s172 + $0xa8] sm:$0xff] %v337
      %370 = vst [vmem:[%s172 + $0xb0] sm:$0xff] %v338
      %371 = vst [vmem:[%s172 + $0xb8] sm:$0xff] %v339
      %372 = vst [vmem:[%s172 + $0xc0] sm:$0xff] %v340
      %373 = vst [vmem:[%s172 + $0xc8] sm:$0xff] %v341
      %374 = vst [vmem:[%s172 + $0xd0] sm:$0xff] %v342
      %375 = vst [vmem:[%s172 + $0xd8] sm:$0xff] %v343
      %376 = vst [vmem:[%s172 + $0xe0] sm:$0xff] %v344
      %377 = vst [vmem:[%s172 + $0xe8] sm:$0xff] %v345
      %378 = vst [vmem:[%s172 + $0xf0] sm:$0xff] %v346
      %379 = vst [vmem:[%s172 + $0xf8] sm:$0xff] %v347
      %s380 = smul.u32 32, %s14
      %p381 = scmp.lt.s32.totalorder %s380, 63
      %s382 = scalar_select %p381, %s380, 63
      %s383 = smul.addr %s382, 8
      %s384 = scalar_lea.vmem %s3, %s383
      // Predicated region
      $region33: #{aspp_forward.5} parent=31 // pred_check
        %p385 = pneg %p100
      $region34: #{aspp_forward.5} parent=31 // pred_check_branch
        %387 = sbr.rel (%p385) target = $region36
      $region35: #{aspp_forward.5} parent=31 // pred_region
        %s388 = smul.u32 32, %s14
      $region36: #{aspp_forward.5} parent=31 // pred_fallthru
        _
    $region32: #{aspp_forward.5} parent=5 // pred_fallthru
      _
    %p389 = scmp.le.s32.totalorder 2, %s9
    // Predicated region
    $region37: #{aspp_forward.5} parent=5 // pred_check
      %p390 = pneg %p389
    $region38: #{aspp_forward.5} parent=5 // pred_check_branch
      %392 = sbr.rel (%p390) target = $region40
    $region39: #{aspp_forward.5} parent=5 // pred_region
      %s393 = ssub.s32 %s9, 2
      // Predicated region
      $region41: #{aspp_forward.5} parent=39 // pred_check
        %p394 = pneg %p106
      $region42: #{aspp_forward.5} parent=39 // pred_check_branch
        %396 = sbr.rel (%p394) target = $region44
      $region43: #{aspp_forward.5} parent=39 // pred_region
        %s397 = smul.u32 32, %s15
        %p398 = scmp.lt.s32.totalorder %s397, 63
        %s399 = scalar_select %p398, %s397, 63
        %s400 = smul.addr %s399, 8
        %s401 = scalar_lea.vmem %s3, %s400
      $region44: #{aspp_forward.5} parent=39 // pred_fallthru
        _
    $region40: #{aspp_forward.5} parent=5 // pred_fallthru
      _
  $region6: #{aspp_forward.5} parent=0 // loop_footer
    %s13 = sadd.s32 1, %s9
  $region7: #{aspp_forward.5} parent=0 // loop_footer_branch
    %8 = sbr.rel target = $region3
  $region8: #{aspp_forward.5} parent=0 // loop_exit
    _

</llo_original>
